<compile_context>
chip_gen: v7x
topology: tpu7x:2x2x1
jax: 0.10.0
libtpu: 0.0.40
codegen_flags: <defaults>
</compile_context>

<pallas_src>
import numpy as np

import jax
import jax.numpy as jnp
from jax.experimental import pallas as pl
from jax.experimental.pallas import tpu as pltpu


TB = 8  # images per grid step (batch tile); batch is zero-padded to a multiple of TB


# -------------------- trace-time weight-repacking tables (static) --------------------

def _build_tables():
    # conv1:  M1[di, w, b*120 + q*10 + oc] = w1[oc, 0, di, w - (2q + b)]   (0 <= dj < 5)
    #   output lanes: column-phase b in {0,1} (even/odd conv1 column), pooled col q, chan oc
    idx1 = np.zeros((5, 28, 240), np.int32)
    msk1 = np.zeros((5, 28, 240), np.float32)
    for di in range(5):
        for w in range(28):
            for b in range(2):
                for q in range(12):
                    dj = w - (2 * q + b)
                    if 0 <= dj < 5:
                        base = b * 120 + q * 10
                        idx1[di, w, base:base + 10] = np.arange(10) * 25 + di * 5 + dj
                        msk1[di, w, base:base + 10] = 1.0
    # conv2:  M2[di, q*10 + ic, q2*20 + oc2] = w2[oc2, ic, di, q - q2]     (0 <= dj < 5)
    idx2 = np.zeros((5, 120, 160), np.int32)
    msk2 = np.zeros((5, 120, 160), np.float32)
    for di in range(5):
        for q in range(12):
            for q2 in range(8):
                dj = q - q2
                if 0 <= dj < 5:
                    for ic in range(10):
                        base = q2 * 20
                        idx2[di, q * 10 + ic, base:base + 20] = (
                            np.arange(20) * 250 + ic * 25 + di * 5 + dj)
                        msk2[di, q * 10 + ic, base:base + 20] = 1.0
    # heads: Wh[p2, q2*20 + oc2, :] = Wcat[oc2*64 + p2*8 + q2, :]  (torch NCHW flatten order)
    idxh = np.zeros((8, 160), np.int32)
    for p2 in range(8):
        for q2 in range(8):
            idxh[p2, q2 * 20:q2 * 20 + 20] = np.arange(20) * 64 + p2 * 8 + q2
    return idx1, msk1, idx2, msk2, idxh


_IDX1, _MSK1, _IDX2, _MSK2, _IDXH = _build_tables()


# ---------------------------------- fused kernel ----------------------------------

def _fused_kernel(xr_ref, m1_ref, m2_ref, wh_ref, o10_ref, o2_ref):
    # xr_ref: (TB, 2, 24, 28)  row-phase-split input (rows 14..23 are zero padding)
    # m1_ref: (5, 28, 240)     conv1 banded weights (lanes: colphase*120 + q*10 + oc)
    # m2_ref: (5, 120, 160)    conv2 banded weights (lanes: q2*20 + oc2)
    # wh_ref: (8, 160, 12)     fused fc1|fc1_bin weights, NCHW-flatten folded in
    xv = xr_ref[...]

    # ---- conv1 as 5 shifted matmuls per output-row parity; pool = 2 elementwise maxes ----
    def conv1_rows(parity):
        acc = jnp.zeros((TB * 16, 240), jnp.float32)
        for di in range(5):
            f, k = (parity + di) % 2, (parity + di) // 2
            lhs = xv[:, f, k:k + 16, :].reshape(TB * 16, 28)   # rows (n, p), p in [0,16)
            acc = acc + jnp.dot(lhs, m1_ref[di],
                                preferred_element_type=jnp.float32)
        return acc   # lanes: [0:120]=even conv1 columns, [120:240]=odd conv1 columns

    cand = jnp.maximum(conv1_rows(0), conv1_rows(1))                  # pool over rows
    pooled = jnp.maximum(jnp.maximum(cand[:, :120], cand[:, 120:240]), 0.0)  # pool cols + ReLU
    pooled = pooled.reshape(TB, 16, 120)                              # rows p: [0,12) valid

    # ---- conv2 as 5 shifted matmuls + ReLU ----
    acc2 = jnp.zeros((TB * 8, 160), jnp.float32)
    for di in range(5):
        lhs = pooled[:, di:di + 8, :].reshape(TB * 8, 120)
        acc2 = acc2 + jnp.dot(lhs, m2_ref[di],
                              preferred_element_type=jnp.float32)
    a2 = jnp.maximum(acc2, 0.0).reshape(TB, 8, 160)                   # (n, p2, q2*20+oc2)

    # ---- heads: fc1 & fc1_bin as one fused (1280, 12) contraction ----
    h = jnp.zeros((TB, 12), jnp.float32)
    for p2 in range(8):
        h = h + jnp.dot(a2[:, p2, :], wh_ref[p2],
                        preferred_element_type=jnp.float32)
    h = jnp.maximum(h, 0.0)

    def _softmax(z):
        z = z - jnp.max(z, axis=-1, keepdims=True)
        e = jnp.exp(z)
        return e * pl.reciprocal(jnp.sum(e, axis=-1, keepdims=True), approx=True)

    o10_ref[...] = _softmax(h[:, :10])    # softmax(relu(fc1(x)), dim=1)
    o2_ref[...] = _softmax(h[:, 10:12])   # softmax(relu(fc1_bin(x)), dim=1)


# ------------------------------------ wrapper ------------------------------------

def init_params(key):
    k1, k2, k3, k4 = jax.random.split(key, 4)
    return dict(
        w1=jax.random.normal(k1, (10, 1, 5, 5), jnp.float32) * 0.1,     # conv1.weight
        w2=jax.random.normal(k2, (20, 10, 5, 5), jnp.float32) * 0.05,   # conv2.weight
        fc1=jax.random.normal(k3, (10, 20 * 8 * 8), jnp.float32) * 0.02,     # fc1.weight
        fc1_bin=jax.random.normal(k4, (2, 20 * 8 * 8), jnp.float32) * 0.02,  # fc1_bin.weight
    )


@jax.jit
def convnet_forward(x_nchw, params):
    n = x_nchw.shape[0]
    n_pad = ((n + TB - 1) // TB) * TB

    # trace-time weight repacking (tiny, runs on weight-sized data only)
    m1 = params["w1"].reshape(-1)[_IDX1] * _MSK1                       # (5, 28, 240)
    m2 = params["w2"].reshape(-1)[_IDX2] * _MSK2                       # (5, 120, 160)
    wcat = jnp.concatenate([params["fc1"].T, params["fc1_bin"].T], axis=1)   # (1280, 12)
    wh3 = wcat[_IDXH]                                                  # (8, 160, 12)

    # input prep: split rows into even/odd phase so in-kernel slices are unit-stride
    x2 = x_nchw[:, 0]                                                  # (N, 28, 28)
    xr = jnp.stack([x2[:, 0::2, :], x2[:, 1::2, :]], axis=1)           # (N, 2, 14, 28)
    xr = jnp.pad(xr, ((0, n_pad - n), (0, 0), (0, 10), (0, 0)))        # (N_pad, 2, 24, 28)

    out10, out2 = pl.pallas_call(
        _fused_kernel,
        out_shape=(jax.ShapeDtypeStruct((n_pad, 10), jnp.float32),
                   jax.ShapeDtypeStruct((n_pad, 2), jnp.float32)),
        grid_spec=pltpu.PrefetchScalarGridSpec(
            num_scalar_prefetch=0,
            grid=(n_pad // TB,),
            in_specs=[
                pl.BlockSpec((TB, 2, 24, 28), lambda b: (b, 0, 0, 0)),   # batch-tiled input
                pl.BlockSpec((5, 28, 240), lambda b: (0, 0, 0)),         # weights: VMEM-resident
                pl.BlockSpec((5, 120, 160), lambda b: (0, 0, 0)),
                pl.BlockSpec((8, 160, 12), lambda b: (0, 0, 0)),
            ],
            out_specs=(
                pl.BlockSpec((TB, 10), lambda b: (b, 0)),
                pl.BlockSpec((TB, 2), lambda b: (b, 0)),
            )),
        compiler_params=pltpu.CompilerParams(
            dimension_semantics=("parallel",)),   # v7x: shard batch over both TCs
    )(xr, m1, m2, wh3)
    return out10[:n], out2[:n]


# Pure-JAX reference for a sanity check (not part of the kernel path).
def convnet_reference(x_nchw, params):
    dn1 = jax.lax.conv_dimension_numbers(x_nchw.shape, params["w1"].shape,
                                         ("NCHW", "OIHW", "NCHW"))
    c1 = jnp.maximum(jax.lax.conv_general_dilated(
        x_nchw, params["w1"], (1, 1), "VALID", dimension_numbers=dn1), 0.0)
    p = jax.lax.reduce_window(c1, -jnp.inf, jax.lax.max,
                              (1, 1, 2, 2), (1, 1, 2, 2), "VALID")
    dn2 = jax.lax.conv_dimension_numbers(p.shape, params["w2"].shape,
                                         ("NCHW", "OIHW", "NCHW"))
    c2 = jnp.maximum(jax.lax.conv_general_dilated(
        p, params["w2"], (1, 1), "VALID", dimension_numbers=dn2), 0.0)
    flat = c2.reshape(c2.shape[0], -1)
    y = jnp.maximum(flat @ params["fc1_bin"].T, 0.0)
    x = jnp.maximum(flat @ params["fc1"].T, 0.0)
    return jax.nn.softmax(x, axis=1), jax.nn.softmax(y, axis=1)


# NOTE: get_loss / set_loss are stateless scalar bookkeeping (no compute);
# set_parameter is torch checkpoint loading and is out of scope for a synthetic kernel.

if __name__ == "__main__":
    key = jax.random.PRNGKey(0)
    kx, kp = jax.random.split(key)
    # batch=2; spatial must be 28x28 because the module hardcodes ndf = 20*8*8.
    x = jax.random.normal(kx, (2, 1, 28, 28), jnp.float32)
    params = init_params(kp)

    out10, out2 = convnet_forward(x, params)
    jax.block_until_ready((out10, out2))

    ref10, ref2 = convnet_reference(x, params)
    assert out10.shape == (2, 10) and out2.shape == (2, 2)
    assert bool(jnp.all(jnp.isfinite(out10))) and bool(jnp.all(jnp.isfinite(out2)))
    assert float(jnp.max(jnp.abs(out10 - ref10))) < 1e-2
    assert float(jnp.max(jnp.abs(out2 - ref2))) < 1e-2
    print("KERNEL_OK")
</pallas_src>

<mosaic_0001>
module attributes {stable_mosaic.version = 11 : i64} {
  func.func private @main(%arg0: i32) attributes {dimension_semantics = [#tpu.dimension_semantics<core_parallel>], iteration_bounds = array<i64: 2>, tpu.core_type = #tpu.core_type<sc_scalar_subcore>, window_params = []} {
    return
  }
}

module attributes {stable_mosaic.version = 11 : i64} {
  func.func private @main(%arg0: i32) attributes {dimension_semantics = [#tpu.dimension_semantics<core_parallel>], iteration_bounds = array<i64: 2>, tpu.core_type = #tpu.core_type<sc_scalar_subcore>, window_params = []} {
    return
  }
}

module attributes {stable_mosaic.version = 11 : i64} {
  func.func @_fused_kernel(%arg0: i32, %arg1: memref<8x2x24x28xf32, #tpu.memory_space<vmem>>, %arg2: memref<5x28x240xf32, #tpu.memory_space<vmem>>, %arg3: memref<5x120x160xf32, #tpu.memory_space<vmem>>, %arg4: memref<8x160x12xf32, #tpu.memory_space<vmem>>, %arg5: memref<8x10xf32, #tpu.memory_space<vmem>>, %arg6: memref<8x2xf32, #tpu.memory_space<vmem>>) attributes {dimension_semantics = [#tpu.dimension_semantics<parallel>], iteration_bounds = array<i64: 1>, scalar_prefetch = 0 : i64, scratch_operands = 0 : i64, tpu.core_type = #tpu.core_type<tc>, window_params = [{transform_indices = @transform_0, window_bounds = array<i64: 8, 2, 24, 28>}, {pipeline_mode = #tpu.pipeline_mode<synchronous>, transform_indices = @transform_1, window_bounds = array<i64: 5, 28, 240>}, {pipeline_mode = #tpu.pipeline_mode<synchronous>, transform_indices = @transform_2, window_bounds = array<i64: 5, 120, 160>}, {pipeline_mode = #tpu.pipeline_mode<synchronous>, transform_indices = @transform_3, window_bounds = array<i64: 8, 160, 12>}, {transform_indices = @transform_4, window_bounds = array<i64: 8, 10>}, {transform_indices = @transform_5, window_bounds = array<i64: 8, 2>}]} {
    %c0 = arith.constant 0 : index
    %c0_0 = arith.constant 0 : index
    %c0_1 = arith.constant 0 : index
    %c0_2 = arith.constant 0 : index
    %0 = vector.load %arg1[%c0, %c0_0, %c0_1, %c0_2] : memref<8x2x24x28xf32, #tpu.memory_space<vmem>>, vector<8x2x24x28xf32>
    %cst = arith.constant 0.000000e+00 : f32
    %1 = vector.broadcast %cst : f32 to vector<128x240xf32>
    %2 = vector.extract_strided_slice %0 {offsets = [0, 0, 0, 0], sizes = [8, 1, 16, 28], strides = [1, 1, 1, 1]} : vector<8x2x24x28xf32> to vector<8x1x16x28xf32>
    %3 = vector.shape_cast %2 : vector<8x1x16x28xf32> to vector<8x16x28xf32>
    %4 = vector.shape_cast %3 : vector<8x16x28xf32> to vector<128x28xf32>
    %c0_3 = arith.constant 0 : index
    %c0_4 = arith.constant 0 : index
    %c0_5 = arith.constant 0 : index
    %5 = vector.load %arg2[%c0_3, %c0_4, %c0_5] : memref<5x28x240xf32, #tpu.memory_space<vmem>>, vector<1x28x240xf32>
    %6 = vector.shape_cast %5 : vector<1x28x240xf32> to vector<28x240xf32>
    %cst_6 = arith.constant dense<0.000000e+00> : vector<128x240xf32>
    %7 = tpu.matmul %4, %6, %cst_6 {dimension_numbers = #tpu.dot_dimension_numbers<[1], [0], [0], [1], [0, 0, 1, 1], [], []>} : vector<128x28xf32>, vector<28x240xf32>, vector<128x240xf32> -> vector<128x240xf32>
    %8 = arith.addf %1, %7 : vector<128x240xf32>
    %9 = vector.extract_strided_slice %0 {offsets = [0, 1, 0, 0], sizes = [8, 1, 16, 28], strides = [1, 1, 1, 1]} : vector<8x2x24x28xf32> to vector<8x1x16x28xf32>
    %10 = vector.shape_cast %9 : vector<8x1x16x28xf32> to vector<8x16x28xf32>
    %11 = vector.shape_cast %10 : vector<8x16x28xf32> to vector<128x28xf32>
    %c1 = arith.constant 1 : index
    %c0_7 = arith.constant 0 : index
    %c0_8 = arith.constant 0 : index
    %12 = vector.load %arg2[%c1, %c0_7, %c0_8] : memref<5x28x240xf32, #tpu.memory_space<vmem>>, vector<1x28x240xf32>
    %13 = vector.shape_cast %12 : vector<1x28x240xf32> to vector<28x240xf32>
    %cst_9 = arith.constant dense<0.000000e+00> : vector<128x240xf32>
    %14 = tpu.matmul %11, %13, %cst_9 {dimension_numbers = #tpu.dot_dimension_numbers<[1], [0], [0], [1], [0, 0, 1, 1], [], []>} : vector<128x28xf32>, vector<28x240xf32>, vector<128x240xf32> -> vector<128x240xf32>
    %15 = arith.addf %8, %14 : vector<128x240xf32>
    %16 = vector.extract_strided_slice %0 {offsets = [0, 0, 1, 0], sizes = [8, 1, 16, 28], strides = [1, 1, 1, 1]} : vector<8x2x24x28xf32> to vector<8x1x16x28xf32>
    %17 = vector.shape_cast %16 : vector<8x1x16x28xf32> to vector<8x16x28xf32>
    %18 = vector.shape_cast %17 : vector<8x16x28xf32> to vector<128x28xf32>
    %c2 = arith.constant 2 : index
    %c0_10 = arith.constant 0 : index
    %c0_11 = arith.constant 0 : index
    %19 = vector.load %arg2[%c2, %c0_10, %c0_11] : memref<5x28x240xf32, #tpu.memory_space<vmem>>, vector<1x28x240xf32>
    %20 = vector.shape_cast %19 : vector<1x28x240xf32> to vector<28x240xf32>
    %cst_12 = arith.constant dense<0.000000e+00> : vector<128x240xf32>
    %21 = tpu.matmul %18, %20, %cst_12 {dimension_numbers = #tpu.dot_dimension_numbers<[1], [0], [0], [1], [0, 0, 1, 1], [], []>} : vector<128x28xf32>, vector<28x240xf32>, vector<128x240xf32> -> vector<128x240xf32>
    %22 = arith.addf %15, %21 : vector<128x240xf32>
    %23 = vector.extract_strided_slice %0 {offsets = [0, 1, 1, 0], sizes = [8, 1, 16, 28], strides = [1, 1, 1, 1]} : vector<8x2x24x28xf32> to vector<8x1x16x28xf32>
    %24 = vector.shape_cast %23 : vector<8x1x16x28xf32> to vector<8x16x28xf32>
    %25 = vector.shape_cast %24 : vector<8x16x28xf32> to vector<128x28xf32>
    %c3 = arith.constant 3 : index
    %c0_13 = arith.constant 0 : index
    %c0_14 = arith.constant 0 : index
    %26 = vector.load %arg2[%c3, %c0_13, %c0_14] : memref<5x28x240xf32, #tpu.memory_space<vmem>>, vector<1x28x240xf32>
    %27 = vector.shape_cast %26 : vector<1x28x240xf32> to vector<28x240xf32>
    %cst_15 = arith.constant dense<0.000000e+00> : vector<128x240xf32>
    %28 = tpu.matmul %25, %27, %cst_15 {dimension_numbers = #tpu.dot_dimension_numbers<[1], [0], [0], [1], [0, 0, 1, 1], [], []>} : vector<128x28xf32>, vector<28x240xf32>, vector<128x240xf32> -> vector<128x240xf32>
    %29 = arith.addf %22, %28 : vector<128x240xf32>
    %30 = vector.extract_strided_slice %0 {offsets = [0, 0, 2, 0], sizes = [8, 1, 16, 28], strides = [1, 1, 1, 1]} : vector<8x2x24x28xf32> to vector<8x1x16x28xf32>
    %31 = vector.shape_cast %30 : vector<8x1x16x28xf32> to vector<8x16x28xf32>
    %32 = vector.shape_cast %31 : vector<8x16x28xf32> to vector<128x28xf32>
    %c4 = arith.constant 4 : index
    %c0_16 = arith.constant 0 : index
    %c0_17 = arith.constant 0 : index
    %33 = vector.load %arg2[%c4, %c0_16, %c0_17] : memref<5x28x240xf32, #tpu.memory_space<vmem>>, vector<1x28x240xf32>
    %34 = vector.shape_cast %33 : vector<1x28x240xf32> to vector<28x240xf32>
    %cst_18 = arith.constant dense<0.000000e+00> : vector<128x240xf32>
    %35 = tpu.matmul %32, %34, %cst_18 {dimension_numbers = #tpu.dot_dimension_numbers<[1], [0], [0], [1], [0, 0, 1, 1], [], []>} : vector<128x28xf32>, vector<28x240xf32>, vector<128x240xf32> -> vector<128x240xf32>
    %36 = arith.addf %29, %35 : vector<128x240xf32>
    %cst_19 = arith.constant 0.000000e+00 : f32
    %37 = vector.broadcast %cst_19 : f32 to vector<128x240xf32>
    %38 = vector.extract_strided_slice %0 {offsets = [0, 1, 0, 0], sizes = [8, 1, 16, 28], strides = [1, 1, 1, 1]} : vector<8x2x24x28xf32> to vector<8x1x16x28xf32>
    %39 = vector.shape_cast %38 : vector<8x1x16x28xf32> to vector<8x16x28xf32>
    %40 = vector.shape_cast %39 : vector<8x16x28xf32> to vector<128x28xf32>
    %c0_20 = arith.constant 0 : index
    %c0_21 = arith.constant 0 : index
    %c0_22 = arith.constant 0 : index
    %41 = vector.load %arg2[%c0_20, %c0_21, %c0_22] : memref<5x28x240xf32, #tpu.memory_space<vmem>>, vector<1x28x240xf32>
    %42 = vector.shape_cast %41 : vector<1x28x240xf32> to vector<28x240xf32>
    %cst_23 = arith.constant dense<0.000000e+00> : vector<128x240xf32>
    %43 = tpu.matmul %40, %42, %cst_23 {dimension_numbers = #tpu.dot_dimension_numbers<[1], [0], [0], [1], [0, 0, 1, 1], [], []>} : vector<128x28xf32>, vector<28x240xf32>, vector<128x240xf32> -> vector<128x240xf32>
    %44 = arith.addf %37, %43 : vector<128x240xf32>
    %45 = vector.extract_strided_slice %0 {offsets = [0, 0, 1, 0], sizes = [8, 1, 16, 28], strides = [1, 1, 1, 1]} : vector<8x2x24x28xf32> to vector<8x1x16x28xf32>
    %46 = vector.shape_cast %45 : vector<8x1x16x28xf32> to vector<8x16x28xf32>
    %47 = vector.shape_cast %46 : vector<8x16x28xf32> to vector<128x28xf32>
    %c1_24 = arith.constant 1 : index
    %c0_25 = arith.constant 0 : index
    %c0_26 = arith.constant 0 : index
    %48 = vector.load %arg2[%c1_24, %c0_25, %c0_26] : memref<5x28x240xf32, #tpu.memory_space<vmem>>, vector<1x28x240xf32>
    %49 = vector.shape_cast %48 : vector<1x28x240xf32> to vector<28x240xf32>
    %cst_27 = arith.constant dense<0.000000e+00> : vector<128x240xf32>
    %50 = tpu.matmul %47, %49, %cst_27 {dimension_numbers = #tpu.dot_dimension_numbers<[1], [0], [0], [1], [0, 0, 1, 1], [], []>} : vector<128x28xf32>, vector<28x240xf32>, vector<128x240xf32> -> vector<128x240xf32>
    %51 = arith.addf %44, %50 : vector<128x240xf32>
    %52 = vector.extract_strided_slice %0 {offsets = [0, 1, 1, 0], sizes = [8, 1, 16, 28], strides = [1, 1, 1, 1]} : vector<8x2x24x28xf32> to vector<8x1x16x28xf32>
    %53 = vector.shape_cast %52 : vector<8x1x16x28xf32> to vector<8x16x28xf32>
    %54 = vector.shape_cast %53 : vector<8x16x28xf32> to vector<128x28xf32>
    %c2_28 = arith.constant 2 : index
    %c0_29 = arith.constant 0 : index
    %c0_30 = arith.constant 0 : index
    %55 = vector.load %arg2[%c2_28, %c0_29, %c0_30] : memref<5x28x240xf32, #tpu.memory_space<vmem>>, vector<1x28x240xf32>
    %56 = vector.shape_cast %55 : vector<1x28x240xf32> to vector<28x240xf32>
    %cst_31 = arith.constant dense<0.000000e+00> : vector<128x240xf32>
    %57 = tpu.matmul %54, %56, %cst_31 {dimension_numbers = #tpu.dot_dimension_numbers<[1], [0], [0], [1], [0, 0, 1, 1], [], []>} : vector<128x28xf32>, vector<28x240xf32>, vector<128x240xf32> -> vector<128x240xf32>
    %58 = arith.addf %51, %57 : vector<128x240xf32>
    %59 = vector.extract_strided_slice %0 {offsets = [0, 0, 2, 0], sizes = [8, 1, 16, 28], strides = [1, 1, 1, 1]} : vector<8x2x24x28xf32> to vector<8x1x16x28xf32>
    %60 = vector.shape_cast %59 : vector<8x1x16x28xf32> to vector<8x16x28xf32>
    %61 = vector.shape_cast %60 : vector<8x16x28xf32> to vector<128x28xf32>
    %c3_32 = arith.constant 3 : index
    %c0_33 = arith.constant 0 : index
    %c0_34 = arith.constant 0 : index
    %62 = vector.load %arg2[%c3_32, %c0_33, %c0_34] : memref<5x28x240xf32, #tpu.memory_space<vmem>>, vector<1x28x240xf32>
    %63 = vector.shape_cast %62 : vector<1x28x240xf32> to vector<28x240xf32>
    %cst_35 = arith.constant dense<0.000000e+00> : vector<128x240xf32>
    %64 = tpu.matmul %61, %63, %cst_35 {dimension_numbers = #tpu.dot_dimension_numbers<[1], [0], [0], [1], [0, 0, 1, 1], [], []>} : vector<128x28xf32>, vector<28x240xf32>, vector<128x240xf32> -> vector<128x240xf32>
    %65 = arith.addf %58, %64 : vector<128x240xf32>
    %66 = vector.extract_strided_slice %0 {offsets = [0, 1, 2, 0], sizes = [8, 1, 16, 28], strides = [1, 1, 1, 1]} : vector<8x2x24x28xf32> to vector<8x1x16x28xf32>
    %67 = vector.shape_cast %66 : vector<8x1x16x28xf32> to vector<8x16x28xf32>
    %68 = vector.shape_cast %67 : vector<8x16x28xf32> to vector<128x28xf32>
    %c4_36 = arith.constant 4 : index
    %c0_37 = arith.constant 0 : index
    %c0_38 = arith.constant 0 : index
    %69 = vector.load %arg2[%c4_36, %c0_37, %c0_38] : memref<5x28x240xf32, #tpu.memory_space<vmem>>, vector<1x28x240xf32>
    %70 = vector.shape_cast %69 : vector<1x28x240xf32> to vector<28x240xf32>
    %cst_39 = arith.constant dense<0.000000e+00> : vector<128x240xf32>
    %71 = tpu.matmul %68, %70, %cst_39 {dimension_numbers = #tpu.dot_dimension_numbers<[1], [0], [0], [1], [0, 0, 1, 1], [], []>} : vector<128x28xf32>, vector<28x240xf32>, vector<128x240xf32> -> vector<128x240xf32>
    %72 = arith.addf %65, %71 : vector<128x240xf32>
    %73 = arith.maximumf %36, %72 : vector<128x240xf32>
    %74 = vector.extract_strided_slice %73 {offsets = [0, 0], sizes = [128, 120], strides = [1, 1]} : vector<128x240xf32> to vector<128x120xf32>
    %75 = vector.extract_strided_slice %73 {offsets = [0, 120], sizes = [128, 120], strides = [1, 1]} : vector<128x240xf32> to vector<128x120xf32>
    %76 = arith.maximumf %74, %75 : vector<128x120xf32>
    %cst_40 = arith.constant 0.000000e+00 : f32
    %77 = vector.broadcast %cst_40 : f32 to vector<128x120xf32>
    %78 = arith.maximumf %76, %77 : vector<128x120xf32>
    %79 = vector.shape_cast %78 : vector<128x120xf32> to vector<8x16x120xf32>
    %cst_41 = arith.constant 0.000000e+00 : f32
    %80 = vector.broadcast %cst_41 : f32 to vector<64x160xf32>
    %81 = vector.extract_strided_slice %79 {offsets = [0, 0, 0], sizes = [8, 8, 120], strides = [1, 1, 1]} : vector<8x16x120xf32> to vector<8x8x120xf32>
    %82 = vector.shape_cast %81 : vector<8x8x120xf32> to vector<64x120xf32>
    %c0_42 = arith.constant 0 : index
    %c0_43 = arith.constant 0 : index
    %c0_44 = arith.constant 0 : index
    %83 = vector.load %arg3[%c0_42, %c0_43, %c0_44] : memref<5x120x160xf32, #tpu.memory_space<vmem>>, vector<1x120x160xf32>
    %84 = vector.shape_cast %83 : vector<1x120x160xf32> to vector<120x160xf32>
    %cst_45 = arith.constant dense<0.000000e+00> : vector<64x160xf32>
    %85 = tpu.matmul %82, %84, %cst_45 {dimension_numbers = #tpu.dot_dimension_numbers<[1], [0], [0], [1], [0, 0, 1, 1], [], []>} : vector<64x120xf32>, vector<120x160xf32>, vector<64x160xf32> -> vector<64x160xf32>
    %86 = arith.addf %80, %85 : vector<64x160xf32>
    %87 = vector.extract_strided_slice %79 {offsets = [0, 1, 0], sizes = [8, 8, 120], strides = [1, 1, 1]} : vector<8x16x120xf32> to vector<8x8x120xf32>
    %88 = vector.shape_cast %87 : vector<8x8x120xf32> to vector<64x120xf32>
    %c1_46 = arith.constant 1 : index
    %c0_47 = arith.constant 0 : index
    %c0_48 = arith.constant 0 : index
    %89 = vector.load %arg3[%c1_46, %c0_47, %c0_48] : memref<5x120x160xf32, #tpu.memory_space<vmem>>, vector<1x120x160xf32>
    %90 = vector.shape_cast %89 : vector<1x120x160xf32> to vector<120x160xf32>
    %cst_49 = arith.constant dense<0.000000e+00> : vector<64x160xf32>
    %91 = tpu.matmul %88, %90, %cst_49 {dimension_numbers = #tpu.dot_dimension_numbers<[1], [0], [0], [1], [0, 0, 1, 1], [], []>} : vector<64x120xf32>, vector<120x160xf32>, vector<64x160xf32> -> vector<64x160xf32>
    %92 = arith.addf %86, %91 : vector<64x160xf32>
    %93 = vector.extract_strided_slice %79 {offsets = [0, 2, 0], sizes = [8, 8, 120], strides = [1, 1, 1]} : vector<8x16x120xf32> to vector<8x8x120xf32>
    %94 = vector.shape_cast %93 : vector<8x8x120xf32> to vector<64x120xf32>
    %c2_50 = arith.constant 2 : index
    %c0_51 = arith.constant 0 : index
    %c0_52 = arith.constant 0 : index
    %95 = vector.load %arg3[%c2_50, %c0_51, %c0_52] : memref<5x120x160xf32, #tpu.memory_space<vmem>>, vector<1x120x160xf32>
    %96 = vector.shape_cast %95 : vector<1x120x160xf32> to vector<120x160xf32>
    %cst_53 = arith.constant dense<0.000000e+00> : vector<64x160xf32>
    %97 = tpu.matmul %94, %96, %cst_53 {dimension_numbers = #tpu.dot_dimension_numbers<[1], [0], [0], [1], [0, 0, 1, 1], [], []>} : vector<64x120xf32>, vector<120x160xf32>, vector<64x160xf32> -> vector<64x160xf32>
    %98 = arith.addf %92, %97 : vector<64x160xf32>
    %99 = vector.extract_strided_slice %79 {offsets = [0, 3, 0], sizes = [8, 8, 120], strides = [1, 1, 1]} : vector<8x16x120xf32> to vector<8x8x120xf32>
    %100 = vector.shape_cast %99 : vector<8x8x120xf32> to vector<64x120xf32>
    %c3_54 = arith.constant 3 : index
    %c0_55 = arith.constant 0 : index
    %c0_56 = arith.constant 0 : index
    %101 = vector.load %arg3[%c3_54, %c0_55, %c0_56] : memref<5x120x160xf32, #tpu.memory_space<vmem>>, vector<1x120x160xf32>
    %102 = vector.shape_cast %101 : vector<1x120x160xf32> to vector<120x160xf32>
    %cst_57 = arith.constant dense<0.000000e+00> : vector<64x160xf32>
    %103 = tpu.matmul %100, %102, %cst_57 {dimension_numbers = #tpu.dot_dimension_numbers<[1], [0], [0], [1], [0, 0, 1, 1], [], []>} : vector<64x120xf32>, vector<120x160xf32>, vector<64x160xf32> -> vector<64x160xf32>
    %104 = arith.addf %98, %103 : vector<64x160xf32>
    %105 = vector.extract_strided_slice %79 {offsets = [0, 4, 0], sizes = [8, 8, 120], strides = [1, 1, 1]} : vector<8x16x120xf32> to vector<8x8x120xf32>
    %106 = vector.shape_cast %105 : vector<8x8x120xf32> to vector<64x120xf32>
    %c4_58 = arith.constant 4 : index
    %c0_59 = arith.constant 0 : index
    %c0_60 = arith.constant 0 : index
    %107 = vector.load %arg3[%c4_58, %c0_59, %c0_60] : memref<5x120x160xf32, #tpu.memory_space<vmem>>, vector<1x120x160xf32>
    %108 = vector.shape_cast %107 : vector<1x120x160xf32> to vector<120x160xf32>
    %cst_61 = arith.constant dense<0.000000e+00> : vector<64x160xf32>
    %109 = tpu.matmul %106, %108, %cst_61 {dimension_numbers = #tpu.dot_dimension_numbers<[1], [0], [0], [1], [0, 0, 1, 1], [], []>} : vector<64x120xf32>, vector<120x160xf32>, vector<64x160xf32> -> vector<64x160xf32>
    %110 = arith.addf %104, %109 : vector<64x160xf32>
    %cst_62 = arith.constant 0.000000e+00 : f32
    %111 = vector.broadcast %cst_62 : f32 to vector<64x160xf32>
    %112 = arith.maximumf %110, %111 : vector<64x160xf32>
    %113 = vector.shape_cast %112 : vector<64x160xf32> to vector<8x8x160xf32>
    %cst_63 = arith.constant 0.000000e+00 : f32
    %114 = vector.broadcast %cst_63 : f32 to vector<8x12xf32>
    %115 = vector.extract_strided_slice %113 {offsets = [0, 0, 0], sizes = [8, 1, 160], strides = [1, 1, 1]} : vector<8x8x160xf32> to vector<8x1x160xf32>
    %116 = vector.shape_cast %115 : vector<8x1x160xf32> to vector<8x160xf32>
    %c0_64 = arith.constant 0 : index
    %c0_65 = arith.constant 0 : index
    %c0_66 = arith.constant 0 : index
    %117 = vector.load %arg4[%c0_64, %c0_65, %c0_66] : memref<8x160x12xf32, #tpu.memory_space<vmem>>, vector<1x160x12xf32>
    %118 = vector.shape_cast %117 : vector<1x160x12xf32> to vector<160x12xf32>
    %cst_67 = arith.constant dense<0.000000e+00> : vector<8x12xf32>
    %119 = tpu.matmul %116, %118, %cst_67 {dimension_numbers = #tpu.dot_dimension_numbers<[1], [0], [0], [1], [0, 0, 1, 1], [], []>} : vector<8x160xf32>, vector<160x12xf32>, vector<8x12xf32> -> vector<8x12xf32>
    %120 = arith.addf %114, %119 : vector<8x12xf32>
    %121 = vector.extract_strided_slice %113 {offsets = [0, 1, 0], sizes = [8, 1, 160], strides = [1, 1, 1]} : vector<8x8x160xf32> to vector<8x1x160xf32>
    %122 = vector.shape_cast %121 : vector<8x1x160xf32> to vector<8x160xf32>
    %c1_68 = arith.constant 1 : index
    %c0_69 = arith.constant 0 : index
    %c0_70 = arith.constant 0 : index
    %123 = vector.load %arg4[%c1_68, %c0_69, %c0_70] : memref<8x160x12xf32, #tpu.memory_space<vmem>>, vector<1x160x12xf32>
    %124 = vector.shape_cast %123 : vector<1x160x12xf32> to vector<160x12xf32>
    %cst_71 = arith.constant dense<0.000000e+00> : vector<8x12xf32>
    %125 = tpu.matmul %122, %124, %cst_71 {dimension_numbers = #tpu.dot_dimension_numbers<[1], [0], [0], [1], [0, 0, 1, 1], [], []>} : vector<8x160xf32>, vector<160x12xf32>, vector<8x12xf32> -> vector<8x12xf32>
    %126 = arith.addf %120, %125 : vector<8x12xf32>
    %127 = vector.extract_strided_slice %113 {offsets = [0, 2, 0], sizes = [8, 1, 160], strides = [1, 1, 1]} : vector<8x8x160xf32> to vector<8x1x160xf32>
    %128 = vector.shape_cast %127 : vector<8x1x160xf32> to vector<8x160xf32>
    %c2_72 = arith.constant 2 : index
    %c0_73 = arith.constant 0 : index
    %c0_74 = arith.constant 0 : index
    %129 = vector.load %arg4[%c2_72, %c0_73, %c0_74] : memref<8x160x12xf32, #tpu.memory_space<vmem>>, vector<1x160x12xf32>
    %130 = vector.shape_cast %129 : vector<1x160x12xf32> to vector<160x12xf32>
    %cst_75 = arith.constant dense<0.000000e+00> : vector<8x12xf32>
    %131 = tpu.matmul %128, %130, %cst_75 {dimension_numbers = #tpu.dot_dimension_numbers<[1], [0], [0], [1], [0, 0, 1, 1], [], []>} : vector<8x160xf32>, vector<160x12xf32>, vector<8x12xf32> -> vector<8x12xf32>
    %132 = arith.addf %126, %131 : vector<8x12xf32>
    %133 = vector.extract_strided_slice %113 {offsets = [0, 3, 0], sizes = [8, 1, 160], strides = [1, 1, 1]} : vector<8x8x160xf32> to vector<8x1x160xf32>
    %134 = vector.shape_cast %133 : vector<8x1x160xf32> to vector<8x160xf32>
    %c3_76 = arith.constant 3 : index
    %c0_77 = arith.constant 0 : index
    %c0_78 = arith.constant 0 : index
    %135 = vector.load %arg4[%c3_76, %c0_77, %c0_78] : memref<8x160x12xf32, #tpu.memory_space<vmem>>, vector<1x160x12xf32>
    %136 = vector.shape_cast %135 : vector<1x160x12xf32> to vector<160x12xf32>
    %cst_79 = arith.constant dense<0.000000e+00> : vector<8x12xf32>
    %137 = tpu.matmul %134, %136, %cst_79 {dimension_numbers = #tpu.dot_dimension_numbers<[1], [0], [0], [1], [0, 0, 1, 1], [], []>} : vector<8x160xf32>, vector<160x12xf32>, vector<8x12xf32> -> vector<8x12xf32>
    %138 = arith.addf %132, %137 : vector<8x12xf32>
    %139 = vector.extract_strided_slice %113 {offsets = [0, 4, 0], sizes = [8, 1, 160], strides = [1, 1, 1]} : vector<8x8x160xf32> to vector<8x1x160xf32>
    %140 = vector.shape_cast %139 : vector<8x1x160xf32> to vector<8x160xf32>
    %c4_80 = arith.constant 4 : index
    %c0_81 = arith.constant 0 : index
    %c0_82 = arith.constant 0 : index
    %141 = vector.load %arg4[%c4_80, %c0_81, %c0_82] : memref<8x160x12xf32, #tpu.memory_space<vmem>>, vector<1x160x12xf32>
    %142 = vector.shape_cast %141 : vector<1x160x12xf32> to vector<160x12xf32>
    %cst_83 = arith.constant dense<0.000000e+00> : vector<8x12xf32>
    %143 = tpu.matmul %140, %142, %cst_83 {dimension_numbers = #tpu.dot_dimension_numbers<[1], [0], [0], [1], [0, 0, 1, 1], [], []>} : vector<8x160xf32>, vector<160x12xf32>, vector<8x12xf32> -> vector<8x12xf32>
    %144 = arith.addf %138, %143 : vector<8x12xf32>
    %145 = vector.extract_strided_slice %113 {offsets = [0, 5, 0], sizes = [8, 1, 160], strides = [1, 1, 1]} : vector<8x8x160xf32> to vector<8x1x160xf32>
    %146 = vector.shape_cast %145 : vector<8x1x160xf32> to vector<8x160xf32>
    %c5 = arith.constant 5 : index
    %c0_84 = arith.constant 0 : index
    %c0_85 = arith.constant 0 : index
    %147 = vector.load %arg4[%c5, %c0_84, %c0_85] : memref<8x160x12xf32, #tpu.memory_space<vmem>>, vector<1x160x12xf32>
    %148 = vector.shape_cast %147 : vector<1x160x12xf32> to vector<160x12xf32>
    %cst_86 = arith.constant dense<0.000000e+00> : vector<8x12xf32>
    %149 = tpu.matmul %146, %148, %cst_86 {dimension_numbers = #tpu.dot_dimension_numbers<[1], [0], [0], [1], [0, 0, 1, 1], [], []>} : vector<8x160xf32>, vector<160x12xf32>, vector<8x12xf32> -> vector<8x12xf32>
    %150 = arith.addf %144, %149 : vector<8x12xf32>
    %151 = vector.extract_strided_slice %113 {offsets = [0, 6, 0], sizes = [8, 1, 160], strides = [1, 1, 1]} : vector<8x8x160xf32> to vector<8x1x160xf32>
    %152 = vector.shape_cast %151 : vector<8x1x160xf32> to vector<8x160xf32>
    %c6 = arith.constant 6 : index
    %c0_87 = arith.constant 0 : index
    %c0_88 = arith.constant 0 : index
    %153 = vector.load %arg4[%c6, %c0_87, %c0_88] : memref<8x160x12xf32, #tpu.memory_space<vmem>>, vector<1x160x12xf32>
    %154 = vector.shape_cast %153 : vector<1x160x12xf32> to vector<160x12xf32>
    %cst_89 = arith.constant dense<0.000000e+00> : vector<8x12xf32>
    %155 = tpu.matmul %152, %154, %cst_89 {dimension_numbers = #tpu.dot_dimension_numbers<[1], [0], [0], [1], [0, 0, 1, 1], [], []>} : vector<8x160xf32>, vector<160x12xf32>, vector<8x12xf32> -> vector<8x12xf32>
    %156 = arith.addf %150, %155 : vector<8x12xf32>
    %157 = vector.extract_strided_slice %113 {offsets = [0, 7, 0], sizes = [8, 1, 160], strides = [1, 1, 1]} : vector<8x8x160xf32> to vector<8x1x160xf32>
    %158 = vector.shape_cast %157 : vector<8x1x160xf32> to vector<8x160xf32>
    %c7 = arith.constant 7 : index
    %c0_90 = arith.constant 0 : index
    %c0_91 = arith.constant 0 : index
    %159 = vector.load %arg4[%c7, %c0_90, %c0_91] : memref<8x160x12xf32, #tpu.memory_space<vmem>>, vector<1x160x12xf32>
    %160 = vector.shape_cast %159 : vector<1x160x12xf32> to vector<160x12xf32>
    %cst_92 = arith.constant dense<0.000000e+00> : vector<8x12xf32>
    %161 = tpu.matmul %158, %160, %cst_92 {dimension_numbers = #tpu.dot_dimension_numbers<[1], [0], [0], [1], [0, 0, 1, 1], [], []>} : vector<8x160xf32>, vector<160x12xf32>, vector<8x12xf32> -> vector<8x12xf32>
    %162 = arith.addf %156, %161 : vector<8x12xf32>
    %cst_93 = arith.constant 0.000000e+00 : f32
    %163 = vector.broadcast %cst_93 : f32 to vector<8x12xf32>
    %164 = arith.maximumf %162, %163 : vector<8x12xf32>
    %165 = vector.extract_strided_slice %164 {offsets = [0, 0], sizes = [8, 10], strides = [1, 1]} : vector<8x12xf32> to vector<8x10xf32>
    %cst_94 = arith.constant dense<0xFF800000> : vector<8xf32>
    %166 = vector.multi_reduction <maximumf>, %165, %cst_94 [1] : vector<8x10xf32> to vector<8xf32>
    %167 = vector.shape_cast %166 : vector<8xf32> to vector<8x1xf32>
    %168 = vector.broadcast %167 : vector<8x1xf32> to vector<8x10xf32>
    %169 = arith.subf %165, %168 : vector<8x10xf32>
    %170 = math.exp %169 : vector<8x10xf32>
    %cst_95 = arith.constant dense<0.000000e+00> : vector<8xf32>
    %171 = vector.multi_reduction <add>, %170, %cst_95 [1] : vector<8x10xf32> to vector<8xf32>
    %172 = vector.shape_cast %171 : vector<8xf32> to vector<8x1xf32>
    %173 = tpu.reciprocal %172 {approx = true} : vector<8x1xf32> -> vector<8x1xf32>
    %174 = vector.broadcast %173 : vector<8x1xf32> to vector<8x10xf32>
    %175 = arith.mulf %170, %174 : vector<8x10xf32>
    %c0_96 = arith.constant 0 : index
    %c0_97 = arith.constant 0 : index
    %176 = vector.load %arg5[%c0_96, %c0_97] : memref<8x10xf32, #tpu.memory_space<vmem>>, vector<8x10xf32>
    tpu.vector_store %arg5[%c0_96, %c0_97], %175 {strides = array<i32>} : memref<8x10xf32, #tpu.memory_space<vmem>>, vector<8x10xf32>,
    %177 = vector.extract_strided_slice %164 {offsets = [0, 10], sizes = [8, 2], strides = [1, 1]} : vector<8x12xf32> to vector<8x2xf32>
    %cst_98 = arith.constant dense<0xFF800000> : vector<8xf32>
    %178 = vector.multi_reduction <maximumf>, %177, %cst_98 [1] : vector<8x2xf32> to vector<8xf32>
    %179 = vector.shape_cast %178 : vector<8xf32> to vector<8x1xf32>
    %180 = vector.broadcast %179 : vector<8x1xf32> to vector<8x2xf32>
    %181 = arith.subf %177, %180 : vector<8x2xf32>
    %182 = math.exp %181 : vector<8x2xf32>
    %cst_99 = arith.constant dense<0.000000e+00> : vector<8xf32>
    %183 = vector.multi_reduction <add>, %182, %cst_99 [1] : vector<8x2xf32> to vector<8xf32>
    %184 = vector.shape_cast %183 : vector<8xf32> to vector<8x1xf32>
    %185 = tpu.reciprocal %184 {approx = true} : vector<8x1xf32> -> vector<8x1xf32>
    %186 = vector.broadcast %185 : vector<8x1xf32> to vector<8x2xf32>
    %187 = arith.mulf %182, %186 : vector<8x2xf32>
    %c0_100 = arith.constant 0 : index
    %c0_101 = arith.constant 0 : index
    %188 = vector.load %arg6[%c0_100, %c0_101] : memref<8x2xf32, #tpu.memory_space<vmem>>, vector<8x2xf32>
    tpu.vector_store %arg6[%c0_100, %c0_101], %187 {strides = array<i32>} : memref<8x2xf32, #tpu.memory_space<vmem>>, vector<8x2xf32>,
    return
  }
  func.func @transform_0(%arg0: i32) -> (i32, i32, i32, i32) {
    %c0_i32 = arith.constant 0 : i32
    %c0_i32_0 = arith.constant 0 : i32
    %c0_i32_1 = arith.constant 0 : i32
    %c0_i32_2 = arith.constant 0 : i32
    return %arg0, %c0_i32, %c0_i32_0, %c0_i32_1 : i32, i32, i32, i32
  }
  func.func @transform_1(%arg0: i32) -> (i32, i32, i32) {
    %c0_i32 = arith.constant 0 : i32
    %c0_i32_0 = arith.constant 0 : i32
    %c0_i32_1 = arith.constant 0 : i32
    %c0_i32_2 = arith.constant 0 : i32
    return %c0_i32, %c0_i32_0, %c0_i32_1 : i32, i32, i32
  }
  func.func @transform_2(%arg0: i32) -> (i32, i32, i32) {
    %c0_i32 = arith.constant 0 : i32
    %c0_i32_0 = arith.constant 0 : i32
    %c0_i32_1 = arith.constant 0 : i32
    %c0_i32_2 = arith.constant 0 : i32
    return %c0_i32, %c0_i32_0, %c0_i32_1 : i32, i32, i32
  }
  func.func @transform_3(%arg0: i32) -> (i32, i32, i32) {
    %c0_i32 = arith.constant 0 : i32
    %c0_i32_0 = arith.constant 0 : i32
    %c0_i32_1 = arith.constant 0 : i32
    %c0_i32_2 = arith.constant 0 : i32
    return %c0_i32, %c0_i32_0, %c0_i32_1 : i32, i32, i32
  }
  func.func @transform_4(%arg0: i32) -> (i32, i32) {
    %c0_i32 = arith.constant 0 : i32
    %c0_i32_0 = arith.constant 0 : i32
    return %arg0, %c0_i32 : i32, i32
  }
  func.func @transform_5(%arg0: i32) -> (i32, i32) {
    %c0_i32 = arith.constant 0 : i32
    %c0_i32_0 = arith.constant 0 : i32
    return %arg0, %c0_i32 : i32, i32
  }
}

</mosaic_0001>

<llo_original>
// kernel: mul.1
$region0: #{mul.1}
  #allocation0 [shape = 's32[1]{0}', space=sflag, size = 0x4, scoped, tag = 'scoped memory for mul.1']
  %s0 = inlined_call_operand.vmem [shape: f32[96000], index: 0, kind: input, shape index: {}]
  %s1 = inlined_call_operand.vmem [shape: f32[96000], index: 1, kind: input, shape index: {}]
  %s2 = inlined_call_operand.vmem [shape: f32[96000], index: 2, kind: output, shape index: {}]
  %v3 = vld [vmem:[%s0] sm:$0xff]
  %v4 = vld [vmem:[%s1] sm:$0xff]
  %5 = xla_tuple %v3, %v4
  %6 = xla_tuple %5
  %v7 = vmul.f32 %v3, %v4
  %8 = xla_tuple %v7
  %9 = vst [vmem:[%s2] sm:$0xff] %v7
  %s10 = scalar_lea.vmem %s0, 8
  %v11 = vld [vmem:[%s10] sm:$0xff]
  %s12 = scalar_lea.vmem %s1, 8
  %v13 = vld [vmem:[%s12] sm:$0xff]
  %14 = xla_tuple %v11, %v13
  %15 = xla_tuple %14
  %v16 = vmul.f32 %v11, %v13
  %17 = xla_tuple %v16
  %s18 = scalar_lea.vmem %s2, 8
  %19 = vst [vmem:[%s18] sm:$0xff] %v16
  %s20 = scalar_lea.vmem %s0, 16
  %v21 = vld [vmem:[%s20] sm:$0xff]
  %s22 = scalar_lea.vmem %s1, 16
  %v23 = vld [vmem:[%s22] sm:$0xff]
  %24 = xla_tuple %v21, %v23
  %25 = xla_tuple %24
  %v26 = vmul.f32 %v21, %v23
  %27 = xla_tuple %v26
  %s28 = scalar_lea.vmem %s2, 16
  %29 = vst [vmem:[%s28] sm:$0xff] %v26
  %s30 = scalar_lea.vmem %s0, 24
  %v31 = vld [vmem:[%s30] sm:$0xff]
  %s32 = scalar_lea.vmem %s1, 24
  %v33 = vld [vmem:[%s32] sm:$0xff]
  %34 = xla_tuple %v31, %v33
  %35 = xla_tuple %34
  %v36 = vmul.f32 %v31, %v33
  %37 = xla_tuple %v36
  %s38 = scalar_lea.vmem %s2, 24
  %39 = vst [vmem:[%s38] sm:$0xff] %v36
  %s40 = scalar_lea.vmem %s0, 32
  %v41 = vld [vmem:[%s40] sm:$0xff]
  %s42 = scalar_lea.vmem %s1, 32
  %v43 = vld [vmem:[%s42] sm:$0xff]
  %44 = xla_tuple %v41, %v43
  %45 = xla_tuple %44
  %v46 = vmul.f32 %v41, %v43
  %47 = xla_tuple %v46
  %s48 = scalar_lea.vmem %s2, 32
  %49 = vst [vmem:[%s48] sm:$0xff] %v46
  %s50 = scalar_lea.vmem %s0, 40
  %v51 = vld [vmem:[%s50] sm:$0xff]
  %s52 = scalar_lea.vmem %s1, 40
  %v53 = vld [vmem:[%s52] sm:$0xff]
  %54 = xla_tuple %v51, %v53
  %55 = xla_tuple %54
  %v56 = vmul.f32 %v51, %v53
  %57 = xla_tuple %v56
  %s58 = scalar_lea.vmem %s2, 40
  %59 = vst [vmem:[%s58] sm:$0xff] %v56
  %s60 = scalar_lea.vmem %s0, 48
  %v61 = vld [vmem:[%s60] sm:$0xff]
  %s62 = scalar_lea.vmem %s1, 48
  %v63 = vld [vmem:[%s62] sm:$0xff]
  %64 = xla_tuple %v61, %v63
  %65 = xla_tuple %64
  %v66 = vmul.f32 %v61, %v63
  %67 = xla_tuple %v66
  %s68 = scalar_lea.vmem %s2, 48
  %69 = vst [vmem:[%s68] sm:$0xff] %v66
  %s70 = scalar_lea.vmem %s0, 56
  %v71 = vld [vmem:[%s70] sm:$0xff]
  %s72 = scalar_lea.vmem %s1, 56
  %v73 = vld [vmem:[%s72] sm:$0xff]
  %74 = xla_tuple %v71, %v73
  %75 = xla_tuple %74
  %v76 = vmul.f32 %v71, %v73
  %77 = xla_tuple %v76
  %s78 = scalar_lea.vmem %s2, 56
  %79 = vst [vmem:[%s78] sm:$0xff] %v76
  %s80 = scalar_lea.vmem %s0, 64
  %v81 = vld [vmem:[%s80] sm:$0xff]
  %s82 = scalar_lea.vmem %s1, 64
  %v83 = vld [vmem:[%s82] sm:$0xff]
  %84 = xla_tuple %v81, %v83
  %85 = xla_tuple %84
  %v86 = vmul.f32 %v81, %v83
  %87 = xla_tuple %v86
  %s88 = scalar_lea.vmem %s2, 64
  %89 = vst [vmem:[%s88] sm:$0xff] %v86
  %s90 = scalar_lea.vmem %s0, 72
  %v91 = vld [vmem:[%s90] sm:$0xff]
  %s92 = scalar_lea.vmem %s1, 72
  %v93 = vld [vmem:[%s92] sm:$0xff]
  %94 = xla_tuple %v91, %v93
  %95 = xla_tuple %94
  %v96 = vmul.f32 %v91, %v93
  %97 = xla_tuple %v96
  %s98 = scalar_lea.vmem %s2, 72
  %99 = vst [vmem:[%s98] sm:$0xff] %v96
  %s100 = scalar_lea.vmem %s0, 80
  %v101 = vld [vmem:[%s100] sm:$0xff]
  %s102 = scalar_lea.vmem %s1, 80
  %v103 = vld [vmem:[%s102] sm:$0xff]
  %104 = xla_tuple %v101, %v103
  %105 = xla_tuple %104
  %v106 = vmul.f32 %v101, %v103
  %107 = xla_tuple %v106
  %s108 = scalar_lea.vmem %s2, 80
  %109 = vst [vmem:[%s108] sm:$0xff] %v106
  %s110 = scalar_lea.vmem %s0, 88
  %v111 = vld [vmem:[%s110] sm:$0xff]
  %s112 = scalar_lea.vmem %s1, 88
  %v113 = vld [vmem:[%s112] sm:$0xff]
  %114 = xla_tuple %v111, %v113
  %115 = xla_tuple %114
  %v116 = vmul.f32 %v111, %v113
  %117 = xla_tuple %v116
  %s118 = scalar_lea.vmem %s2, 88
  %119 = vst [vmem:[%s118] sm:$0xff] %v116
  %s120 = scalar_lea.vmem %s0, 96
  %v121 = vld [vmem:[%s120] sm:$0xff]
  %s122 = scalar_lea.vmem %s1, 96
  %v123 = vld [vmem:[%s122] sm:$0xff]
  %124 = xla_tuple %v121, %v123
  %125 = xla_tuple %124
  %v126 = vmul.f32 %v121, %v123
  %127 = xla_tuple %v126
  %s128 = scalar_lea.vmem %s2, 96
  %129 = vst [vmem:[%s128] sm:$0xff] %v126
  %s130 = scalar_lea.vmem %s0, 104
  %v131 = vld [vmem:[%s130] sm:$0xff]
  %s132 = scalar_lea.vmem %s1, 104
  %v133 = vld [vmem:[%s132] sm:$0xff]
  %134 = xla_tuple %v131, %v133
  %135 = xla_tuple %134
  %v136 = vmul.f32 %v131, %v133
  %137 = xla_tuple %v136
  %s138 = scalar_lea.vmem %s2, 104
  %139 = vst [vmem:[%s138] sm:$0xff] %v136
  %s140 = scalar_lea.vmem %s0, 112
  %v141 = vld [vmem:[%s140] sm:$0xff]
  %s142 = scalar_lea.vmem %s1, 112
  %v143 = vld [vmem:[%s142] sm:$0xff]
  %144 = xla_tuple %v141, %v143
  %145 = xla_tuple %144
  %v146 = vmul.f32 %v141, %v143
  %147 = xla_tuple %v146
  %s148 = scalar_lea.vmem %s2, 112
  %149 = vst [vmem:[%s148] sm:$0xff] %v146
  %s150 = scalar_lea.vmem %s0, 120
  %v151 = vld [vmem:[%s150] sm:$0xff]
  %s152 = scalar_lea.vmem %s1, 120
  %v153 = vld [vmem:[%s152] sm:$0xff]
  %154 = xla_tuple %v151, %v153
  %155 = xla_tuple %154
  %v156 = vmul.f32 %v151, %v153
  %157 = xla_tuple %v156
  %s158 = scalar_lea.vmem %s2, 120
  %159 = vst [vmem:[%s158] sm:$0xff] %v156
  %s160 = scalar_lea.vmem %s0, 128
  %v161 = vld [vmem:[%s160] sm:$0xff]
  %s162 = scalar_lea.vmem %s1, 128
  %v163 = vld [vmem:[%s162] sm:$0xff]
  %164 = xla_tuple %v161, %v163
  %165 = xla_tuple %164
  %v166 = vmul.f32 %v161, %v163
  %167 = xla_tuple %v166
  %s168 = scalar_lea.vmem %s2, 128
  %169 = vst [vmem:[%s168] sm:$0xff] %v166
  %s170 = scalar_lea.vmem %s0, 136
  %v171 = vld [vmem:[%s170] sm:$0xff]
  %s172 = scalar_lea.vmem %s1, 136
  %v173 = vld [vmem:[%s172] sm:$0xff]
  %174 = xla_tuple %v171, %v173
  %175 = xla_tuple %174
  %v176 = vmul.f32 %v171, %v173
  %177 = xla_tuple %v176
  %s178 = scalar_lea.vmem %s2, 136
  %179 = vst [vmem:[%s178] sm:$0xff] %v176
  %s180 = scalar_lea.vmem %s0, 144
  %v181 = vld [vmem:[%s180] sm:$0xff]
  %s182 = scalar_lea.vmem %s1, 144
  %v183 = vld [vmem:[%s182] sm:$0xff]
  %184 = xla_tuple %v181, %v183
  %185 = xla_tuple %184
  %v186 = vmul.f32 %v181, %v183
  %187 = xla_tuple %v186
  %s188 = scalar_lea.vmem %s2, 144
  %189 = vst [vmem:[%s188] sm:$0xff] %v186
  %s190 = scalar_lea.vmem %s0, 152
  %v191 = vld [vmem:[%s190] sm:$0xff]
  %s192 = scalar_lea.vmem %s1, 152
  %v193 = vld [vmem:[%s192] sm:$0xff]
  %194 = xla_tuple %v191, %v193
  %195 = xla_tuple %194
  %v196 = vmul.f32 %v191, %v193
  %197 = xla_tuple %v196
  %s198 = scalar_lea.vmem %s2, 152
  %199 = vst [vmem:[%s198] sm:$0xff] %v196
  %s200 = scalar_lea.vmem %s0, 160
  %v201 = vld [vmem:[%s200] sm:$0xff]
  %s202 = scalar_lea.vmem %s1, 160
  %v203 = vld [vmem:[%s202] sm:$0xff]
  %204 = xla_tuple %v201, %v203
  %205 = xla_tuple %204
  %v206 = vmul.f32 %v201, %v203
  %207 = xla_tuple %v206
  %s208 = scalar_lea.vmem %s2, 160
  %209 = vst [vmem:[%s208] sm:$0xff] %v206
  %s210 = scalar_lea.vmem %s0, 168
  %v211 = vld [vmem:[%s210] sm:$0xff]
  %s212 = scalar_lea.vmem %s1, 168
  %v213 = vld [vmem:[%s212] sm:$0xff]
  %214 = xla_tuple %v211, %v213
  %215 = xla_tuple %214
  %v216 = vmul.f32 %v211, %v213
  %217 = xla_tuple %v216
  %s218 = scalar_lea.vmem %s2, 168
  %219 = vst [vmem:[%s218] sm:$0xff] %v216
  %s220 = scalar_lea.vmem %s0, 176
  %v221 = vld [vmem:[%s220] sm:$0xff]
  %s222 = scalar_lea.vmem %s1, 176
  %v223 = vld [vmem:[%s222] sm:$0xff]
  %224 = xla_tuple %v221, %v223
  %225 = xla_tuple %224
  %v226 = vmul.f32 %v221, %v223
  %227 = xla_tuple %v226
  %s228 = scalar_lea.vmem %s2, 176
  %229 = vst [vmem:[%s228] sm:$0xff] %v226
  %s230 = scalar_lea.vmem %s0, 184
  %v231 = vld [vmem:[%s230] sm:$0xff]
  %s232 = scalar_lea.vmem %s1, 184
  %v233 = vld [vmem:[%s232] sm:$0xff]
  %234 = xla_tuple %v231, %v233
  %235 = xla_tuple %234
  %v236 = vmul.f32 %v231, %v233
  %237 = xla_tuple %v236
  %s238 = scalar_lea.vmem %s2, 184
  %239 = vst [vmem:[%s238] sm:$0xff] %v236
  %s240 = scalar_lea.vmem %s0, 192
  %v241 = vld [vmem:[%s240] sm:$0xff]
  %s242 = scalar_lea.vmem %s1, 192
  %v243 = vld [vmem:[%s242] sm:$0xff]
  %244 = xla_tuple %v241, %v243
  %245 = xla_tuple %244
  %v246 = vmul.f32 %v241, %v243
  %247 = xla_tuple %v246
  %s248 = scalar_lea.vmem %s2, 192
  %249 = vst [vmem:[%s248] sm:$0xff] %v246
  %s250 = scalar_lea.vmem %s0, 200
  %v251 = vld [vmem:[%s250] sm:$0xff]
  %s252 = scalar_lea.vmem %s1, 200
  %v253 = vld [vmem:[%s252] sm:$0xff]
  %254 = xla_tuple %v251, %v253
  %255 = xla_tuple %254
  %v256 = vmul.f32 %v251, %v253
  %257 = xla_tuple %v256
  %s258 = scalar_lea.vmem %s2, 200
  %259 = vst [vmem:[%s258] sm:$0xff] %v256
  %s260 = scalar_lea.vmem %s0, 208
  %v261 = vld [vmem:[%s260] sm:$0xff]
  %s262 = scalar_lea.vmem %s1, 208
  %v263 = vld [vmem:[%s262] sm:$0xff]
  %264 = xla_tuple %v261, %v263
  %265 = xla_tuple %264
  %v266 = vmul.f32 %v261, %v263
  %267 = xla_tuple %v266
  %s268 = scalar_lea.vmem %s2, 208
  %269 = vst [vmem:[%s268] sm:$0xff] %v266
  %s270 = scalar_lea.vmem %s0, 216
  %v271 = vld [vmem:[%s270] sm:$0xff]
  %s272 = scalar_lea.vmem %s1, 216
  %v273 = vld [vmem:[%s272] sm:$0xff]
  %274 = xla_tuple %v271, %v273
  %275 = xla_tuple %274
  %v276 = vmul.f32 %v271, %v273
  %277 = xla_tuple %v276
  %s278 = scalar_lea.vmem %s2, 216
  %279 = vst [vmem:[%s278] sm:$0xff] %v276
  %s280 = scalar_lea.vmem %s0, 224
  %v281 = vld [vmem:[%s280] sm:$0xff]
  %s282 = scalar_lea.vmem %s1, 224
  %v283 = vld [vmem:[%s282] sm:$0xff]
  %284 = xla_tuple %v281, %v283
  %285 = xla_tuple %284
  %v286 = vmul.f32 %v281, %v283
  %287 = xla_tuple %v286
  %s288 = scalar_lea.vmem %s2, 224
  %289 = vst [vmem:[%s288] sm:$0xff] %v286
  %s290 = scalar_lea.vmem %s0, 232
  %v291 = vld [vmem:[%s290] sm:$0xff]
  %s292 = scalar_lea.vmem %s1, 232
  %v293 = vld [vmem:[%s292] sm:$0xff]
  %294 = xla_tuple %v291, %v293
  %295 = xla_tuple %294
  %v296 = vmul.f32 %v291, %v293
  %297 = xla_tuple %v296
  %s298 = scalar_lea.vmem %s2, 232
  %299 = vst [vmem:[%s298] sm:$0xff] %v296
  %s300 = scalar_lea.vmem %s0, 240
  %v301 = vld [vmem:[%s300] sm:$0xff]
  %s302 = scalar_lea.vmem %s1, 240
  %v303 = vld [vmem:[%s302] sm:$0xff]
  %304 = xla_tuple %v301, %v303
  %305 = xla_tuple %304
  %v306 = vmul.f32 %v301, %v303
  %307 = xla_tuple %v306
  %s308 = scalar_lea.vmem %s2, 240
  %309 = vst [vmem:[%s308] sm:$0xff] %v306
  %s310 = scalar_lea.vmem %s0, 248
  %v311 = vld [vmem:[%s310] sm:$0xff]
  %s312 = scalar_lea.vmem %s1, 248
  %v313 = vld [vmem:[%s312] sm:$0xff]
  %314 = xla_tuple %v311, %v313
  %315 = xla_tuple %314
  %v316 = vmul.f32 %v311, %v313
  %317 = xla_tuple %v316
  %s318 = scalar_lea.vmem %s2, 248
  %319 = vst [vmem:[%s318] sm:$0xff] %v316
  %s320 = scalar_lea.vmem %s0, 256
  %v321 = vld [vmem:[%s320] sm:$0xff]
  %s322 = scalar_lea.vmem %s1, 256
  %v323 = vld [vmem:[%s322] sm:$0xff]
  %324 = xla_tuple %v321, %v323
  %325 = xla_tuple %324
  %v326 = vmul.f32 %v321, %v323
  %327 = xla_tuple %v326
  %s328 = scalar_lea.vmem %s2, 256
  %329 = vst [vmem:[%s328] sm:$0xff] %v326
  %s330 = scalar_lea.vmem %s0, 264
  %v331 = vld [vmem:[%s330] sm:$0xff]
  %s332 = scalar_lea.vmem %s1, 264
  %v333 = vld [vmem:[%s332] sm:$0xff]
  %334 = xla_tuple %v331, %v333
  %335 = xla_tuple %334
  %v336 = vmul.f32 %v331, %v333
  %337 = xla_tuple %v336
  %s338 = scalar_lea.vmem %s2, 264
  %339 = vst [vmem:[%s338] sm:$0xff] %v336
  %s340 = scalar_lea.vmem %s0, 272
  %v341 = vld [vmem:[%s340] sm:$0xff]
  %s342 = scalar_lea.vmem %s1, 272
  %v343 = vld [vmem:[%s342] sm:$0xff]
  %344 = xla_tuple %v341, %v343
  %345 = xla_tuple %344
  %v346 = vmul.f32 %v341, %v343
  %347 = xla_tuple %v346
  %s348 = scalar_lea.vmem %s2, 272
  %349 = vst [vmem:[%s348] sm:$0xff] %v346
  %s350 = scalar_lea.vmem %s0, 280
  %v351 = vld [vmem:[%s350] sm:$0xff]
  %s352 = scalar_lea.vmem %s1, 280
  %v353 = vld [vmem:[%s352] sm:$0xff]
  %354 = xla_tuple %v351, %v353
  %355 = xla_tuple %354
  %v356 = vmul.f32 %v351, %v353
  %357 = xla_tuple %v356
  %s358 = scalar_lea.vmem %s2, 280
  %359 = vst [vmem:[%s358] sm:$0xff] %v356
  %s360 = scalar_lea.vmem %s0, 288
  %v361 = vld [vmem:[%s360] sm:$0xff]
  %s362 = scalar_lea.vmem %s1, 288
  %v363 = vld [vmem:[%s362] sm:$0xff]
  %364 = xla_tuple %v361, %v363
  %365 = xla_tuple %364
  %v366 = vmul.f32 %v361, %v363
  %367 = xla_tuple %v366
  %s368 = scalar_lea.vmem %s2, 288
  %369 = vst [vmem:[%s368] sm:$0xff] %v366
  %s370 = scalar_lea.vmem %s0, 296
  %v371 = vld [vmem:[%s370] sm:$0xff]
  %s372 = scalar_lea.vmem %s1, 296
  %v373 = vld [vmem:[%s372] sm:$0xff]
  %374 = xla_tuple %v371, %v373
  %375 = xla_tuple %374
  %v376 = vmul.f32 %v371, %v373
  %377 = xla_tuple %v376
  %s378 = scalar_lea.vmem %s2, 296
  %379 = vst [vmem:[%s378] sm:$0xff] %v376
  %s380 = scalar_lea.vmem %s0, 304
  %v381 = vld [vmem:[%s380] sm:$0xff]
  %s382 = scalar_lea.vmem %s1, 304
  %v383 = vld [vmem:[%s382] sm:$0xff]
  %384 = xla_tuple %v381, %v383
  %385 = xla_tuple %384
  %v386 = vmul.f32 %v381, %v383
  %387 = xla_tuple %v386
  %s388 = scalar_lea.vmem %s2, 304
  %389 = vst [vmem:[%s388] sm:$0xff] %v386
  %s390 = scalar_lea.vmem %s0, 312
  %v391 = vld [vmem:[%s390] sm:$0xff]
  %s392 = scalar_lea.vmem %s1, 312
  %v393 = vld [vmem:[%s392] sm:$0xff]
  %394 = xla_tuple %v391, %v393
  %395 = xla_tuple %394
  %v396 = vmul.f32 %v391, %v393
  %397 = xla_tuple %v396
  %s398 = scalar_lea.vmem %s2, 312
  %399 = vst [vmem:[%s398] sm:$0xff] %v396
  %s400 = scalar_lea.vmem %s0, 320
  %v401 = vld [vmem:[%s400] sm:$0xff]
  %s402 = scalar_lea.vmem %s1, 320
  %v403 = vld [vmem:[%s402] sm:$0xff]
  %404 = xla_tuple %v401, %v403
  %405 = xla_tuple %404
  %v406 = vmul.f32 %v401, %v403
  %407 = xla_tuple %v406
  %s408 = scalar_lea.vmem %s2, 320
  %409 = vst [vmem:[%s408] sm:$0xff] %v406
  %s410 = scalar_lea.vmem %s0, 328
  %v411 = vld [vmem:[%s410] sm:$0xff]
  %s412 = scalar_lea.vmem %s1, 328
  %v413 = vld [vmem:[%s412] sm:$0xff]
  %414 = xla_tuple %v411, %v413
  %415 = xla_tuple %414
  %v416 = vmul.f32 %v411, %v413
  %417 = xla_tuple %v416
  %s418 = scalar_lea.vmem %s2, 328
  %419 = vst [vmem:[%s418] sm:$0xff] %v416
  %s420 = scalar_lea.vmem %s0, 336
  %v421 = vld [vmem:[%s420] sm:$0xff]
  %s422 = scalar_lea.vmem %s1, 336
  %v423 = vld [vmem:[%s422] sm:$0xff]
  %424 = xla_tuple %v421, %v423
  %425 = xla_tuple %424
  %v426 = vmul.f32 %v421, %v423
  %427 = xla_tuple %v426
  %s428 = scalar_lea.vmem %s2, 336
  %429 = vst [vmem:[%s428] sm:$0xff] %v426
  %s430 = scalar_lea.vmem %s0, 344
  %v431 = vld [vmem:[%s430] sm:$0xff]
  %s432 = scalar_lea.vmem %s1, 344
  %v433 = vld [vmem:[%s432] sm:$0xff]
  %434 = xla_tuple %v431, %v433
  %435 = xla_tuple %434
  %v436 = vmul.f32 %v431, %v433
  %437 = xla_tuple %v436
  %s438 = scalar_lea.vmem %s2, 344
  %439 = vst [vmem:[%s438] sm:$0xff] %v436
  %s440 = scalar_lea.vmem %s0, 352
  %v441 = vld [vmem:[%s440] sm:$0xff]
  %s442 = scalar_lea.vmem %s1, 352
  %v443 = vld [vmem:[%s442] sm:$0xff]
  %444 = xla_tuple %v441, %v443
  %445 = xla_tuple %444
  %v446 = vmul.f32 %v441, %v443
  %447 = xla_tuple %v446
  %s448 = scalar_lea.vmem %s2, 352
  %449 = vst [vmem:[%s448] sm:$0xff] %v446
  %s450 = scalar_lea.vmem %s0, 360
  %v451 = vld [vmem:[%s450] sm:$0xff]
  %s452 = scalar_lea.vmem %s1, 360
  %v453 = vld [vmem:[%s452] sm:$0xff]
  %454 = xla_tuple %v451, %v453
  %455 = xla_tuple %454
  %v456 = vmul.f32 %v451, %v453
  %457 = xla_tuple %v456
  %s458 = scalar_lea.vmem %s2, 360
  %459 = vst [vmem:[%s458] sm:$0xff] %v456
  %s460 = scalar_lea.vmem %s0, 368
  %v461 = vld [vmem:[%s460] sm:$0xff]
  %s462 = scalar_lea.vmem %s1, 368
  %v463 = vld [vmem:[%s462] sm:$0xff]
  %464 = xla_tuple %v461, %v463
  %465 = xla_tuple %464
  %v466 = vmul.f32 %v461, %v463
  %467 = xla_tuple %v466
  %s468 = scalar_lea.vmem %s2, 368
  %469 = vst [vmem:[%s468] sm:$0xff] %v466
  %s470 = scalar_lea.vmem %s0, 376
  %v471 = vld [vmem:[%s470] sm:$0xff]
  %s472 = scalar_lea.vmem %s1, 376
  %v473 = vld [vmem:[%s472] sm:$0xff]
  %474 = xla_tuple %v471, %v473
  %475 = xla_tuple %474
  %v476 = vmul.f32 %v471, %v473
  %477 = xla_tuple %v476
  %s478 = scalar_lea.vmem %s2, 376
  %479 = vst [vmem:[%s478] sm:$0xff] %v476
  %s480 = scalar_lea.vmem %s0, 384
  %v481 = vld [vmem:[%s480] sm:$0xff]
  %s482 = scalar_lea.vmem %s1, 384
  %v483 = vld [vmem:[%s482] sm:$0xff]
  %484 = xla_tuple %v481, %v483
  %485 = xla_tuple %484
  %v486 = vmul.f32 %v481, %v483
  %487 = xla_tuple %v486
  %s488 = scalar_lea.vmem %s2, 384
  %489 = vst [vmem:[%s488] sm:$0xff] %v486
  %s490 = scalar_lea.vmem %s0, 392
  %v491 = vld [vmem:[%s490] sm:$0xff]
  %s492 = scalar_lea.vmem %s1, 392
  %v493 = vld [vmem:[%s492] sm:$0xff]
  %494 = xla_tuple %v491, %v493
  %495 = xla_tuple %494
  %v496 = vmul.f32 %v491, %v493
  %497 = xla_tuple %v496
  %s498 = scalar_lea.vmem %s2, 392
  %499 = vst [vmem:[%s498] sm:$0xff] %v496
  %s500 = scalar_lea.vmem %s0, 400
  %v501 = vld [vmem:[%s500] sm:$0xff]
  %s502 = scalar_lea.vmem %s1, 400
  %v503 = vld [vmem:[%s502] sm:$0xff]
  %504 = xla_tuple %v501, %v503
  %505 = xla_tuple %504
  %v506 = vmul.f32 %v501, %v503
  %507 = xla_tuple %v506
  %s508 = scalar_lea.vmem %s2, 400
  %509 = vst [vmem:[%s508] sm:$0xff] %v506
  %s510 = scalar_lea.vmem %s0, 408
  %v511 = vld [vmem:[%s510] sm:$0xff]
  %s512 = scalar_lea.vmem %s1, 408
  %v513 = vld [vmem:[%s512] sm:$0xff]
  %514 = xla_tuple %v511, %v513
  %515 = xla_tuple %514
  %v516 = vmul.f32 %v511, %v513
  %517 = xla_tuple %v516
  %s518 = scalar_lea.vmem %s2, 408
  %519 = vst [vmem:[%s518] sm:$0xff] %v516
  %s520 = scalar_lea.vmem %s0, 416
  %v521 = vld [vmem:[%s520] sm:$0xff]
  %s522 = scalar_lea.vmem %s1, 416
  %v523 = vld [vmem:[%s522] sm:$0xff]
  %524 = xla_tuple %v521, %v523
  %525 = xla_tuple %524
  %v526 = vmul.f32 %v521, %v523
  %527 = xla_tuple %v526
  %s528 = scalar_lea.vmem %s2, 416
  %529 = vst [vmem:[%s528] sm:$0xff] %v526
  %s530 = scalar_lea.vmem %s0, 424
  %v531 = vld [vmem:[%s530] sm:$0xff]
  %s532 = scalar_lea.vmem %s1, 424
  %v533 = vld [vmem:[%s532] sm:$0xff]
  %534 = xla_tuple %v531, %v533
  %535 = xla_tuple %534
  %v536 = vmul.f32 %v531, %v533
  %537 = xla_tuple %v536
  %s538 = scalar_lea.vmem %s2, 424
  %539 = vst [vmem:[%s538] sm:$0xff] %v536
  %s540 = scalar_lea.vmem %s0, 432
  %v541 = vld [vmem:[%s540] sm:$0xff]
  %s542 = scalar_lea.vmem %s1, 432
  %v543 = vld [vmem:[%s542] sm:$0xff]
  %544 = xla_tuple %v541, %v543
  %545 = xla_tuple %544
  %v546 = vmul.f32 %v541, %v543
  %547 = xla_tuple %v546
  %s548 = scalar_lea.vmem %s2, 432
  %549 = vst [vmem:[%s548] sm:$0xff] %v546
  %s550 = scalar_lea.vmem %s0, 440
  %v551 = vld [vmem:[%s550] sm:$0xff]
  %s552 = scalar_lea.vmem %s1, 440
  %v553 = vld [vmem:[%s552] sm:$0xff]
  %554 = xla_tuple %v551, %v553
  %555 = xla_tuple %554
  %v556 = vmul.f32 %v551, %v553
  %557 = xla_tuple %v556
  %s558 = scalar_lea.vmem %s2, 440
  %559 = vst [vmem:[%s558] sm:$0xff] %v556
  %s560 = scalar_lea.vmem %s0, 448
  %v561 = vld [vmem:[%s560] sm:$0xff]
  %s562 = scalar_lea.vmem %s1, 448
  %v563 = vld [vmem:[%s562] sm:$0xff]
  %564 = xla_tuple %v561, %v563
  %565 = xla_tuple %564
  %v566 = vmul.f32 %v561, %v563
  %567 = xla_tuple %v566
  %s568 = scalar_lea.vmem %s2, 448
  %569 = vst [vmem:[%s568] sm:$0xff] %v566
  %s570 = scalar_lea.vmem %s0, 456
  %v571 = vld [vmem:[%s570] sm:$0xff]
  %s572 = scalar_lea.vmem %s1, 456
  %v573 = vld [vmem:[%s572] sm:$0xff]
  %574 = xla_tuple %v571, %v573
  %575 = xla_tuple %574
  %v576 = vmul.f32 %v571, %v573
  %577 = xla_tuple %v576
  %s578 = scalar_lea.vmem %s2, 456
  %579 = vst [vmem:[%s578] sm:$0xff] %v576
  %s580 = scalar_lea.vmem %s0, 464
  %v581 = vld [vmem:[%s580] sm:$0xff]
  %s582 = scalar_lea.vmem %s1, 464
  %v583 = vld [vmem:[%s582] sm:$0xff]
  %584 = xla_tuple %v581, %v583
  %585 = xla_tuple %584
  %v586 = vmul.f32 %v581, %v583
  %587 = xla_tuple %v586
  %s588 = scalar_lea.vmem %s2, 464
  %589 = vst [vmem:[%s588] sm:$0xff] %v586
  %s590 = scalar_lea.vmem %s0, 472
  %v591 = vld [vmem:[%s590] sm:$0xff]
  %s592 = scalar_lea.vmem %s1, 472
  %v593 = vld [vmem:[%s592] sm:$0xff]
  %594 = xla_tuple %v591, %v593
  %595 = xla_tuple %594
  %v596 = vmul.f32 %v591, %v593
  %597 = xla_tuple %v596
  %s598 = scalar_lea.vmem %s2, 472
  %599 = vst [vmem:[%s598] sm:$0xff] %v596
  %s600 = scalar_lea.vmem %s0, 480
  %v601 = vld [vmem:[%s600] sm:$0xff]
  %s602 = scalar_lea.vmem %s1, 480
  %v603 = vld [vmem:[%s602] sm:$0xff]
  %604 = xla_tuple %v601, %v603
  %605 = xla_tuple %604
  %v606 = vmul.f32 %v601, %v603
  %607 = xla_tuple %v606
  %s608 = scalar_lea.vmem %s2, 480
  %609 = vst [vmem:[%s608] sm:$0xff] %v606
  %s610 = scalar_lea.vmem %s0, 488
  %v611 = vld [vmem:[%s610] sm:$0xff]
  %s612 = scalar_lea.vmem %s1, 488
  %v613 = vld [vmem:[%s612] sm:$0xff]
  %614 = xla_tuple %v611, %v613
  %615 = xla_tuple %614
  %v616 = vmul.f32 %v611, %v613
  %617 = xla_tuple %v616
  %s618 = scalar_lea.vmem %s2, 488
  %619 = vst [vmem:[%s618] sm:$0xff] %v616
  %s620 = scalar_lea.vmem %s0, 496
  %v621 = vld [vmem:[%s620] sm:$0xff]
  %s622 = scalar_lea.vmem %s1, 496
  %v623 = vld [vmem:[%s622] sm:$0xff]
  %624 = xla_tuple %v621, %v623
  %625 = xla_tuple %624
  %v626 = vmul.f32 %v621, %v623
  %627 = xla_tuple %v626
  %s628 = scalar_lea.vmem %s2, 496
  %629 = vst [vmem:[%s628] sm:$0xff] %v626
  %s630 = scalar_lea.vmem %s0, 504
  %v631 = vld [vmem:[%s630] sm:$0xff]
  %s632 = scalar_lea.vmem %s1, 504
  %v633 = vld [vmem:[%s632] sm:$0xff]
  %634 = xla_tuple %v631, %v633
  %635 = xla_tuple %634
  %v636 = vmul.f32 %v631, %v633
  %637 = xla_tuple %v636
  %s638 = scalar_lea.vmem %s2, 504
  %639 = vst [vmem:[%s638] sm:$0xff] %v636
  %s640 = scalar_lea.vmem %s0, 512
  %v641 = vld [vmem:[%s640] sm:$0xff]
  %s642 = scalar_lea.vmem %s1, 512
  %v643 = vld [vmem:[%s642] sm:$0xff]
  %644 = xla_tuple %v641, %v643
  %645 = xla_tuple %644
  %v646 = vmul.f32 %v641, %v643
  %647 = xla_tuple %v646
  %s648 = scalar_lea.vmem %s2, 512
  %649 = vst [vmem:[%s648] sm:$0xff] %v646
  %s650 = scalar_lea.vmem %s0, 520
  %v651 = vld [vmem:[%s650] sm:$0xff]
  %s652 = scalar_lea.vmem %s1, 520
  %v653 = vld [vmem:[%s652] sm:$0xff]
  %654 = xla_tuple %v651, %v653
  %655 = xla_tuple %654
  %v656 = vmul.f32 %v651, %v653
  %657 = xla_tuple %v656
  %s658 = scalar_lea.vmem %s2, 520
  %659 = vst [vmem:[%s658] sm:$0xff] %v656
  %s660 = scalar_lea.vmem %s0, 528
  %v661 = vld [vmem:[%s660] sm:$0xff]
  %s662 = scalar_lea.vmem %s1, 528
  %v663 = vld [vmem:[%s662] sm:$0xff]
  %664 = xla_tuple %v661, %v663
  %665 = xla_tuple %664
  %v666 = vmul.f32 %v661, %v663
  %667 = xla_tuple %v666
  %s668 = scalar_lea.vmem %s2, 528
  %669 = vst [vmem:[%s668] sm:$0xff] %v666
  %s670 = scalar_lea.vmem %s0, 536
  %v671 = vld [vmem:[%s670] sm:$0xff]
  %s672 = scalar_lea.vmem %s1, 536
  %v673 = vld [vmem:[%s672] sm:$0xff]
  %674 = xla_tuple %v671, %v673
  %675 = xla_tuple %674
  %v676 = vmul.f32 %v671, %v673
  %677 = xla_tuple %v676
  %s678 = scalar_lea.vmem %s2, 536
  %679 = vst [vmem:[%s678] sm:$0xff] %v676
  %s680 = scalar_lea.vmem %s0, 544
  %v681 = vld [vmem:[%s680] sm:$0xff]
  %s682 = scalar_lea.vmem %s1, 544
  %v683 = vld [vmem:[%s682] sm:$0xff]
  %684 = xla_tuple %v681, %v683
  %685 = xla_tuple %684
  %v686 = vmul.f32 %v681, %v683
  %687 = xla_tuple %v686
  %s688 = scalar_lea.vmem %s2, 544
  %689 = vst [vmem:[%s688] sm:$0xff] %v686
  %s690 = scalar_lea.vmem %s0, 552
  %v691 = vld [vmem:[%s690] sm:$0xff]
  %s692 = scalar_lea.vmem %s1, 552
  %v693 = vld [vmem:[%s692] sm:$0xff]
  %694 = xla_tuple %v691, %v693
  %695 = xla_tuple %694
  %v696 = vmul.f32 %v691, %v693
  %697 = xla_tuple %v696
  %s698 = scalar_lea.vmem %s2, 552
  %699 = vst [vmem:[%s698] sm:$0xff] %v696
  %s700 = scalar_lea.vmem %s0, 560
  %v701 = vld [vmem:[%s700] sm:$0xff]
  %s702 = scalar_lea.vmem %s1, 560
  %v703 = vld [vmem:[%s702] sm:$0xff]
  %704 = xla_tuple %v701, %v703
  %705 = xla_tuple %704
  %v706 = vmul.f32 %v701, %v703
  %707 = xla_tuple %v706
  %s708 = scalar_lea.vmem %s2, 560
  %709 = vst [vmem:[%s708] sm:$0xff] %v706
  %s710 = scalar_lea.vmem %s0, 568
  %v711 = vld [vmem:[%s710] sm:$0xff]
  %s712 = scalar_lea.vmem %s1, 568
  %v713 = vld [vmem:[%s712] sm:$0xff]
  %714 = xla_tuple %v711, %v713
  %715 = xla_tuple %714
  %v716 = vmul.f32 %v711, %v713
  %717 = xla_tuple %v716
  %s718 = scalar_lea.vmem %s2, 568
  %719 = vst [vmem:[%s718] sm:$0xff] %v716
  %s720 = scalar_lea.vmem %s0, 576
  %v721 = vld [vmem:[%s720] sm:$0xff]
  %s722 = scalar_lea.vmem %s1, 576
  %v723 = vld [vmem:[%s722] sm:$0xff]
  %724 = xla_tuple %v721, %v723
  %725 = xla_tuple %724
  %v726 = vmul.f32 %v721, %v723
  %727 = xla_tuple %v726
  %s728 = scalar_lea.vmem %s2, 576
  %729 = vst [vmem:[%s728] sm:$0xff] %v726
  %s730 = scalar_lea.vmem %s0, 584
  %v731 = vld [vmem:[%s730] sm:$0xff]
  %s732 = scalar_lea.vmem %s1, 584
  %v733 = vld [vmem:[%s732] sm:$0xff]
  %734 = xla_tuple %v731, %v733
  %735 = xla_tuple %734
  %v736 = vmul.f32 %v731, %v733
  %737 = xla_tuple %v736
  %s738 = scalar_lea.vmem %s2, 584
  %739 = vst [vmem:[%s738] sm:$0xff] %v736
  %s740 = scalar_lea.vmem %s0, 592
  %v741 = vld [vmem:[%s740] sm:$0xff]
  %s742 = scalar_lea.vmem %s1, 592
  %v743 = vld [vmem:[%s742] sm:$0xff]
  %744 = xla_tuple %v741, %v743
  %745 = xla_tuple %744
  %v746 = vmul.f32 %v741, %v743
  %747 = xla_tuple %v746
  %s748 = scalar_lea.vmem %s2, 592
  %749 = vst [vmem:[%s748] sm:$0xff] %v746
  %s750 = scalar_lea.vmem %s0, 600
  %v751 = vld [vmem:[%s750] sm:$0xff]
  %s752 = scalar_lea.vmem %s1, 600
  %v753 = vld [vmem:[%s752] sm:$0xff]
  %754 = xla_tuple %v751, %v753
  %755 = xla_tuple %754
  %v756 = vmul.f32 %v751, %v753
  %757 = xla_tuple %v756
  %s758 = scalar_lea.vmem %s2, 600
  %759 = vst [vmem:[%s758] sm:$0xff] %v756
  %s760 = scalar_lea.vmem %s0, 608
  %v761 = vld [vmem:[%s760] sm:$0xff]
  %s762 = scalar_lea.vmem %s1, 608
  %v763 = vld [vmem:[%s762] sm:$0xff]
  %764 = xla_tuple %v761, %v763
  %765 = xla_tuple %764
  %v766 = vmul.f32 %v761, %v763
  %767 = xla_tuple %v766
  %s768 = scalar_lea.vmem %s2, 608
  %769 = vst [vmem:[%s768] sm:$0xff] %v766
  %s770 = scalar_lea.vmem %s0, 616
  %v771 = vld [vmem:[%s770] sm:$0xff]
  %s772 = scalar_lea.vmem %s1, 616
  %v773 = vld [vmem:[%s772] sm:$0xff]
  %774 = xla_tuple %v771, %v773
  %775 = xla_tuple %774
  %v776 = vmul.f32 %v771, %v773
  %777 = xla_tuple %v776
  %s778 = scalar_lea.vmem %s2, 616
  %779 = vst [vmem:[%s778] sm:$0xff] %v776
  %s780 = scalar_lea.vmem %s0, 624
  %v781 = vld [vmem:[%s780] sm:$0xff]
  %s782 = scalar_lea.vmem %s1, 624
  %v783 = vld [vmem:[%s782] sm:$0xff]
  %784 = xla_tuple %v781, %v783
  %785 = xla_tuple %784
  %v786 = vmul.f32 %v781, %v783
  %787 = xla_tuple %v786
  %s788 = scalar_lea.vmem %s2, 624
  %789 = vst [vmem:[%s788] sm:$0xff] %v786
  %s790 = scalar_lea.vmem %s0, 632
  %v791 = vld [vmem:[%s790] sm:$0xff]
  %s792 = scalar_lea.vmem %s1, 632
  %v793 = vld [vmem:[%s792] sm:$0xff]
  %794 = xla_tuple %v791, %v793
  %795 = xla_tuple %794
  %v796 = vmul.f32 %v791, %v793
  %797 = xla_tuple %v796
  %s798 = scalar_lea.vmem %s2, 632
  %799 = vst [vmem:[%s798] sm:$0xff] %v796
  %s800 = scalar_lea.vmem %s0, 640
  %v801 = vld [vmem:[%s800] sm:$0xff]
  %s802 = scalar_lea.vmem %s1, 640
  %v803 = vld [vmem:[%s802] sm:$0xff]
  %804 = xla_tuple %v801, %v803
  %805 = xla_tuple %804
  %v806 = vmul.f32 %v801, %v803
  %807 = xla_tuple %v806
  %s808 = scalar_lea.vmem %s2, 640
  %809 = vst [vmem:[%s808] sm:$0xff] %v806
  %s810 = scalar_lea.vmem %s0, 648
  %v811 = vld [vmem:[%s810] sm:$0xff]
  %s812 = scalar_lea.vmem %s1, 648
  %v813 = vld [vmem:[%s812] sm:$0xff]
  %814 = xla_tuple %v811, %v813
  %815 = xla_tuple %814
  %v816 = vmul.f32 %v811, %v813
  %817 = xla_tuple %v816
  %s818 = scalar_lea.vmem %s2, 648
  %819 = vst [vmem:[%s818] sm:$0xff] %v816
  %s820 = scalar_lea.vmem %s0, 656
  %v821 = vld [vmem:[%s820] sm:$0xff]
  %s822 = scalar_lea.vmem %s1, 656
  %v823 = vld [vmem:[%s822] sm:$0xff]
  %824 = xla_tuple %v821, %v823
  %825 = xla_tuple %824
  %v826 = vmul.f32 %v821, %v823
  %827 = xla_tuple %v826
  %s828 = scalar_lea.vmem %s2, 656
  %829 = vst [vmem:[%s828] sm:$0xff] %v826
  %s830 = scalar_lea.vmem %s0, 664
  %v831 = vld [vmem:[%s830] sm:$0xff]
  %s832 = scalar_lea.vmem %s1, 664
  %v833 = vld [vmem:[%s832] sm:$0xff]
  %834 = xla_tuple %v831, %v833
  %835 = xla_tuple %834
  %v836 = vmul.f32 %v831, %v833
  %837 = xla_tuple %v836
  %s838 = scalar_lea.vmem %s2, 664
  %839 = vst [vmem:[%s838] sm:$0xff] %v836
  %s840 = scalar_lea.vmem %s0, 672
  %v841 = vld [vmem:[%s840] sm:$0xff]
  %s842 = scalar_lea.vmem %s1, 672
  %v843 = vld [vmem:[%s842] sm:$0xff]
  %844 = xla_tuple %v841, %v843
  %845 = xla_tuple %844
  %v846 = vmul.f32 %v841, %v843
  %847 = xla_tuple %v846
  %s848 = scalar_lea.vmem %s2, 672
  %849 = vst [vmem:[%s848] sm:$0xff] %v846
  %s850 = scalar_lea.vmem %s0, 680
  %v851 = vld [vmem:[%s850] sm:$0xff]
  %s852 = scalar_lea.vmem %s1, 680
  %v853 = vld [vmem:[%s852] sm:$0xff]
  %854 = xla_tuple %v851, %v853
  %855 = xla_tuple %854
  %v856 = vmul.f32 %v851, %v853
  %857 = xla_tuple %v856
  %s858 = scalar_lea.vmem %s2, 680
  %859 = vst [vmem:[%s858] sm:$0xff] %v856
  %s860 = scalar_lea.vmem %s0, 688
  %v861 = vld [vmem:[%s860] sm:$0xff]
  %s862 = scalar_lea.vmem %s1, 688
  %v863 = vld [vmem:[%s862] sm:$0xff]
  %864 = xla_tuple %v861, %v863
  %865 = xla_tuple %864
  %v866 = vmul.f32 %v861, %v863
  %867 = xla_tuple %v866
  %s868 = scalar_lea.vmem %s2, 688
  %869 = vst [vmem:[%s868] sm:$0xff] %v866
  %s870 = scalar_lea.vmem %s0, 696
  %v871 = vld [vmem:[%s870] sm:$0xff]
  %s872 = scalar_lea.vmem %s1, 696
  %v873 = vld [vmem:[%s872] sm:$0xff]
  %874 = xla_tuple %v871, %v873
  %875 = xla_tuple %874
  %v876 = vmul.f32 %v871, %v873
  %877 = xla_tuple %v876
  %s878 = scalar_lea.vmem %s2, 696
  %879 = vst [vmem:[%s878] sm:$0xff] %v876
  %s880 = scalar_lea.vmem %s0, 704
  %v881 = vld [vmem:[%s880] sm:$0xff]
  %s882 = scalar_lea.vmem %s1, 704
  %v883 = vld [vmem:[%s882] sm:$0xff]
  %884 = xla_tuple %v881, %v883
  %885 = xla_tuple %884
  %v886 = vmul.f32 %v881, %v883
  %887 = xla_tuple %v886
  %s888 = scalar_lea.vmem %s2, 704
  %889 = vst [vmem:[%s888] sm:$0xff] %v886
  %s890 = scalar_lea.vmem %s0, 712
  %v891 = vld [vmem:[%s890] sm:$0xff]
  %s892 = scalar_lea.vmem %s1, 712
  %v893 = vld [vmem:[%s892] sm:$0xff]
  %894 = xla_tuple %v891, %v893
  %895 = xla_tuple %894
  %v896 = vmul.f32 %v891, %v893
  %897 = xla_tuple %v896
  %s898 = scalar_lea.vmem %s2, 712
  %899 = vst [vmem:[%s898] sm:$0xff] %v896
  %s900 = scalar_lea.vmem %s0, 720
  %v901 = vld [vmem:[%s900] sm:$0xff]
  %s902 = scalar_lea.vmem %s1, 720
  %v903 = vld [vmem:[%s902] sm:$0xff]
  %904 = xla_tuple %v901, %v903
  %905 = xla_tuple %904
  %v906 = vmul.f32 %v901, %v903
  %907 = xla_tuple %v906
  %s908 = scalar_lea.vmem %s2, 720
  %909 = vst [vmem:[%s908] sm:$0xff] %v906
  %s910 = scalar_lea.vmem %s0, 728
  %v911 = vld [vmem:[%s910] sm:$0xff]
  %s912 = scalar_lea.vmem %s1, 728
  %v913 = vld [vmem:[%s912] sm:$0xff]
  %914 = xla_tuple %v911, %v913
  %915 = xla_tuple %914
  %v916 = vmul.f32 %v911, %v913
  %917 = xla_tuple %v916
  %s918 = scalar_lea.vmem %s2, 728
  %919 = vst [vmem:[%s918] sm:$0xff] %v916
  %s920 = scalar_lea.vmem %s0, 736
  %v921 = vld [vmem:[%s920] sm:$0xff]
  %s922 = scalar_lea.vmem %s1, 736
  %v923 = vld [vmem:[%s922] sm:$0xff]
  %924 = xla_tuple %v921, %v923
  %925 = xla_tuple %924
  %v926 = vmul.f32 %v921, %v923
  %927 = xla_tuple %v926
  %s928 = scalar_lea.vmem %s2, 736
  %929 = vst [vmem:[%s928] sm:$0xff] %v926
  %s930 = scalar_lea.vmem %s0, 744
  %v931 = vld [vmem:[%s930] sm:$0xff]
  %s932 = scalar_lea.vmem %s1, 744
  %v933 = vld [vmem:[%s932] sm:$0xff]
  %934 = xla_tuple %v931, %v933
  %935 = xla_tuple %934
  %v936 = vmul.f32 %v931, %v933
  %937 = xla_tuple %v936
  %s938 = scalar_lea.vmem %s2, 744
  %939 = vst [vmem:[%s938] sm:$0xff] %v936

// kernel: mul.0
$region0: #{mul.0}
  #allocation0 [shape = 's32[1]{0}', space=sflag, size = 0x4, scoped, tag = 'scoped memory for mul.0']
  %s0 = inlined_call_operand.vmem [shape: f32[33600], index: 0, kind: input, shape index: {}]
  %s1 = inlined_call_operand.vmem [shape: f32[33600], index: 1, kind: input, shape index: {}]
  %s2 = inlined_call_operand.vmem [shape: f32[33600], index: 2, kind: output, shape index: {}]
  %v3 = vld [vmem:[%s0] sm:$0xff]
  %v4 = vld [vmem:[%s1] sm:$0xff]
  %5 = xla_tuple %v3, %v4
  %6 = xla_tuple %5
  %v7 = vmul.f32 %v3, %v4
  %8 = xla_tuple %v7
  %9 = vst [vmem:[%s2] sm:$0xff] %v7
  %s10 = scalar_lea.vmem %s0, 8
  %v11 = vld [vmem:[%s10] sm:$0xff]
  %s12 = scalar_lea.vmem %s1, 8
  %v13 = vld [vmem:[%s12] sm:$0xff]
  %14 = xla_tuple %v11, %v13
  %15 = xla_tuple %14
  %v16 = vmul.f32 %v11, %v13
  %17 = xla_tuple %v16
  %s18 = scalar_lea.vmem %s2, 8
  %19 = vst [vmem:[%s18] sm:$0xff] %v16
  %s20 = scalar_lea.vmem %s0, 16
  %v21 = vld [vmem:[%s20] sm:$0xff]
  %s22 = scalar_lea.vmem %s1, 16
  %v23 = vld [vmem:[%s22] sm:$0xff]
  %24 = xla_tuple %v21, %v23
  %25 = xla_tuple %24
  %v26 = vmul.f32 %v21, %v23
  %27 = xla_tuple %v26
  %s28 = scalar_lea.vmem %s2, 16
  %29 = vst [vmem:[%s28] sm:$0xff] %v26
  %s30 = scalar_lea.vmem %s0, 24
  %v31 = vld [vmem:[%s30] sm:$0xff]
  %s32 = scalar_lea.vmem %s1, 24
  %v33 = vld [vmem:[%s32] sm:$0xff]
  %34 = xla_tuple %v31, %v33
  %35 = xla_tuple %34
  %v36 = vmul.f32 %v31, %v33
  %37 = xla_tuple %v36
  %s38 = scalar_lea.vmem %s2, 24
  %39 = vst [vmem:[%s38] sm:$0xff] %v36
  %s40 = scalar_lea.vmem %s0, 32
  %v41 = vld [vmem:[%s40] sm:$0xff]
  %s42 = scalar_lea.vmem %s1, 32
  %v43 = vld [vmem:[%s42] sm:$0xff]
  %44 = xla_tuple %v41, %v43
  %45 = xla_tuple %44
  %v46 = vmul.f32 %v41, %v43
  %47 = xla_tuple %v46
  %s48 = scalar_lea.vmem %s2, 32
  %49 = vst [vmem:[%s48] sm:$0xff] %v46
  %s50 = scalar_lea.vmem %s0, 40
  %v51 = vld [vmem:[%s50] sm:$0xff]
  %s52 = scalar_lea.vmem %s1, 40
  %v53 = vld [vmem:[%s52] sm:$0xff]
  %54 = xla_tuple %v51, %v53
  %55 = xla_tuple %54
  %v56 = vmul.f32 %v51, %v53
  %57 = xla_tuple %v56
  %s58 = scalar_lea.vmem %s2, 40
  %59 = vst [vmem:[%s58] sm:$0xff] %v56
  %s60 = scalar_lea.vmem %s0, 48
  %v61 = vld [vmem:[%s60] sm:$0xff]
  %s62 = scalar_lea.vmem %s1, 48
  %v63 = vld [vmem:[%s62] sm:$0xff]
  %64 = xla_tuple %v61, %v63
  %65 = xla_tuple %64
  %v66 = vmul.f32 %v61, %v63
  %67 = xla_tuple %v66
  %s68 = scalar_lea.vmem %s2, 48
  %69 = vst [vmem:[%s68] sm:$0xff] %v66
  %s70 = scalar_lea.vmem %s0, 56
  %v71 = vld [vmem:[%s70] sm:$0xff]
  %s72 = scalar_lea.vmem %s1, 56
  %v73 = vld [vmem:[%s72] sm:$0xff]
  %74 = xla_tuple %v71, %v73
  %75 = xla_tuple %74
  %v76 = vmul.f32 %v71, %v73
  %77 = xla_tuple %v76
  %s78 = scalar_lea.vmem %s2, 56
  %79 = vst [vmem:[%s78] sm:$0xff] %v76
  %s80 = scalar_lea.vmem %s0, 64
  %v81 = vld [vmem:[%s80] sm:$0xff]
  %s82 = scalar_lea.vmem %s1, 64
  %v83 = vld [vmem:[%s82] sm:$0xff]
  %84 = xla_tuple %v81, %v83
  %85 = xla_tuple %84
  %v86 = vmul.f32 %v81, %v83
  %87 = xla_tuple %v86
  %s88 = scalar_lea.vmem %s2, 64
  %89 = vst [vmem:[%s88] sm:$0xff] %v86
  %s90 = scalar_lea.vmem %s0, 72
  %v91 = vld [vmem:[%s90] sm:$0xff]
  %s92 = scalar_lea.vmem %s1, 72
  %v93 = vld [vmem:[%s92] sm:$0xff]
  %94 = xla_tuple %v91, %v93
  %95 = xla_tuple %94
  %v96 = vmul.f32 %v91, %v93
  %97 = xla_tuple %v96
  %s98 = scalar_lea.vmem %s2, 72
  %99 = vst [vmem:[%s98] sm:$0xff] %v96
  %s100 = scalar_lea.vmem %s0, 80
  %v101 = vld [vmem:[%s100] sm:$0xff]
  %s102 = scalar_lea.vmem %s1, 80
  %v103 = vld [vmem:[%s102] sm:$0xff]
  %104 = xla_tuple %v101, %v103
  %105 = xla_tuple %104
  %v106 = vmul.f32 %v101, %v103
  %107 = xla_tuple %v106
  %s108 = scalar_lea.vmem %s2, 80
  %109 = vst [vmem:[%s108] sm:$0xff] %v106
  %s110 = scalar_lea.vmem %s0, 88
  %v111 = vld [vmem:[%s110] sm:$0xff]
  %s112 = scalar_lea.vmem %s1, 88
  %v113 = vld [vmem:[%s112] sm:$0xff]
  %114 = xla_tuple %v111, %v113
  %115 = xla_tuple %114
  %v116 = vmul.f32 %v111, %v113
  %117 = xla_tuple %v116
  %s118 = scalar_lea.vmem %s2, 88
  %119 = vst [vmem:[%s118] sm:$0xff] %v116
  %s120 = scalar_lea.vmem %s0, 96
  %v121 = vld [vmem:[%s120] sm:$0xff]
  %s122 = scalar_lea.vmem %s1, 96
  %v123 = vld [vmem:[%s122] sm:$0xff]
  %124 = xla_tuple %v121, %v123
  %125 = xla_tuple %124
  %v126 = vmul.f32 %v121, %v123
  %127 = xla_tuple %v126
  %s128 = scalar_lea.vmem %s2, 96
  %129 = vst [vmem:[%s128] sm:$0xff] %v126
  %s130 = scalar_lea.vmem %s0, 104
  %v131 = vld [vmem:[%s130] sm:$0xff]
  %s132 = scalar_lea.vmem %s1, 104
  %v133 = vld [vmem:[%s132] sm:$0xff]
  %134 = xla_tuple %v131, %v133
  %135 = xla_tuple %134
  %v136 = vmul.f32 %v131, %v133
  %137 = xla_tuple %v136
  %s138 = scalar_lea.vmem %s2, 104
  %139 = vst [vmem:[%s138] sm:$0xff] %v136
  %s140 = scalar_lea.vmem %s0, 112
  %v141 = vld [vmem:[%s140] sm:$0xff]
  %s142 = scalar_lea.vmem %s1, 112
  %v143 = vld [vmem:[%s142] sm:$0xff]
  %144 = xla_tuple %v141, %v143
  %145 = xla_tuple %144
  %v146 = vmul.f32 %v141, %v143
  %147 = xla_tuple %v146
  %s148 = scalar_lea.vmem %s2, 112
  %149 = vst [vmem:[%s148] sm:$0xff] %v146
  %s150 = scalar_lea.vmem %s0, 120
  %v151 = vld [vmem:[%s150] sm:$0xff]
  %s152 = scalar_lea.vmem %s1, 120
  %v153 = vld [vmem:[%s152] sm:$0xff]
  %154 = xla_tuple %v151, %v153
  %155 = xla_tuple %154
  %v156 = vmul.f32 %v151, %v153
  %157 = xla_tuple %v156
  %s158 = scalar_lea.vmem %s2, 120
  %159 = vst [vmem:[%s158] sm:$0xff] %v156
  %s160 = scalar_lea.vmem %s0, 128
  %v161 = vld [vmem:[%s160] sm:$0xff]
  %s162 = scalar_lea.vmem %s1, 128
  %v163 = vld [vmem:[%s162] sm:$0xff]
  %164 = xla_tuple %v161, %v163
  %165 = xla_tuple %164
  %v166 = vmul.f32 %v161, %v163
  %167 = xla_tuple %v166
  %s168 = scalar_lea.vmem %s2, 128
  %169 = vst [vmem:[%s168] sm:$0xff] %v166
  %s170 = scalar_lea.vmem %s0, 136
  %v171 = vld [vmem:[%s170] sm:$0xff]
  %s172 = scalar_lea.vmem %s1, 136
  %v173 = vld [vmem:[%s172] sm:$0xff]
  %174 = xla_tuple %v171, %v173
  %175 = xla_tuple %174
  %v176 = vmul.f32 %v171, %v173
  %177 = xla_tuple %v176
  %s178 = scalar_lea.vmem %s2, 136
  %179 = vst [vmem:[%s178] sm:$0xff] %v176
  %s180 = scalar_lea.vmem %s0, 144
  %v181 = vld [vmem:[%s180] sm:$0xff]
  %s182 = scalar_lea.vmem %s1, 144
  %v183 = vld [vmem:[%s182] sm:$0xff]
  %184 = xla_tuple %v181, %v183
  %185 = xla_tuple %184
  %v186 = vmul.f32 %v181, %v183
  %187 = xla_tuple %v186
  %s188 = scalar_lea.vmem %s2, 144
  %189 = vst [vmem:[%s188] sm:$0xff] %v186
  %s190 = scalar_lea.vmem %s0, 152
  %v191 = vld [vmem:[%s190] sm:$0xff]
  %s192 = scalar_lea.vmem %s1, 152
  %v193 = vld [vmem:[%s192] sm:$0xff]
  %194 = xla_tuple %v191, %v193
  %195 = xla_tuple %194
  %v196 = vmul.f32 %v191, %v193
  %197 = xla_tuple %v196
  %s198 = scalar_lea.vmem %s2, 152
  %199 = vst [vmem:[%s198] sm:$0xff] %v196
  %s200 = scalar_lea.vmem %s0, 160
  %v201 = vld [vmem:[%s200] sm:$0xff]
  %s202 = scalar_lea.vmem %s1, 160
  %v203 = vld [vmem:[%s202] sm:$0xff]
  %204 = xla_tuple %v201, %v203
  %205 = xla_tuple %204
  %v206 = vmul.f32 %v201, %v203
  %207 = xla_tuple %v206
  %s208 = scalar_lea.vmem %s2, 160
  %209 = vst [vmem:[%s208] sm:$0xff] %v206
  %s210 = scalar_lea.vmem %s0, 168
  %v211 = vld [vmem:[%s210] sm:$0xff]
  %s212 = scalar_lea.vmem %s1, 168
  %v213 = vld [vmem:[%s212] sm:$0xff]
  %214 = xla_tuple %v211, %v213
  %215 = xla_tuple %214
  %v216 = vmul.f32 %v211, %v213
  %217 = xla_tuple %v216
  %s218 = scalar_lea.vmem %s2, 168
  %219 = vst [vmem:[%s218] sm:$0xff] %v216
  %s220 = scalar_lea.vmem %s0, 176
  %v221 = vld [vmem:[%s220] sm:$0xff]
  %s222 = scalar_lea.vmem %s1, 176
  %v223 = vld [vmem:[%s222] sm:$0xff]
  %224 = xla_tuple %v221, %v223
  %225 = xla_tuple %224
  %v226 = vmul.f32 %v221, %v223
  %227 = xla_tuple %v226
  %s228 = scalar_lea.vmem %s2, 176
  %229 = vst [vmem:[%s228] sm:$0xff] %v226
  %s230 = scalar_lea.vmem %s0, 184
  %v231 = vld [vmem:[%s230] sm:$0xff]
  %s232 = scalar_lea.vmem %s1, 184
  %v233 = vld [vmem:[%s232] sm:$0xff]
  %234 = xla_tuple %v231, %v233
  %235 = xla_tuple %234
  %v236 = vmul.f32 %v231, %v233
  %237 = xla_tuple %v236
  %s238 = scalar_lea.vmem %s2, 184
  %239 = vst [vmem:[%s238] sm:$0xff] %v236
  %s240 = scalar_lea.vmem %s0, 192
  %v241 = vld [vmem:[%s240] sm:$0xff]
  %s242 = scalar_lea.vmem %s1, 192
  %v243 = vld [vmem:[%s242] sm:$0xff]
  %244 = xla_tuple %v241, %v243
  %245 = xla_tuple %244
  %v246 = vmul.f32 %v241, %v243
  %247 = xla_tuple %v246
  %s248 = scalar_lea.vmem %s2, 192
  %249 = vst [vmem:[%s248] sm:$0xff] %v246
  %s250 = scalar_lea.vmem %s0, 200
  %v251 = vld [vmem:[%s250] sm:$0xff]
  %s252 = scalar_lea.vmem %s1, 200
  %v253 = vld [vmem:[%s252] sm:$0xff]
  %254 = xla_tuple %v251, %v253
  %255 = xla_tuple %254
  %v256 = vmul.f32 %v251, %v253
  %257 = xla_tuple %v256
  %s258 = scalar_lea.vmem %s2, 200
  %259 = vst [vmem:[%s258] sm:$0xff] %v256
  %s260 = scalar_lea.vmem %s0, 208
  %v261 = vld [vmem:[%s260] sm:$0xff]
  %s262 = scalar_lea.vmem %s1, 208
  %v263 = vld [vmem:[%s262] sm:$0xff]
  %264 = xla_tuple %v261, %v263
  %265 = xla_tuple %264
  %v266 = vmul.f32 %v261, %v263
  %267 = xla_tuple %v266
  %s268 = scalar_lea.vmem %s2, 208
  %269 = vst [vmem:[%s268] sm:$0xff] %v266
  %s270 = scalar_lea.vmem %s0, 216
  %v271 = vld [vmem:[%s270] sm:$0xff]
  %s272 = scalar_lea.vmem %s1, 216
  %v273 = vld [vmem:[%s272] sm:$0xff]
  %274 = xla_tuple %v271, %v273
  %275 = xla_tuple %274
  %v276 = vmul.f32 %v271, %v273
  %277 = xla_tuple %v276
  %s278 = scalar_lea.vmem %s2, 216
  %279 = vst [vmem:[%s278] sm:$0xff] %v276
  %s280 = scalar_lea.vmem %s0, 224
  %v281 = vld [vmem:[%s280] sm:$0xff]
  %s282 = scalar_lea.vmem %s1, 224
  %v283 = vld [vmem:[%s282] sm:$0xff]
  %284 = xla_tuple %v281, %v283
  %285 = xla_tuple %284
  %v286 = vmul.f32 %v281, %v283
  %287 = xla_tuple %v286
  %s288 = scalar_lea.vmem %s2, 224
  %289 = vst [vmem:[%s288] sm:$0xff] %v286
  %s290 = scalar_lea.vmem %s0, 232
  %v291 = vld [vmem:[%s290] sm:$0xff]
  %s292 = scalar_lea.vmem %s1, 232
  %v293 = vld [vmem:[%s292] sm:$0xff]
  %294 = xla_tuple %v291, %v293
  %295 = xla_tuple %294
  %v296 = vmul.f32 %v291, %v293
  %297 = xla_tuple %v296
  %s298 = scalar_lea.vmem %s2, 232
  %299 = vst [vmem:[%s298] sm:$0xff] %v296
  %s300 = scalar_lea.vmem %s0, 240
  %v301 = vld [vmem:[%s300] sm:$0xff]
  %s302 = scalar_lea.vmem %s1, 240
  %v303 = vld [vmem:[%s302] sm:$0xff]
  %304 = xla_tuple %v301, %v303
  %305 = xla_tuple %304
  %v306 = vmul.f32 %v301, %v303
  %307 = xla_tuple %v306
  %s308 = scalar_lea.vmem %s2, 240
  %309 = vst [vmem:[%s308] sm:$0xff] %v306
  %s310 = scalar_lea.vmem %s0, 248
  %v311 = vld [vmem:[%s310] sm:$0xff]
  %s312 = scalar_lea.vmem %s1, 248
  %v313 = vld [vmem:[%s312] sm:$0xff]
  %314 = xla_tuple %v311, %v313
  %315 = xla_tuple %314
  %v316 = vmul.f32 %v311, %v313
  %317 = xla_tuple %v316
  %s318 = scalar_lea.vmem %s2, 248
  %319 = vst [vmem:[%s318] sm:$0xff] %v316
  %s320 = scalar_lea.vmem %s0, 256
  %v321 = vld [vmem:[%s320] sm:$0xff]
  %s322 = scalar_lea.vmem %s1, 256
  %v323 = vld [vmem:[%s322] sm:$0xff]
  %324 = xla_tuple %v321, %v323
  %325 = xla_tuple %324
  %v326 = vmul.f32 %v321, %v323
  %327 = xla_tuple %v326
  %s328 = scalar_lea.vmem %s2, 256
  %329 = vst [vmem:[%s328] sm:$0xff] %v326

// kernel: convnet_forward.1
$region0: #{convnet_forward.1}
  #allocation0 [shape = 'u32[]', space=smem, size = 0x4, offset = 0x4, fixed_abs, tag = 'smem constant byte address 0x4 - core index']
  #allocation1 [shape = 'u32[144,128]{1,0:T(1,128)}', space=vmem, size = 0x12000, scoped, tag = 'internal scratch']
  %s0 = inlined_call_operand.vmem [shape: f32[8,2,24,28], index: 0, kind: input, shape index: {}]
  %s1 = inlined_call_operand.vmem [shape: f32[5,28,240], index: 1, kind: input, shape index: {}]
  %s2 = inlined_call_operand.vmem [shape: f32[5,120,160], index: 2, kind: input, shape index: {}]
  %s3 = inlined_call_operand.hbm [shape: f32[8,160,12], index: 3, kind: input, shape index: {}]
  %s4 = inlined_call_operand.vmem [shape: f32[8,10], index: 4, kind: output, shape index: {0}]
  %s5 = inlined_call_operand.vmem [shape: f32[8,2], index: 5, kind: output, shape index: {1}]
  %6 = xla_tuple %s4, %s5
  %s7 = sld [smem:[#allocation0]]
  $region38: #{convnet_forward.1} parent=0
    _
  %s9 = ssub.s32 1, %s7
  %s10 = scalar_select 0, %s9, %s7
  $region1: #{convnet_forward.1} parent=0
    #allocation2 [shape = 'u8[655360]{0}', space=vmem, size = 0xa0000, scoped, tag = 'input window, operand 3, single buffered']
    #allocation3 [shape = 's32[1]{0}', space=sflag, size = 0x4, scoped, tag = 'scoped memory for convnet_forward.1']
    %11 = vsyncpa [#allocation3], 0
    // Predicated region
    $region2: #{convnet_forward.1} parent=1 // pred_check
      _
    $region3: #{convnet_forward.1} parent=1 // pred_check_branch
      %13 = sbr.rel (0) target = $region5
    $region4: #{convnet_forward.1} parent=1 // pred_region
      _
    $region5: #{convnet_forward.1} parent=1 // pred_fallthru
      _
    // Predicated region
    $region6: #{convnet_forward.1} parent=1 // pred_check
      _
    $region7: #{convnet_forward.1} parent=1 // pred_check_branch
      %15 = sbr.rel (0) target = $region9
    $region8: #{convnet_forward.1} parent=1 // pred_region
      _
    $region9: #{convnet_forward.1} parent=1 // pred_fallthru
      _
    // Predicated region
    $region10: #{convnet_forward.1} parent=1 // pred_check
      _
    $region11: #{convnet_forward.1} parent=1 // pred_check_branch
      %17 = sbr.rel (0) target = $region13
    $region12: #{convnet_forward.1} parent=1 // pred_region
      _
    $region13: #{convnet_forward.1} parent=1 // pred_fallthru
      _
    // Predicated region
    $region14: #{convnet_forward.1} parent=1 // pred_check
      _
    $region15: #{convnet_forward.1} parent=1 // pred_check_branch
      %19 = sbr.rel (0) target = $region17
    $region16: #{convnet_forward.1} parent=1 // pred_region
      %s21 = ssub.s32 20480, 20480
      %22 = vsyncadd [#allocation3], %s21
      %s23 = sshll.u32 [#allocation2], 4
      %s24 = int_to_ptr.vmem [resolvable:$true] %s23
      %29 = dma.hbm_to_vmem [thread:$0]  %s3, 20480, %s24, [#allocation3], 128, 128, 8
    $region17: #{convnet_forward.1} parent=1 // pred_fallthru
      _
    // Predicated region
    $region18: #{convnet_forward.1} parent=1 // pred_check
      _
    $region19: #{convnet_forward.1} parent=1 // pred_check_branch
      %31 = sbr.rel (0) target = $region21
    $region20: #{convnet_forward.1} parent=1 // pred_region
      %32 = dma.done [#allocation3], 20480
    $region21: #{convnet_forward.1} parent=1 // pred_fallthru
      _
    %v33 = vld [vmem:[%s0] sm:$0xff]
    %v34 = vld [vmem:[%s0 + $0x8] sm:$0xff]
    %v35 = vld [vmem:[%s0 + $0x10] sm:$0xff]
    %v36 = vld [vmem:[%s0 + $0x18] sm:$0xff]
    %v37 = vld [vmem:[%s0 + $0x20] sm:$0xff]
    %v38 = vld [vmem:[%s0 + $0x28] sm:$0xff]
    %v39 = vld [vmem:[%s0 + $0x30] sm:$0xff]
    %v40 = vld [vmem:[%s0 + $0x38] sm:$0xff]
    %v41 = vld [vmem:[%s0 + $0x40] sm:$0xff]
    %v42 = vld [vmem:[%s0 + $0x48] sm:$0xff]
    %v43 = vld [vmem:[%s0 + $0x50] sm:$0xff]
    %v44 = vld [vmem:[%s0 + $0x58] sm:$0xff]
    %v45 = vld [vmem:[%s0 + $0x60] sm:$0xff]
    %v46 = vld [vmem:[%s0 + $0x68] sm:$0xff]
    %v47 = vld [vmem:[%s0 + $0x70] sm:$0xff]
    %v48 = vld [vmem:[%s0 + $0x78] sm:$0xff]
    %v49 = vld [vmem:[%s0 + $0x80] sm:$0xff]
    %v50 = vld [vmem:[%s0 + $0x88] sm:$0xff]
    %v51 = vld [vmem:[%s0 + $0x90] sm:$0xff]
    %v52 = vld [vmem:[%s0 + $0x98] sm:$0xff]
    %v53 = vld [vmem:[%s0 + $0xa0] sm:$0xff]
    %v54 = vld [vmem:[%s0 + $0xa8] sm:$0xff]
    %v55 = vld [vmem:[%s0 + $0xb0] sm:$0xff]
    %v56 = vld [vmem:[%s0 + $0xb8] sm:$0xff]
    %v57 = vld [vmem:[%s0 + $0xc0] sm:$0xff]
    %v58 = vld [vmem:[%s0 + $0xc8] sm:$0xff]
    %v59 = vld [vmem:[%s0 + $0xd0] sm:$0xff]
    %v60 = vld [vmem:[%s0 + $0xd8] sm:$0xff]
    %v61 = vld [vmem:[%s0 + $0xe0] sm:$0xff]
    %v62 = vld [vmem:[%s0 + $0xe8] sm:$0xff]
    %v63 = vld [vmem:[%s0 + $0xf0] sm:$0xff]
    %v64 = vld [vmem:[%s0 + $0xf8] sm:$0xff]
    %v65 = vld [vmem:[%s0 + $0x100] sm:$0xff]
    %v66 = vld [vmem:[%s0 + $0x108] sm:$0xff]
    %v67 = vld [vmem:[%s0 + $0x110] sm:$0xff]
    %v68 = vld [vmem:[%s0 + $0x118] sm:$0xff]
    %v69 = vld [vmem:[%s0 + $0x120] sm:$0xff]
    %v70 = vld [vmem:[%s0 + $0x128] sm:$0xff]
    %v71 = vld [vmem:[%s0 + $0x130] sm:$0xff]
    %v72 = vld [vmem:[%s0 + $0x138] sm:$0xff]
    %v73 = vld [vmem:[%s0 + $0x140] sm:$0xff]
    %v74 = vld [vmem:[%s0 + $0x148] sm:$0xff]
    %v75 = vld [vmem:[%s0 + $0x150] sm:$0xff]
    %v76 = vld [vmem:[%s0 + $0x158] sm:$0xff]
    %v77 = vld [vmem:[%s0 + $0x160] sm:$0xff]
    %v78 = vld [vmem:[%s0 + $0x168] sm:$0xff]
    %v79 = vld [vmem:[%s0 + $0x170] sm:$0xff]
    %v80 = vld [vmem:[%s0 + $0x178] sm:$0xff]
    %v81 = vld [vmem:[%s1] sm:$0xff]
    %v82 = vld [vmem:[%s1 + $0x8] sm:$0xff]
    %v83 = vld [vmem:[%s1 + $0x10] sm:$0xff]
    %v84 = vld [vmem:[%s1 + $0x18] sm:$0xff]
    %v85 = vld [vmem:[%s1 + $0x20] sm:$0xff]
    %v86 = vld [vmem:[%s1 + $0x28] sm:$0xff]
    %v87 = vld [vmem:[%s1 + $0x30] sm:$0xf]
    %v88 = vld [vmem:[%s1 + $0x38] sm:$0xf]
    %s89 = scalar_lea.vmem %s1, 64
    %v90 = vld [vmem:[%s89] sm:$0xff]
    %v91 = vld [vmem:[%s89 + $0x8] sm:$0xff]
    %v92 = vld [vmem:[%s89 + $0x10] sm:$0xff]
    %v93 = vld [vmem:[%s89 + $0x18] sm:$0xff]
    %v94 = vld [vmem:[%s89 + $0x20] sm:$0xff]
    %v95 = vld [vmem:[%s89 + $0x28] sm:$0xff]
    %v96 = vld [vmem:[%s89 + $0x30] sm:$0xf]
    %v97 = vld [vmem:[%s89 + $0x38] sm:$0xf]
    %vm98 = vcmask 228352
    %v100 = vsel %vm98, %v36, 0
    %v103 = vsel %vm98, %v37, 0
    %v106 = vsel %vm98, %v42, 0
    %v109 = vsel %vm98, %v43, 0
    %v112 = vsel %vm98, %v48, 0
    %v115 = vsel %vm98, %v49, 0
    %v118 = vsel %vm98, %v54, 0
    %v121 = vsel %vm98, %v55, 0
    %v124 = vsel %vm98, %v60, 0
    %v127 = vsel %vm98, %v61, 0
    %v130 = vsel %vm98, %v66, 0
    %v133 = vsel %vm98, %v67, 0
    %v136 = vsel %vm98, %v72, 0
    %v139 = vsel %vm98, %v73, 0
    %v142 = vsel %vm98, %v78, 0
    %v145 = vsel %vm98, %v79, 0
    %vm147 = vcmask 1043456
    %v149 = vsel %vm147, %v96, 0
    %v152 = vsel %vm147, %v97, 0
    %154 = vmatprep.subr.mxu0 %v91
    %155 = vmatpush1.msra.mxu0 %v90
    %156 = vmatprep.subr.mxu0 %v93
    %157 = vmatpush1.msra.mxu0 %v92
    %158 = vmatprep.subr.mxu0 %v95
    %159 = vmatpush1.msra.mxu0 %v94
    %160 = vmatprep.subr.mxu0 %v152
    %161 = vmatpush1.msra.mxu0 %v149
    %162 = vmatprep.subr.mxu0 0.0
    %163 = vmatpush1.msra.mxu0 0.0
    %164 = vmatprep.subr.mxu0 0.0
    %165 = vmatpush1.msra.mxu0 0.0
    %166 = vmatprep.subr.mxu0 0.0
    %167 = vmatpush1.msra.mxu0 0.0
    %168 = vmatprep.subr.mxu0 0.0
    %169 = vmatpush1.msra.mxu0 0.0
    %170 = vmatprep.subr.mxu0 0.0
    %171 = vmatpush1.msra.mxu0 0.0
    %172 = vmatprep.subr.mxu0 0.0
    %173 = vmatpush1.msra.mxu0 0.0
    %174 = vmatprep.subr.mxu0 0.0
    %175 = vmatpush1.msra.mxu0 0.0
    %176 = vmatprep.subr.mxu0 0.0
    %177 = vmatpush1.msra.mxu0 0.0
    %178 = vmatprep.subr.mxu0 0.0
    %179 = vmatpush1.msra.mxu0 0.0
    %180 = vmatprep.subr.mxu0 0.0
    %181 = vmatpush1.msra.mxu0 0.0
    %182 = vmatprep.subr.mxu0 0.0
    %183 = vmatpush1.msra.mxu0 0.0
    %184 = vmatprep.subr.mxu0 0.0
    %185 = vmatpush1.msra.mxu0 0.0
    %186 = vmatprep.subr.mxu0 0.0
    %187 = vmatpush1.msra.mxu0 0.0
    %188 = vmatprep.subr.mxu0 0.0
    %189 = vmatpush1.msra.mxu0 0.0
    %190 = vmatprep.subr.mxu0 0.0
    %191 = vmatpush1.msra.mxu0 0.0
    %192 = vmatprep.subr.mxu0 0.0
    %193 = vmatpush1.msra.mxu0 0.0
    %194 = vmatprep.subr.mxu0 0.0
    %195 = vmatpush1.msra.mxu0 0.0
    %196 = vmatprep.subr.mxu0 0.0
    %197 = vmatpush1.msra.mxu0 0.0
    %198 = vmatprep.subr.mxu0 0.0
    %199 = vmatpush1.msra.mxu0 0.0
    %200 = vmatprep.subr.mxu0 0.0
    %201 = vmatpush1.msra.mxu0 0.0
    %202 = vmatprep.subr.mxu0 0.0
    %203 = vmatpush1.msra.mxu0 0.0
    %204 = vmatprep.subr.mxu0 0.0
    %205 = vmatpush1.msra.mxu0 0.0
    %206 = vmatprep.subr.mxu0 0.0
    %207 = vmatpush1.msra.mxu0 0.0
    %208 = vmatprep.subr.mxu0 0.0
    %209 = vmatpush1.msra.mxu0 0.0
    %210 = vmatprep.subr.mxu0 0.0
    %211 = vmatpush1.msra.mxu0 0.0
    %212 = vmatprep.subr.mxu0 0.0
    %213 = vmatpush1.msra.mxu0 0.0
    %214 = vmatprep.subr.mxu0 0.0
    %215 = vmatpush1.msra.mxu0 0.0
    %216 = vmatprep.subr.mxu0 0.0
    %217 = vmatpush1.msra.mxu0 0.0
    %218 = vmatprep.mubr.f32.mxu0 0.0
    %219 = vmatmul.mubr.f32.gmra.mrb[0].mxu0 %v100
    %v220 = vpop.f32.mrb[0].mxu0
    %v221 = vadd.f32 0.0, %v220
    %v222 = vpop.f32.mrb[0].mxu0
    %v223 = vadd.f32 0.0, %v222
    %224 = vmatprep.mubr.f32.mxu0 0.0
    %225 = vmatmul.mubr.f32.gmra.mrb[0].mxu0 %v103
    %v226 = vpop.f32.mrb[0].mxu0
    %v227 = vadd.f32 0.0, %v226
    %v228 = vpop.f32.mrb[0].mxu0
    %v229 = vadd.f32 0.0, %v228
    %230 = vmatprep.mubr.f32.mxu0 0.0
    %231 = vmatmul.mubr.f32.gmra.mrb[0].mxu0 %v106
    %v232 = vpop.f32.mrb[0].mxu0
    %v233 = vadd.f32 0.0, %v232
    %v234 = vpop.f32.mrb[0].mxu0
    %v235 = vadd.f32 0.0, %v234
    %236 = vmatprep.mubr.f32.mxu0 0.0
    %237 = vmatmul.mubr.f32.gmra.mrb[0].mxu0 %v109
    %v238 = vpop.f32.mrb[0].mxu0
    %v239 = vadd.f32 0.0, %v238
    %v240 = vpop.f32.mrb[0].mxu0
    %v241 = vadd.f32 0.0, %v240
    %242 = vmatprep.mubr.f32.mxu0 0.0
    %243 = vmatmul.mubr.f32.gmra.mrb[0].mxu0 %v112
    %v244 = vpop.f32.mrb[0].mxu0
    %v245 = vadd.f32 0.0, %v244
    %v246 = vpop.f32.mrb[0].mxu0
    %v247 = vadd.f32 0.0, %v246
    %248 = vmatprep.mubr.f32.mxu0 0.0
    %249 = vmatmul.mubr.f32.gmra.mrb[0].mxu0 %v115
    %v250 = vpop.f32.mrb[0].mxu0
    %v251 = vadd.f32 0.0, %v250
    %v252 = vpop.f32.mrb[0].mxu0
    %v253 = vadd.f32 0.0, %v252
    %254 = vmatprep.mubr.f32.mxu0 0.0
    %255 = vmatmul.mubr.f32.gmra.mrb[0].mxu0 %v118
    %v256 = vpop.f32.mrb[0].mxu0
    %v257 = vadd.f32 0.0, %v256
    %v258 = vpop.f32.mrb[0].mxu0
    %v259 = vadd.f32 0.0, %v258
    %260 = vmatprep.mubr.f32.mxu0 0.0
    %261 = vmatmul.mubr.f32.gmra.mrb[0].mxu0 %v121
    %v262 = vpop.f32.mrb[0].mxu0
    %v263 = vadd.f32 0.0, %v262
    %v264 = vpop.f32.mrb[0].mxu0
    %v265 = vadd.f32 0.0, %v264
    %266 = vmatprep.mubr.f32.mxu0 0.0
    %267 = vmatmul.mubr.f32.gmra.mrb[0].mxu0 %v124
    %v268 = vpop.f32.mrb[0].mxu0
    %v269 = vadd.f32 0.0, %v268
    %v270 = vpop.f32.mrb[0].mxu0
    %v271 = vadd.f32 0.0, %v270
    %272 = vmatprep.mubr.f32.mxu0 0.0
    %273 = vmatmul.mubr.f32.gmra.mrb[0].mxu0 %v127
    %v274 = vpop.f32.mrb[0].mxu0
    %v275 = vadd.f32 0.0, %v274
    %v276 = vpop.f32.mrb[0].mxu0
    %v277 = vadd.f32 0.0, %v276
    %278 = vmatprep.mubr.f32.mxu0 0.0
    %279 = vmatmul.mubr.f32.gmra.mrb[0].mxu0 %v130
    %v280 = vpop.f32.mrb[0].mxu0
    %v281 = vadd.f32 0.0, %v280
    %v282 = vpop.f32.mrb[0].mxu0
    %v283 = vadd.f32 0.0, %v282
    %284 = vmatprep.mubr.f32.mxu0 0.0
    %285 = vmatmul.mubr.f32.gmra.mrb[0].mxu0 %v133
    %v286 = vpop.f32.mrb[0].mxu0
    %v287 = vadd.f32 0.0, %v286
    %v288 = vpop.f32.mrb[0].mxu0
    %v289 = vadd.f32 0.0, %v288
    %290 = vmatprep.mubr.f32.mxu0 0.0
    %291 = vmatmul.mubr.f32.gmra.mrb[0].mxu0 %v136
    %v292 = vpop.f32.mrb[0].mxu0
    %v293 = vadd.f32 0.0, %v292
    %v294 = vpop.f32.mrb[0].mxu0
    %v295 = vadd.f32 0.0, %v294
    %296 = vmatprep.mubr.f32.mxu0 0.0
    %297 = vmatmul.mubr.f32.gmra.mrb[0].mxu0 %v139
    %v298 = vpop.f32.mrb[0].mxu0
    %v299 = vadd.f32 0.0, %v298
    %v300 = vpop.f32.mrb[0].mxu0
    %v301 = vadd.f32 0.0, %v300
    %302 = vmatprep.mubr.f32.mxu0 0.0
    %303 = vmatmul.mubr.f32.gmra.mrb[0].mxu0 %v142
    %v304 = vpop.f32.mrb[0].mxu0
    %v305 = vadd.f32 0.0, %v304
    %v306 = vpop.f32.mrb[0].mxu0
    %v307 = vadd.f32 0.0, %v306
    %308 = vmatprep.mubr.f32.mxu0 0.0
    %309 = vmatmul.mubr.f32.gmra.mrb[0].mxu0 %v145
    %v310 = vpop.f32.mrb[0].mxu0
    %v311 = vadd.f32 0.0, %v310
    %v312 = vpop.f32.mrb[0].mxu0
    %v313 = vadd.f32 0.0, %v312
    %314 = vdwg.mxu0
    %v316 = vsel %vm98, %v33, 0
    %v319 = vsel %vm98, %v34, 0
    %v322 = vsel %vm98, %v39, 0
    %v325 = vsel %vm98, %v40, 0
    %v328 = vsel %vm98, %v45, 0
    %v331 = vsel %vm98, %v46, 0
    %v334 = vsel %vm98, %v51, 0
    %v337 = vsel %vm98, %v52, 0
    %v340 = vsel %vm98, %v57, 0
    %v343 = vsel %vm98, %v58, 0
    %v346 = vsel %vm98, %v63, 0
    %v349 = vsel %vm98, %v64, 0
    %v352 = vsel %vm98, %v69, 0
    %v355 = vsel %vm98, %v70, 0
    %v358 = vsel %vm98, %v75, 0
    %v361 = vsel %vm98, %v76, 0
    %v364 = vsel %vm147, %v87, 0
    %v367 = vsel %vm147, %v88, 0
    %369 = vmatprep.subr.mxu0 %v82
    %370 = vmatpush1.msra.mxu0 %v81
    %371 = vmatprep.subr.mxu0 %v84
    %372 = vmatpush1.msra.mxu0 %v83
    %373 = vmatprep.subr.mxu0 %v86
    %374 = vmatpush1.msra.mxu0 %v85
    %375 = vmatprep.subr.mxu0 %v367
    %376 = vmatpush1.msra.mxu0 %v364
    %377 = vmatprep.subr.mxu0 0.0
    %378 = vmatpush1.msra.mxu0 0.0
    %379 = vmatprep.subr.mxu0 0.0
    %380 = vmatpush1.msra.mxu0 0.0
    %381 = vmatprep.subr.mxu0 0.0
    %382 = vmatpush1.msra.mxu0 0.0
    %383 = vmatprep.subr.mxu0 0.0
    %384 = vmatpush1.msra.mxu0 0.0
    %385 = vmatprep.subr.mxu0 0.0
    %386 = vmatpush1.msra.mxu0 0.0
    %387 = vmatprep.subr.mxu0 0.0
    %388 = vmatpush1.msra.mxu0 0.0
    %389 = vmatprep.subr.mxu0 0.0
    %390 = vmatpush1.msra.mxu0 0.0
    %391 = vmatprep.subr.mxu0 0.0
    %392 = vmatpush1.msra.mxu0 0.0
    %393 = vmatprep.subr.mxu0 0.0
    %394 = vmatpush1.msra.mxu0 0.0
    %395 = vmatprep.subr.mxu0 0.0
    %396 = vmatpush1.msra.mxu0 0.0
    %397 = vmatprep.subr.mxu0 0.0
    %398 = vmatpush1.msra.mxu0 0.0
    %399 = vmatprep.subr.mxu0 0.0
    %400 = vmatpush1.msra.mxu0 0.0
    %401 = vmatprep.subr.mxu0 0.0
    %402 = vmatpush1.msra.mxu0 0.0
    %403 = vmatprep.subr.mxu0 0.0
    %404 = vmatpush1.msra.mxu0 0.0
    %405 = vmatprep.subr.mxu0 0.0
    %406 = vmatpush1.msra.mxu0 0.0
    %407 = vmatprep.subr.mxu0 0.0
    %408 = vmatpush1.msra.mxu0 0.0
    %409 = vmatprep.subr.mxu0 0.0
    %410 = vmatpush1.msra.mxu0 0.0
    %411 = vmatprep.subr.mxu0 0.0
    %412 = vmatpush1.msra.mxu0 0.0
    %413 = vmatprep.subr.mxu0 0.0
    %414 = vmatpush1.msra.mxu0 0.0
    %415 = vmatprep.subr.mxu0 0.0
    %416 = vmatpush1.msra.mxu0 0.0
    %417 = vmatprep.subr.mxu0 0.0
    %418 = vmatpush1.msra.mxu0 0.0
    %419 = vmatprep.subr.mxu0 0.0
    %420 = vmatpush1.msra.mxu0 0.0
    %421 = vmatprep.subr.mxu0 0.0
    %422 = vmatpush1.msra.mxu0 0.0
    %423 = vmatprep.subr.mxu0 0.0
    %424 = vmatpush1.msra.mxu0 0.0
    %425 = vmatprep.subr.mxu0 0.0
    %426 = vmatpush1.msra.mxu0 0.0
    %427 = vmatprep.subr.mxu0 0.0
    %428 = vmatpush1.msra.mxu0 0.0
    %429 = vmatprep.subr.mxu0 0.0
    %430 = vmatpush1.msra.mxu0 0.0
    %431 = vmatprep.subr.mxu0 0.0
    %432 = vmatpush1.msra.mxu0 0.0
    %433 = vmatprep.mubr.f32.mxu0 0.0
    %434 = vmatmul.mubr.f32.gmra.mrb[0].mxu0 %v316
    %v435 = vpop.f32.mrb[0].mxu0
    %v436 = vadd.f32 %v221, %v435
    %v437 = vpop.f32.mrb[0].mxu0
    %v438 = vadd.f32 %v223, %v437
    %439 = vmatprep.mubr.f32.mxu0 0.0
    %440 = vmatmul.mubr.f32.gmra.mrb[0].mxu0 %v319
    %v441 = vpop.f32.mrb[0].mxu0
    %v442 = vadd.f32 %v227, %v441
    %v443 = vpop.f32.mrb[0].mxu0
    %v444 = vadd.f32 %v229, %v443
    %445 = vmatprep.mubr.f32.mxu0 0.0
    %446 = vmatmul.mubr.f32.gmra.mrb[0].mxu0 %v322
    %v447 = vpop.f32.mrb[0].mxu0
    %v448 = vadd.f32 %v233, %v447
    %v449 = vpop.f32.mrb[0].mxu0
    %v450 = vadd.f32 %v235, %v449
    %451 = vmatprep.mubr.f32.mxu0 0.0
    %452 = vmatmul.mubr.f32.gmra.mrb[0].mxu0 %v325
    %v453 = vpop.f32.mrb[0].mxu0
    %v454 = vadd.f32 %v239, %v453
    %v455 = vpop.f32.mrb[0].mxu0
    %v456 = vadd.f32 %v241, %v455
    %457 = vmatprep.mubr.f32.mxu0 0.0
    %458 = vmatmul.mubr.f32.gmra.mrb[0].mxu0 %v328
    %v459 = vpop.f32.mrb[0].mxu0
    %v460 = vadd.f32 %v245, %v459
    %v461 = vpop.f32.mrb[0].mxu0
    %v462 = vadd.f32 %v247, %v461
    %463 = vmatprep.mubr.f32.mxu0 0.0
    %464 = vmatmul.mubr.f32.gmra.mrb[0].mxu0 %v331
    %v465 = vpop.f32.mrb[0].mxu0
    %v466 = vadd.f32 %v251, %v465
    %v467 = vpop.f32.mrb[0].mxu0
    %v468 = vadd.f32 %v253, %v467
    %469 = vmatprep.mubr.f32.mxu0 0.0
    %470 = vmatmul.mubr.f32.gmra.mrb[0].mxu0 %v334
    %v471 = vpop.f32.mrb[0].mxu0
    %v472 = vadd.f32 %v257, %v471
    %v473 = vpop.f32.mrb[0].mxu0
    %v474 = vadd.f32 %v259, %v473
    %475 = vmatprep.mubr.f32.mxu0 0.0
    %476 = vmatmul.mubr.f32.gmra.mrb[0].mxu0 %v337
    %v477 = vpop.f32.mrb[0].mxu0
    %v478 = vadd.f32 %v263, %v477
    %v479 = vpop.f32.mrb[0].mxu0
    %v480 = vadd.f32 %v265, %v479
    %481 = vmatprep.mubr.f32.mxu0 0.0
    %482 = vmatmul.mubr.f32.gmra.mrb[0].mxu0 %v340
    %v483 = vpop.f32.mrb[0].mxu0
    %v484 = vadd.f32 %v269, %v483
    %v485 = vpop.f32.mrb[0].mxu0
    %v486 = vadd.f32 %v271, %v485
    %487 = vmatprep.mubr.f32.mxu0 0.0
    %488 = vmatmul.mubr.f32.gmra.mrb[0].mxu0 %v343
    %v489 = vpop.f32.mrb[0].mxu0
    %v490 = vadd.f32 %v275, %v489
    %v491 = vpop.f32.mrb[0].mxu0
    %v492 = vadd.f32 %v277, %v491
    %493 = vmatprep.mubr.f32.mxu0 0.0
    %494 = vmatmul.mubr.f32.gmra.mrb[0].mxu0 %v346
    %v495 = vpop.f32.mrb[0].mxu0
    %v496 = vadd.f32 %v281, %v495
    %v497 = vpop.f32.mrb[0].mxu0
    %v498 = vadd.f32 %v283, %v497
    %499 = vmatprep.mubr.f32.mxu0 0.0
    %500 = vmatmul.mubr.f32.gmra.mrb[0].mxu0 %v349
    %v501 = vpop.f32.mrb[0].mxu0
    %v502 = vadd.f32 %v287, %v501
    %v503 = vpop.f32.mrb[0].mxu0
    %v504 = vadd.f32 %v289, %v503
    %505 = vmatprep.mubr.f32.mxu0 0.0
    %506 = vmatmul.mubr.f32.gmra.mrb[0].mxu0 %v352
    %v507 = vpop.f32.mrb[0].mxu0
    %v508 = vadd.f32 %v293, %v507
    %v509 = vpop.f32.mrb[0].mxu0
    %v510 = vadd.f32 %v295, %v509
    %511 = vmatprep.mubr.f32.mxu0 0.0
    %512 = vmatmul.mubr.f32.gmra.mrb[0].mxu0 %v355
    %v513 = vpop.f32.mrb[0].mxu0
    %v514 = vadd.f32 %v299, %v513
    %v515 = vpop.f32.mrb[0].mxu0
    %v516 = vadd.f32 %v301, %v515
    %517 = vmatprep.mubr.f32.mxu0 0.0
    %518 = vmatmul.mubr.f32.gmra.mrb[0].mxu0 %v358
    %v519 = vpop.f32.mrb[0].mxu0
    %v520 = vadd.f32 %v305, %v519
    %v521 = vpop.f32.mrb[0].mxu0
    %v522 = vadd.f32 %v307, %v521
    %523 = vmatprep.mubr.f32.mxu0 0.0
    %524 = vmatmul.mubr.f32.gmra.mrb[0].mxu0 %v361
    %v525 = vpop.f32.mrb[0].mxu0
    %v526 = vadd.f32 %v311, %v525
    %v527 = vpop.f32.mrb[0].mxu0
    %v528 = vadd.f32 %v313, %v527
    %529 = vdwg.mxu0
    %vm538 = vcmask 1046528
    %v539 = vrot.slane %v33, 1
    %v540 = vrot.slane %v34, 1
    %v541 = vsel %vm538, %v539, %v540
    %v542 = vrot.slane %v35, 1
    %v543 = vsel %vm538, %v540, %v542
    %v544 = vrot.slane %v39, 1
    %v545 = vrot.slane %v40, 1
    %v546 = vsel %vm538, %v544, %v545
    %v547 = vrot.slane %v41, 1
    %v548 = vsel %vm538, %v545, %v547
    %v549 = vrot.slane %v45, 1
    %v550 = vrot.slane %v46, 1
    %v551 = vsel %vm538, %v549, %v550
    %v552 = vrot.slane %v47, 1
    %v553 = vsel %vm538, %v550, %v552
    %v554 = vrot.slane %v51, 1
    %v555 = vrot.slane %v52, 1
    %v556 = vsel %vm538, %v554, %v555
    %v557 = vrot.slane %v53, 1
    %v558 = vsel %vm538, %v555, %v557
    %v559 = vrot.slane %v57, 1
    %v560 = vrot.slane %v58, 1
    %v561 = vsel %vm538, %v559, %v560
    %v562 = vrot.slane %v59, 1
    %v563 = vsel %vm538, %v560, %v562
    %v564 = vrot.slane %v63, 1
    %v565 = vrot.slane %v64, 1
    %v566 = vsel %vm538, %v564, %v565
    %v567 = vrot.slane %v65, 1
    %v568 = vsel %vm538, %v565, %v567
    %v569 = vrot.slane %v69, 1
    %v570 = vrot.slane %v70, 1
    %v571 = vsel %vm538, %v569, %v570
    %v572 = vrot.slane %v71, 1
    %v573 = vsel %vm538, %v570, %v572
    %v574 = vrot.slane %v75, 1
    %v575 = vrot.slane %v76, 1
    %v576 = vsel %vm538, %v574, %v575
    %v577 = vrot.slane %v77, 1
    %v578 = vsel %vm538, %v575, %v577
    %s579 = scalar_lea.vmem %s1, 128
    %v580 = vld [vmem:[%s579] sm:$0xff]
    %v581 = vld [vmem:[%s579 + $0x8] sm:$0xff]
    %v582 = vld [vmem:[%s579 + $0x10] sm:$0xff]
    %v583 = vld [vmem:[%s579 + $0x18] sm:$0xff]
    %v584 = vld [vmem:[%s579 + $0x20] sm:$0xff]
    %v585 = vld [vmem:[%s579 + $0x28] sm:$0xff]
    %v586 = vld [vmem:[%s579 + $0x30] sm:$0xf]
    %v587 = vld [vmem:[%s579 + $0x38] sm:$0xf]
    %v588 = vsel %vm98, %v541, 0
    %v590 = vsel %vm98, %v543, 0
    %v592 = vsel %vm98, %v546, 0
    %v594 = vsel %vm98, %v548, 0
    %v596 = vsel %vm98, %v551, 0
    %v598 = vsel %vm98, %v553, 0
    %v600 = vsel %vm98, %v556, 0
    %v602 = vsel %vm98, %v558, 0
    %v604 = vsel %vm98, %v561, 0
    %v606 = vsel %vm98, %v563, 0
    %v608 = vsel %vm98, %v566, 0
    %v610 = vsel %vm98, %v568, 0
    %v612 = vsel %vm98, %v571, 0
    %v614 = vsel %vm98, %v573, 0
    %v616 = vsel %vm98, %v576, 0
    %v618 = vsel %vm98, %v578, 0
    %v621 = vsel %vm147, %v586, 0
    %v624 = vsel %vm147, %v587, 0
    %626 = vmatprep.subr.mxu0 %v581
    %627 = vmatpush1.msra.mxu0 %v580
    %628 = vmatprep.subr.mxu0 %v583
    %629 = vmatpush1.msra.mxu0 %v582
    %630 = vmatprep.subr.mxu0 %v585
    %631 = vmatpush1.msra.mxu0 %v584
    %632 = vmatprep.subr.mxu0 %v624
    %633 = vmatpush1.msra.mxu0 %v621
    %634 = vmatprep.subr.mxu0 0.0
    %635 = vmatpush1.msra.mxu0 0.0
    %636 = vmatprep.subr.mxu0 0.0
    %637 = vmatpush1.msra.mxu0 0.0
    %638 = vmatprep.subr.mxu0 0.0
    %639 = vmatpush1.msra.mxu0 0.0
    %640 = vmatprep.subr.mxu0 0.0
    %641 = vmatpush1.msra.mxu0 0.0
    %642 = vmatprep.subr.mxu0 0.0
    %643 = vmatpush1.msra.mxu0 0.0
    %644 = vmatprep.subr.mxu0 0.0
    %645 = vmatpush1.msra.mxu0 0.0
    %646 = vmatprep.subr.mxu0 0.0
    %647 = vmatpush1.msra.mxu0 0.0
    %648 = vmatprep.subr.mxu0 0.0
    %649 = vmatpush1.msra.mxu0 0.0
    %650 = vmatprep.subr.mxu0 0.0
    %651 = vmatpush1.msra.mxu0 0.0
    %652 = vmatprep.subr.mxu0 0.0
    %653 = vmatpush1.msra.mxu0 0.0
    %654 = vmatprep.subr.mxu0 0.0
    %655 = vmatpush1.msra.mxu0 0.0
    %656 = vmatprep.subr.mxu0 0.0
    %657 = vmatpush1.msra.mxu0 0.0
    %658 = vmatprep.subr.mxu0 0.0
    %659 = vmatpush1.msra.mxu0 0.0
    %660 = vmatprep.subr.mxu0 0.0
    %661 = vmatpush1.msra.mxu0 0.0
    %662 = vmatprep.subr.mxu0 0.0
    %663 = vmatpush1.msra.mxu0 0.0
    %664 = vmatprep.subr.mxu0 0.0
    %665 = vmatpush1.msra.mxu0 0.0
    %666 = vmatprep.subr.mxu0 0.0
    %667 = vmatpush1.msra.mxu0 0.0
    %668 = vmatprep.subr.mxu0 0.0
    %669 = vmatpush1.msra.mxu0 0.0
    %670 = vmatprep.subr.mxu0 0.0
    %671 = vmatpush1.msra.mxu0 0.0
    %672 = vmatprep.subr.mxu0 0.0
    %673 = vmatpush1.msra.mxu0 0.0
    %674 = vmatprep.subr.mxu0 0.0
    %675 = vmatpush1.msra.mxu0 0.0
    %676 = vmatprep.subr.mxu0 0.0
    %677 = vmatpush1.msra.mxu0 0.0
    %678 = vmatprep.subr.mxu0 0.0
    %679 = vmatpush1.msra.mxu0 0.0
    %680 = vmatprep.subr.mxu0 0.0
    %681 = vmatpush1.msra.mxu0 0.0
    %682 = vmatprep.subr.mxu0 0.0
    %683 = vmatpush1.msra.mxu0 0.0
    %684 = vmatprep.subr.mxu0 0.0
    %685 = vmatpush1.msra.mxu0 0.0
    %686 = vmatprep.subr.mxu0 0.0
    %687 = vmatpush1.msra.mxu0 0.0
    %688 = vmatprep.subr.mxu0 0.0
    %689 = vmatpush1.msra.mxu0 0.0
    %690 = vmatprep.mubr.f32.mxu0 0.0
    %691 = vmatmul.mubr.f32.gmra.mrb[0].mxu0 %v588
    %v692 = vpop.f32.mrb[0].mxu0
    %v693 = vadd.f32 0.0, %v692
    %v694 = vpop.f32.mrb[0].mxu0
    %v695 = vadd.f32 0.0, %v694
    %696 = vmatprep.mubr.f32.mxu0 0.0
    %697 = vmatmul.mubr.f32.gmra.mrb[0].mxu0 %v590
    %v698 = vpop.f32.mrb[0].mxu0
    %v699 = vadd.f32 0.0, %v698
    %v700 = vpop.f32.mrb[0].mxu0
    %v701 = vadd.f32 0.0, %v700
    %702 = vmatprep.mubr.f32.mxu0 0.0
    %703 = vmatmul.mubr.f32.gmra.mrb[0].mxu0 %v592
    %v704 = vpop.f32.mrb[0].mxu0
    %v705 = vadd.f32 0.0, %v704
    %v706 = vpop.f32.mrb[0].mxu0
    %v707 = vadd.f32 0.0, %v706
    %708 = vmatprep.mubr.f32.mxu0 0.0
    %709 = vmatmul.mubr.f32.gmra.mrb[0].mxu0 %v594
    %v710 = vpop.f32.mrb[0].mxu0
    %v711 = vadd.f32 0.0, %v710
    %v712 = vpop.f32.mrb[0].mxu0
    %v713 = vadd.f32 0.0, %v712
    %714 = vmatprep.mubr.f32.mxu0 0.0
    %715 = vmatmul.mubr.f32.gmra.mrb[0].mxu0 %v596
    %v716 = vpop.f32.mrb[0].mxu0
    %v717 = vadd.f32 0.0, %v716
    %v718 = vpop.f32.mrb[0].mxu0
    %v719 = vadd.f32 0.0, %v718
    %720 = vmatprep.mubr.f32.mxu0 0.0
    %721 = vmatmul.mubr.f32.gmra.mrb[0].mxu0 %v598
    %v722 = vpop.f32.mrb[0].mxu0
    %v723 = vadd.f32 0.0, %v722
    %v724 = vpop.f32.mrb[0].mxu0
    %v725 = vadd.f32 0.0, %v724
    %726 = vmatprep.mubr.f32.mxu0 0.0
    %727 = vmatmul.mubr.f32.gmra.mrb[0].mxu0 %v600
    %v728 = vpop.f32.mrb[0].mxu0
    %v729 = vadd.f32 0.0, %v728
    %v730 = vpop.f32.mrb[0].mxu0
    %v731 = vadd.f32 0.0, %v730
    %732 = vmatprep.mubr.f32.mxu0 0.0
    %733 = vmatmul.mubr.f32.gmra.mrb[0].mxu0 %v602
    %v734 = vpop.f32.mrb[0].mxu0
    %v735 = vadd.f32 0.0, %v734
    %v736 = vpop.f32.mrb[0].mxu0
    %v737 = vadd.f32 0.0, %v736
    %738 = vmatprep.mubr.f32.mxu0 0.0
    %739 = vmatmul.mubr.f32.gmra.mrb[0].mxu0 %v604
    %v740 = vpop.f32.mrb[0].mxu0
    %v741 = vadd.f32 0.0, %v740
    %v742 = vpop.f32.mrb[0].mxu0
    %v743 = vadd.f32 0.0, %v742
    %744 = vmatprep.mubr.f32.mxu0 0.0
    %745 = vmatmul.mubr.f32.gmra.mrb[0].mxu0 %v606
    %v746 = vpop.f32.mrb[0].mxu0
    %v747 = vadd.f32 0.0, %v746
    %v748 = vpop.f32.mrb[0].mxu0
    %v749 = vadd.f32 0.0, %v748
    %750 = vmatprep.mubr.f32.mxu0 0.0
    %751 = vmatmul.mubr.f32.gmra.mrb[0].mxu0 %v608
    %v752 = vpop.f32.mrb[0].mxu0
    %v753 = vadd.f32 0.0, %v752
    %v754 = vpop.f32.mrb[0].mxu0
    %v755 = vadd.f32 0.0, %v754
    %756 = vmatprep.mubr.f32.mxu0 0.0
    %757 = vmatmul.mubr.f32.gmra.mrb[0].mxu0 %v610
    %v758 = vpop.f32.mrb[0].mxu0
    %v759 = vadd.f32 0.0, %v758
    %v760 = vpop.f32.mrb[0].mxu0
    %v761 = vadd.f32 0.0, %v760
    %762 = vmatprep.mubr.f32.mxu0 0.0
    %763 = vmatmul.mubr.f32.gmra.mrb[0].mxu0 %v612
    %v764 = vpop.f32.mrb[0].mxu0
    %v765 = vadd.f32 0.0, %v764
    %v766 = vpop.f32.mrb[0].mxu0
    %v767 = vadd.f32 0.0, %v766
    %768 = vmatprep.mubr.f32.mxu0 0.0
    %769 = vmatmul.mubr.f32.gmra.mrb[0].mxu0 %v614
    %v770 = vpop.f32.mrb[0].mxu0
    %v771 = vadd.f32 0.0, %v770
    %v772 = vpop.f32.mrb[0].mxu0
    %v773 = vadd.f32 0.0, %v772
    %774 = vmatprep.mubr.f32.mxu0 0.0
    %775 = vmatmul.mubr.f32.gmra.mrb[0].mxu0 %v616
    %v776 = vpop.f32.mrb[0].mxu0
    %v777 = vadd.f32 0.0, %v776
    %v778 = vpop.f32.mrb[0].mxu0
    %v779 = vadd.f32 0.0, %v778
    %780 = vmatprep.mubr.f32.mxu0 0.0
    %781 = vmatmul.mubr.f32.gmra.mrb[0].mxu0 %v618
    %v782 = vpop.f32.mrb[0].mxu0
    %v783 = vadd.f32 0.0, %v782
    %v784 = vpop.f32.mrb[0].mxu0
    %v785 = vadd.f32 0.0, %v784
    %786 = vdwg.mxu0
    %v787 = vadd.f32 %v436, %v693
    %v788 = vadd.f32 %v438, %v695
    %v789 = vadd.f32 %v442, %v699
    %v790 = vadd.f32 %v444, %v701
    %v791 = vadd.f32 %v448, %v705
    %v792 = vadd.f32 %v450, %v707
    %v793 = vadd.f32 %v454, %v711
    %v794 = vadd.f32 %v456, %v713
    %v795 = vadd.f32 %v460, %v717
    %v796 = vadd.f32 %v462, %v719
    %v797 = vadd.f32 %v466, %v723
    %v798 = vadd.f32 %v468, %v725
    %v799 = vadd.f32 %v472, %v729
    %v800 = vadd.f32 %v474, %v731
    %v801 = vadd.f32 %v478, %v735
    %v802 = vadd.f32 %v480, %v737
    %v803 = vadd.f32 %v484, %v741
    %v804 = vadd.f32 %v486, %v743
    %v805 = vadd.f32 %v490, %v747
    %v806 = vadd.f32 %v492, %v749
    %v807 = vadd.f32 %v496, %v753
    %v808 = vadd.f32 %v498, %v755
    %v809 = vadd.f32 %v502, %v759
    %v810 = vadd.f32 %v504, %v761
    %v811 = vadd.f32 %v508, %v765
    %v812 = vadd.f32 %v510, %v767
    %v813 = vadd.f32 %v514, %v771
    %v814 = vadd.f32 %v516, %v773
    %v815 = vadd.f32 %v520, %v777
    %v816 = vadd.f32 %v522, %v779
    %v817 = vadd.f32 %v526, %v783
    %v818 = vadd.f32 %v528, %v785
    %v827 = vrot.slane %v36, 1
    %v828 = vrot.slane %v37, 1
    %v829 = vsel %vm538, %v827, %v828
    %v830 = vrot.slane %v38, 1
    %v831 = vsel %vm538, %v828, %v830
    %v832 = vrot.slane %v42, 1
    %v833 = vrot.slane %v43, 1
    %v834 = vsel %vm538, %v832, %v833
    %v835 = vrot.slane %v44, 1
    %v836 = vsel %vm538, %v833, %v835
    %v837 = vrot.slane %v48, 1
    %v838 = vrot.slane %v49, 1
    %v839 = vsel %vm538, %v837, %v838
    %v840 = vrot.slane %v50, 1
    %v841 = vsel %vm538, %v838, %v840
    %v842 = vrot.slane %v54, 1
    %v843 = vrot.slane %v55, 1
    %v844 = vsel %vm538, %v842, %v843
    %v845 = vrot.slane %v56, 1
    %v846 = vsel %vm538, %v843, %v845
    %v847 = vrot.slane %v60, 1
    %v848 = vrot.slane %v61, 1
    %v849 = vsel %vm538, %v847, %v848
    %v850 = vrot.slane %v62, 1
    %v851 = vsel %vm538, %v848, %v850
    %v852 = vrot.slane %v66, 1
    %v853 = vrot.slane %v67, 1
    %v854 = vsel %vm538, %v852, %v853
    %v855 = vrot.slane %v68, 1
    %v856 = vsel %vm538, %v853, %v855
    %v857 = vrot.slane %v72, 1
    %v858 = vrot.slane %v73, 1
    %v859 = vsel %vm538, %v857, %v858
    %v860 = vrot.slane %v74, 1
    %v861 = vsel %vm538, %v858, %v860
    %v862 = vrot.slane %v78, 1
    %v863 = vrot.slane %v79, 1
    %v864 = vsel %vm538, %v862, %v863
    %v865 = vrot.slane %v80, 1
    %v866 = vsel %vm538, %v863, %v865
    %s867 = scalar_lea.vmem %s1, 192
    %v868 = vld [vmem:[%s867] sm:$0xff]
    %v869 = vld [vmem:[%s867 + $0x8] sm:$0xff]
    %v870 = vld [vmem:[%s867 + $0x10] sm:$0xff]
    %v871 = vld [vmem:[%s867 + $0x18] sm:$0xff]
    %v872 = vld [vmem:[%s867 + $0x20] sm:$0xff]
    %v873 = vld [vmem:[%s867 + $0x28] sm:$0xff]
    %v874 = vld [vmem:[%s867 + $0x30] sm:$0xf]
    %v875 = vld [vmem:[%s867 + $0x38] sm:$0xf]
    %v876 = vsel %vm98, %v829, 0
    %v878 = vsel %vm98, %v831, 0
    %v880 = vsel %vm98, %v834, 0
    %v882 = vsel %vm98, %v836, 0
    %v884 = vsel %vm98, %v839, 0
    %v886 = vsel %vm98, %v841, 0
    %v888 = vsel %vm98, %v844, 0
    %v890 = vsel %vm98, %v846, 0
    %v892 = vsel %vm98, %v849, 0
    %v894 = vsel %vm98, %v851, 0
    %v896 = vsel %vm98, %v854, 0
    %v898 = vsel %vm98, %v856, 0
    %v900 = vsel %vm98, %v859, 0
    %v902 = vsel %vm98, %v861, 0
    %v904 = vsel %vm98, %v864, 0
    %v906 = vsel %vm98, %v866, 0
    %v909 = vsel %vm147, %v874, 0
    %v912 = vsel %vm147, %v875, 0
    %914 = vmatprep.subr.mxu0 %v869
    %915 = vmatpush1.msra.mxu0 %v868
    %916 = vmatprep.subr.mxu0 %v871
    %917 = vmatpush1.msra.mxu0 %v870
    %918 = vmatprep.subr.mxu0 %v873
    %919 = vmatpush1.msra.mxu0 %v872
    %920 = vmatprep.subr.mxu0 %v912
    %921 = vmatpush1.msra.mxu0 %v909
    %922 = vmatprep.subr.mxu0 0.0
    %923 = vmatpush1.msra.mxu0 0.0
    %924 = vmatprep.subr.mxu0 0.0
    %925 = vmatpush1.msra.mxu0 0.0
    %926 = vmatprep.subr.mxu0 0.0
    %927 = vmatpush1.msra.mxu0 0.0
    %928 = vmatprep.subr.mxu0 0.0
    %929 = vmatpush1.msra.mxu0 0.0
    %930 = vmatprep.subr.mxu0 0.0
    %931 = vmatpush1.msra.mxu0 0.0
    %932 = vmatprep.subr.mxu0 0.0
    %933 = vmatpush1.msra.mxu0 0.0
    %934 = vmatprep.subr.mxu0 0.0
    %935 = vmatpush1.msra.mxu0 0.0
    %936 = vmatprep.subr.mxu0 0.0
    %937 = vmatpush1.msra.mxu0 0.0
    %938 = vmatprep.subr.mxu0 0.0
    %939 = vmatpush1.msra.mxu0 0.0
    %940 = vmatprep.subr.mxu0 0.0
    %941 = vmatpush1.msra.mxu0 0.0
    %942 = vmatprep.subr.mxu0 0.0
    %943 = vmatpush1.msra.mxu0 0.0
    %944 = vmatprep.subr.mxu0 0.0
    %945 = vmatpush1.msra.mxu0 0.0
    %946 = vmatprep.subr.mxu0 0.0
    %947 = vmatpush1.msra.mxu0 0.0
    %948 = vmatprep.subr.mxu0 0.0
    %949 = vmatpush1.msra.mxu0 0.0
    %950 = vmatprep.subr.mxu0 0.0
    %951 = vmatpush1.msra.mxu0 0.0
    %952 = vmatprep.subr.mxu0 0.0
    %953 = vmatpush1.msra.mxu0 0.0
    %954 = vmatprep.subr.mxu0 0.0
    %955 = vmatpush1.msra.mxu0 0.0
    %956 = vmatprep.subr.mxu0 0.0
    %957 = vmatpush1.msra.mxu0 0.0
    %958 = vmatprep.subr.mxu0 0.0
    %959 = vmatpush1.msra.mxu0 0.0
    %960 = vmatprep.subr.mxu0 0.0
    %961 = vmatpush1.msra.mxu0 0.0
    %962 = vmatprep.subr.mxu0 0.0
    %963 = vmatpush1.msra.mxu0 0.0
    %964 = vmatprep.subr.mxu0 0.0
    %965 = vmatpush1.msra.mxu0 0.0
    %966 = vmatprep.subr.mxu0 0.0
    %967 = vmatpush1.msra.mxu0 0.0
    %968 = vmatprep.subr.mxu0 0.0
    %969 = vmatpush1.msra.mxu0 0.0
    %970 = vmatprep.subr.mxu0 0.0
    %971 = vmatpush1.msra.mxu0 0.0
    %972 = vmatprep.subr.mxu0 0.0
    %973 = vmatpush1.msra.mxu0 0.0
    %974 = vmatprep.subr.mxu0 0.0
    %975 = vmatpush1.msra.mxu0 0.0
    %976 = vmatprep.subr.mxu0 0.0
    %977 = vmatpush1.msra.mxu0 0.0
    %978 = vmatprep.mubr.f32.mxu0 0.0
    %979 = vmatmul.mubr.f32.gmra.mrb[0].mxu0 %v876
    %v980 = vpop.f32.mrb[0].mxu0
    %v981 = vadd.f32 0.0, %v980
    %v982 = vpop.f32.mrb[0].mxu0
    %v983 = vadd.f32 0.0, %v982
    %984 = vmatprep.mubr.f32.mxu0 0.0
    %985 = vmatmul.mubr.f32.gmra.mrb[0].mxu0 %v878
    %v986 = vpop.f32.mrb[0].mxu0
    %v987 = vadd.f32 0.0, %v986
    %v988 = vpop.f32.mrb[0].mxu0
    %v989 = vadd.f32 0.0, %v988
    %990 = vmatprep.mubr.f32.mxu0 0.0
    %991 = vmatmul.mubr.f32.gmra.mrb[0].mxu0 %v880
    %v992 = vpop.f32.mrb[0].mxu0
    %v993 = vadd.f32 0.0, %v992
    %v994 = vpop.f32.mrb[0].mxu0
    %v995 = vadd.f32 0.0, %v994
    %996 = vmatprep.mubr.f32.mxu0 0.0
    %997 = vmatmul.mubr.f32.gmra.mrb[0].mxu0 %v882
    %v998 = vpop.f32.mrb[0].mxu0
    %v999 = vadd.f32 0.0, %v998
    %v1000 = vpop.f32.mrb[0].mxu0
    %v1001 = vadd.f32 0.0, %v1000
    %1002 = vmatprep.mubr.f32.mxu0 0.0
    %1003 = vmatmul.mubr.f32.gmra.mrb[0].mxu0 %v884
    %v1004 = vpop.f32.mrb[0].mxu0
    %v1005 = vadd.f32 0.0, %v1004
    %v1006 = vpop.f32.mrb[0].mxu0
    %v1007 = vadd.f32 0.0, %v1006
    %1008 = vmatprep.mubr.f32.mxu0 0.0
    %1009 = vmatmul.mubr.f32.gmra.mrb[0].mxu0 %v886
    %v1010 = vpop.f32.mrb[0].mxu0
    %v1011 = vadd.f32 0.0, %v1010
    %v1012 = vpop.f32.mrb[0].mxu0
    %v1013 = vadd.f32 0.0, %v1012
    %1014 = vmatprep.mubr.f32.mxu0 0.0
    %1015 = vmatmul.mubr.f32.gmra.mrb[0].mxu0 %v888
    %v1016 = vpop.f32.mrb[0].mxu0
    %v1017 = vadd.f32 0.0, %v1016
    %v1018 = vpop.f32.mrb[0].mxu0
    %v1019 = vadd.f32 0.0, %v1018
    %1020 = vmatprep.mubr.f32.mxu0 0.0
    %1021 = vmatmul.mubr.f32.gmra.mrb[0].mxu0 %v890
    %v1022 = vpop.f32.mrb[0].mxu0
    %v1023 = vadd.f32 0.0, %v1022
    %v1024 = vpop.f32.mrb[0].mxu0
    %v1025 = vadd.f32 0.0, %v1024
    %1026 = vmatprep.mubr.f32.mxu0 0.0
    %1027 = vmatmul.mubr.f32.gmra.mrb[0].mxu0 %v892
    %v1028 = vpop.f32.mrb[0].mxu0
    %v1029 = vadd.f32 0.0, %v1028
    %v1030 = vpop.f32.mrb[0].mxu0
    %v1031 = vadd.f32 0.0, %v1030
    %1032 = vmatprep.mubr.f32.mxu0 0.0
    %1033 = vmatmul.mubr.f32.gmra.mrb[0].mxu0 %v894
    %v1034 = vpop.f32.mrb[0].mxu0
    %v1035 = vadd.f32 0.0, %v1034
    %v1036 = vpop.f32.mrb[0].mxu0
    %v1037 = vadd.f32 0.0, %v1036
    %1038 = vmatprep.mubr.f32.mxu0 0.0
    %1039 = vmatmul.mubr.f32.gmra.mrb[0].mxu0 %v896
    %v1040 = vpop.f32.mrb[0].mxu0
    %v1041 = vadd.f32 0.0, %v1040
    %v1042 = vpop.f32.mrb[0].mxu0
    %v1043 = vadd.f32 0.0, %v1042
    %1044 = vmatprep.mubr.f32.mxu0 0.0
    %1045 = vmatmul.mubr.f32.gmra.mrb[0].mxu0 %v898
    %v1046 = vpop.f32.mrb[0].mxu0
    %v1047 = vadd.f32 0.0, %v1046
    %v1048 = vpop.f32.mrb[0].mxu0
    %v1049 = vadd.f32 0.0, %v1048
    %1050 = vmatprep.mubr.f32.mxu0 0.0
    %1051 = vmatmul.mubr.f32.gmra.mrb[0].mxu0 %v900
    %v1052 = vpop.f32.mrb[0].mxu0
    %v1053 = vadd.f32 0.0, %v1052
    %v1054 = vpop.f32.mrb[0].mxu0
    %v1055 = vadd.f32 0.0, %v1054
    %1056 = vmatprep.mubr.f32.mxu0 0.0
    %1057 = vmatmul.mubr.f32.gmra.mrb[0].mxu0 %v902
    %v1058 = vpop.f32.mrb[0].mxu0
    %v1059 = vadd.f32 0.0, %v1058
    %v1060 = vpop.f32.mrb[0].mxu0
    %v1061 = vadd.f32 0.0, %v1060
    %1062 = vmatprep.mubr.f32.mxu0 0.0
    %1063 = vmatmul.mubr.f32.gmra.mrb[0].mxu0 %v904
    %v1064 = vpop.f32.mrb[0].mxu0
    %v1065 = vadd.f32 0.0, %v1064
    %v1066 = vpop.f32.mrb[0].mxu0
    %v1067 = vadd.f32 0.0, %v1066
    %1068 = vmatprep.mubr.f32.mxu0 0.0
    %1069 = vmatmul.mubr.f32.gmra.mrb[0].mxu0 %v906
    %v1070 = vpop.f32.mrb[0].mxu0
    %v1071 = vadd.f32 0.0, %v1070
    %v1072 = vpop.f32.mrb[0].mxu0
    %v1073 = vadd.f32 0.0, %v1072
    %1074 = vdwg.mxu0
    %v1075 = vadd.f32 %v787, %v981
    %v1076 = vadd.f32 %v788, %v983
    %v1077 = vadd.f32 %v789, %v987
    %v1078 = vadd.f32 %v790, %v989
    %v1079 = vadd.f32 %v791, %v993
    %v1080 = vadd.f32 %v792, %v995
    %v1081 = vadd.f32 %v793, %v999
    %v1082 = vadd.f32 %v794, %v1001
    %v1083 = vadd.f32 %v795, %v1005
    %v1084 = vadd.f32 %v796, %v1007
    %v1085 = vadd.f32 %v797, %v1011
    %v1086 = vadd.f32 %v798, %v1013
    %v1087 = vadd.f32 %v799, %v1017
    %v1088 = vadd.f32 %v800, %v1019
    %v1089 = vadd.f32 %v801, %v1023
    %v1090 = vadd.f32 %v802, %v1025
    %v1091 = vadd.f32 %v803, %v1029
    %v1092 = vadd.f32 %v804, %v1031
    %v1093 = vadd.f32 %v805, %v1035
    %v1094 = vadd.f32 %v806, %v1037
    %v1095 = vadd.f32 %v807, %v1041
    %v1096 = vadd.f32 %v808, %v1043
    %v1097 = vadd.f32 %v809, %v1047
    %v1098 = vadd.f32 %v810, %v1049
    %v1099 = vadd.f32 %v811, %v1053
    %v1100 = vadd.f32 %v812, %v1055
    %v1101 = vadd.f32 %v813, %v1059
    %v1102 = vadd.f32 %v814, %v1061
    %v1103 = vadd.f32 %v815, %v1065
    %v1104 = vadd.f32 %v816, %v1067
    %v1105 = vadd.f32 %v817, %v1071
    %v1106 = vadd.f32 %v818, %v1073
    %vm1107 = vcmask 1045504
    %v1108 = vrot.slane %v33, 2
    %v1109 = vrot.slane %v34, 2
    %v1110 = vsel %vm1107, %v1108, %v1109
    %v1111 = vrot.slane %v35, 2
    %v1112 = vsel %vm1107, %v1109, %v1111
    %v1113 = vrot.slane %v39, 2
    %v1114 = vrot.slane %v40, 2
    %v1115 = vsel %vm1107, %v1113, %v1114
    %v1116 = vrot.slane %v41, 2
    %v1117 = vsel %vm1107, %v1114, %v1116
    %v1118 = vrot.slane %v45, 2
    %v1119 = vrot.slane %v46, 2
    %v1120 = vsel %vm1107, %v1118, %v1119
    %v1121 = vrot.slane %v47, 2
    %v1122 = vsel %vm1107, %v1119, %v1121
    %v1123 = vrot.slane %v51, 2
    %v1124 = vrot.slane %v52, 2
    %v1125 = vsel %vm1107, %v1123, %v1124
    %v1126 = vrot.slane %v53, 2
    %v1127 = vsel %vm1107, %v1124, %v1126
    %v1128 = vrot.slane %v57, 2
    %v1129 = vrot.slane %v58, 2
    %v1130 = vsel %vm1107, %v1128, %v1129
    %v1131 = vrot.slane %v59, 2
    %v1132 = vsel %vm1107, %v1129, %v1131
    %v1133 = vrot.slane %v63, 2
    %v1134 = vrot.slane %v64, 2
    %v1135 = vsel %vm1107, %v1133, %v1134
    %v1136 = vrot.slane %v65, 2
    %v1137 = vsel %vm1107, %v1134, %v1136
    %v1138 = vrot.slane %v69, 2
    %v1139 = vrot.slane %v70, 2
    %v1140 = vsel %vm1107, %v1138, %v1139
    %v1141 = vrot.slane %v71, 2
    %v1142 = vsel %vm1107, %v1139, %v1141
    %v1143 = vrot.slane %v75, 2
    %v1144 = vrot.slane %v76, 2
    %v1145 = vsel %vm1107, %v1143, %v1144
    %v1146 = vrot.slane %v77, 2
    %v1147 = vsel %vm1107, %v1144, %v1146
    %s1148 = scalar_lea.vmem %s1, 256
    %v1149 = vld [vmem:[%s1148] sm:$0xff]
    %v1150 = vld [vmem:[%s1148 + $0x8] sm:$0xff]
    %v1151 = vld [vmem:[%s1148 + $0x10] sm:$0xff]
    %v1152 = vld [vmem:[%s1148 + $0x18] sm:$0xff]
    %v1153 = vld [vmem:[%s1148 + $0x20] sm:$0xff]
    %v1154 = vld [vmem:[%s1148 + $0x28] sm:$0xff]
    %v1155 = vld [vmem:[%s1148 + $0x30] sm:$0xf]
    %v1156 = vld [vmem:[%s1148 + $0x38] sm:$0xf]
    %v1157 = vsel %vm98, %v1110, 0
    %v1159 = vsel %vm98, %v1112, 0
    %v1161 = vsel %vm98, %v1115, 0
    %v1163 = vsel %vm98, %v1117, 0
    %v1165 = vsel %vm98, %v1120, 0
    %v1167 = vsel %vm98, %v1122, 0
    %v1169 = vsel %vm98, %v1125, 0
    %v1171 = vsel %vm98, %v1127, 0
    %v1173 = vsel %vm98, %v1130, 0
    %v1175 = vsel %vm98, %v1132, 0
    %v1177 = vsel %vm98, %v1135, 0
    %v1179 = vsel %vm98, %v1137, 0
    %v1181 = vsel %vm98, %v1140, 0
    %v1183 = vsel %vm98, %v1142, 0
    %v1185 = vsel %vm98, %v1145, 0
    %v1187 = vsel %vm98, %v1147, 0
    %v1190 = vsel %vm147, %v1155, 0
    %v1193 = vsel %vm147, %v1156, 0
    %1195 = vmatprep.subr.mxu0 %v1150
    %1196 = vmatpush1.msra.mxu0 %v1149
    %1197 = vmatprep.subr.mxu0 %v1152
    %1198 = vmatpush1.msra.mxu0 %v1151
    %1199 = vmatprep.subr.mxu0 %v1154
    %1200 = vmatpush1.msra.mxu0 %v1153
    %1201 = vmatprep.subr.mxu0 %v1193
    %1202 = vmatpush1.msra.mxu0 %v1190
    %1203 = vmatprep.subr.mxu0 0.0
    %1204 = vmatpush1.msra.mxu0 0.0
    %1205 = vmatprep.subr.mxu0 0.0
    %1206 = vmatpush1.msra.mxu0 0.0
    %1207 = vmatprep.subr.mxu0 0.0
    %1208 = vmatpush1.msra.mxu0 0.0
    %1209 = vmatprep.subr.mxu0 0.0
    %1210 = vmatpush1.msra.mxu0 0.0
    %1211 = vmatprep.subr.mxu0 0.0
    %1212 = vmatpush1.msra.mxu0 0.0
    %1213 = vmatprep.subr.mxu0 0.0
    %1214 = vmatpush1.msra.mxu0 0.0
    %1215 = vmatprep.subr.mxu0 0.0
    %1216 = vmatpush1.msra.mxu0 0.0
    %1217 = vmatprep.subr.mxu0 0.0
    %1218 = vmatpush1.msra.mxu0 0.0
    %1219 = vmatprep.subr.mxu0 0.0
    %1220 = vmatpush1.msra.mxu0 0.0
    %1221 = vmatprep.subr.mxu0 0.0
    %1222 = vmatpush1.msra.mxu0 0.0
    %1223 = vmatprep.subr.mxu0 0.0
    %1224 = vmatpush1.msra.mxu0 0.0
    %1225 = vmatprep.subr.mxu0 0.0
    %1226 = vmatpush1.msra.mxu0 0.0
    %1227 = vmatprep.subr.mxu0 0.0
    %1228 = vmatpush1.msra.mxu0 0.0
    %1229 = vmatprep.subr.mxu0 0.0
    %1230 = vmatpush1.msra.mxu0 0.0
    %1231 = vmatprep.subr.mxu0 0.0
    %1232 = vmatpush1.msra.mxu0 0.0
    %1233 = vmatprep.subr.mxu0 0.0
    %1234 = vmatpush1.msra.mxu0 0.0
    %1235 = vmatprep.subr.mxu0 0.0
    %1236 = vmatpush1.msra.mxu0 0.0
    %1237 = vmatprep.subr.mxu0 0.0
    %1238 = vmatpush1.msra.mxu0 0.0
    %1239 = vmatprep.subr.mxu0 0.0
    %1240 = vmatpush1.msra.mxu0 0.0
    %1241 = vmatprep.subr.mxu0 0.0
    %1242 = vmatpush1.msra.mxu0 0.0
    %1243 = vmatprep.subr.mxu0 0.0
    %1244 = vmatpush1.msra.mxu0 0.0
    %1245 = vmatprep.subr.mxu0 0.0
    %1246 = vmatpush1.msra.mxu0 0.0
    %1247 = vmatprep.subr.mxu0 0.0
    %1248 = vmatpush1.msra.mxu0 0.0
    %1249 = vmatprep.subr.mxu0 0.0
    %1250 = vmatpush1.msra.mxu0 0.0
    %1251 = vmatprep.subr.mxu0 0.0
    %1252 = vmatpush1.msra.mxu0 0.0
    %1253 = vmatprep.subr.mxu0 0.0
    %1254 = vmatpush1.msra.mxu0 0.0
    %1255 = vmatprep.subr.mxu0 0.0
    %1256 = vmatpush1.msra.mxu0 0.0
    %1257 = vmatprep.subr.mxu0 0.0
    %1258 = vmatpush1.msra.mxu0 0.0
    %1259 = vmatprep.mubr.f32.mxu0 0.0
    %1260 = vmatmul.mubr.f32.gmra.mrb[0].mxu0 %v1157
    %v1261 = vpop.f32.mrb[0].mxu0
    %v1262 = vadd.f32 0.0, %v1261
    %v1263 = vpop.f32.mrb[0].mxu0
    %v1264 = vadd.f32 0.0, %v1263
    %1265 = vmatprep.mubr.f32.mxu0 0.0
    %1266 = vmatmul.mubr.f32.gmra.mrb[0].mxu0 %v1159
    %v1267 = vpop.f32.mrb[0].mxu0
    %v1268 = vadd.f32 0.0, %v1267
    %v1269 = vpop.f32.mrb[0].mxu0
    %v1270 = vadd.f32 0.0, %v1269
    %1271 = vmatprep.mubr.f32.mxu0 0.0
    %1272 = vmatmul.mubr.f32.gmra.mrb[0].mxu0 %v1161
    %v1273 = vpop.f32.mrb[0].mxu0
    %v1274 = vadd.f32 0.0, %v1273
    %v1275 = vpop.f32.mrb[0].mxu0
    %v1276 = vadd.f32 0.0, %v1275
    %1277 = vmatprep.mubr.f32.mxu0 0.0
    %1278 = vmatmul.mubr.f32.gmra.mrb[0].mxu0 %v1163
    %v1279 = vpop.f32.mrb[0].mxu0
    %v1280 = vadd.f32 0.0, %v1279
    %v1281 = vpop.f32.mrb[0].mxu0
    %v1282 = vadd.f32 0.0, %v1281
    %1283 = vmatprep.mubr.f32.mxu0 0.0
    %1284 = vmatmul.mubr.f32.gmra.mrb[0].mxu0 %v1165
    %v1285 = vpop.f32.mrb[0].mxu0
    %v1286 = vadd.f32 0.0, %v1285
    %v1287 = vpop.f32.mrb[0].mxu0
    %v1288 = vadd.f32 0.0, %v1287
    %1289 = vmatprep.mubr.f32.mxu0 0.0
    %1290 = vmatmul.mubr.f32.gmra.mrb[0].mxu0 %v1167
    %v1291 = vpop.f32.mrb[0].mxu0
    %v1292 = vadd.f32 0.0, %v1291
    %v1293 = vpop.f32.mrb[0].mxu0
    %v1294 = vadd.f32 0.0, %v1293
    %1295 = vmatprep.mubr.f32.mxu0 0.0
    %1296 = vmatmul.mubr.f32.gmra.mrb[0].mxu0 %v1169
    %v1297 = vpop.f32.mrb[0].mxu0
    %v1298 = vadd.f32 0.0, %v1297
    %v1299 = vpop.f32.mrb[0].mxu0
    %v1300 = vadd.f32 0.0, %v1299
    %1301 = vmatprep.mubr.f32.mxu0 0.0
    %1302 = vmatmul.mubr.f32.gmra.mrb[0].mxu0 %v1171
    %v1303 = vpop.f32.mrb[0].mxu0
    %v1304 = vadd.f32 0.0, %v1303
    %v1305 = vpop.f32.mrb[0].mxu0
    %v1306 = vadd.f32 0.0, %v1305
    %1307 = vmatprep.mubr.f32.mxu0 0.0
    %1308 = vmatmul.mubr.f32.gmra.mrb[0].mxu0 %v1173
    %v1309 = vpop.f32.mrb[0].mxu0
    %v1310 = vadd.f32 0.0, %v1309
    %v1311 = vpop.f32.mrb[0].mxu0
    %v1312 = vadd.f32 0.0, %v1311
    %1313 = vmatprep.mubr.f32.mxu0 0.0
    %1314 = vmatmul.mubr.f32.gmra.mrb[0].mxu0 %v1175
    %v1315 = vpop.f32.mrb[0].mxu0
    %v1316 = vadd.f32 0.0, %v1315
    %v1317 = vpop.f32.mrb[0].mxu0
    %v1318 = vadd.f32 0.0, %v1317
    %1319 = vmatprep.mubr.f32.mxu0 0.0
    %1320 = vmatmul.mubr.f32.gmra.mrb[0].mxu0 %v1177
    %v1321 = vpop.f32.mrb[0].mxu0
    %v1322 = vadd.f32 0.0, %v1321
    %v1323 = vpop.f32.mrb[0].mxu0
    %v1324 = vadd.f32 0.0, %v1323
    %1325 = vmatprep.mubr.f32.mxu0 0.0
    %1326 = vmatmul.mubr.f32.gmra.mrb[0].mxu0 %v1179
    %v1327 = vpop.f32.mrb[0].mxu0
    %v1328 = vadd.f32 0.0, %v1327
    %v1329 = vpop.f32.mrb[0].mxu0
    %v1330 = vadd.f32 0.0, %v1329
    %1331 = vmatprep.mubr.f32.mxu0 0.0
    %1332 = vmatmul.mubr.f32.gmra.mrb[0].mxu0 %v1181
    %v1333 = vpop.f32.mrb[0].mxu0
    %v1334 = vadd.f32 0.0, %v1333
    %v1335 = vpop.f32.mrb[0].mxu0
    %v1336 = vadd.f32 0.0, %v1335
    %1337 = vmatprep.mubr.f32.mxu0 0.0
    %1338 = vmatmul.mubr.f32.gmra.mrb[0].mxu0 %v1183
    %v1339 = vpop.f32.mrb[0].mxu0
    %v1340 = vadd.f32 0.0, %v1339
    %v1341 = vpop.f32.mrb[0].mxu0
    %v1342 = vadd.f32 0.0, %v1341
    %1343 = vmatprep.mubr.f32.mxu0 0.0
    %1344 = vmatmul.mubr.f32.gmra.mrb[0].mxu0 %v1185
    %v1345 = vpop.f32.mrb[0].mxu0
    %v1346 = vadd.f32 0.0, %v1345
    %v1347 = vpop.f32.mrb[0].mxu0
    %v1348 = vadd.f32 0.0, %v1347
    %1349 = vmatprep.mubr.f32.mxu0 0.0
    %1350 = vmatmul.mubr.f32.gmra.mrb[0].mxu0 %v1187
    %v1351 = vpop.f32.mrb[0].mxu0
    %v1352 = vadd.f32 0.0, %v1351
    %v1353 = vpop.f32.mrb[0].mxu0
    %v1354 = vadd.f32 0.0, %v1353
    %1355 = vdwg.mxu0
    %v1356 = vadd.f32 %v1075, %v1262
    %v1357 = vadd.f32 %v1076, %v1264
    %v1358 = vadd.f32 %v1077, %v1268
    %v1359 = vadd.f32 %v1078, %v1270
    %v1360 = vadd.f32 %v1079, %v1274
    %v1361 = vadd.f32 %v1080, %v1276
    %v1362 = vadd.f32 %v1081, %v1280
    %v1363 = vadd.f32 %v1082, %v1282
    %v1364 = vadd.f32 %v1083, %v1286
    %v1365 = vadd.f32 %v1084, %v1288
    %v1366 = vadd.f32 %v1085, %v1292
    %v1367 = vadd.f32 %v1086, %v1294
    %v1368 = vadd.f32 %v1087, %v1298
    %v1369 = vadd.f32 %v1088, %v1300
    %v1370 = vadd.f32 %v1089, %v1304
    %v1371 = vadd.f32 %v1090, %v1306
    %v1372 = vadd.f32 %v1091, %v1310
    %v1373 = vadd.f32 %v1092, %v1312
    %v1374 = vadd.f32 %v1093, %v1316
    %v1375 = vadd.f32 %v1094, %v1318
    %v1376 = vadd.f32 %v1095, %v1322
    %v1377 = vadd.f32 %v1096, %v1324
    %v1378 = vadd.f32 %v1097, %v1328
    %v1379 = vadd.f32 %v1098, %v1330
    %v1380 = vadd.f32 %v1099, %v1334
    %v1381 = vadd.f32 %v1100, %v1336
    %v1382 = vadd.f32 %v1101, %v1340
    %v1383 = vadd.f32 %v1102, %v1342
    %v1384 = vadd.f32 %v1103, %v1346
    %v1385 = vadd.f32 %v1104, %v1348
    %v1386 = vadd.f32 %v1105, %v1352
    %v1387 = vadd.f32 %v1106, %v1354
    %1388 = vmatprep.subr.mxu0 %v91
    %1389 = vmatpush1.msra.mxu0 %v90
    %1390 = vmatprep.subr.mxu0 %v93
    %1391 = vmatpush1.msra.mxu0 %v92
    %1392 = vmatprep.subr.mxu0 %v95
    %1393 = vmatpush1.msra.mxu0 %v94
    %1394 = vmatprep.subr.mxu0 %v152
    %1395 = vmatpush1.msra.mxu0 %v149
    %1396 = vmatprep.subr.mxu0 0.0
    %1397 = vmatpush1.msra.mxu0 0.0
    %1398 = vmatprep.subr.mxu0 0.0
    %1399 = vmatpush1.msra.mxu0 0.0
    %1400 = vmatprep.subr.mxu0 0.0
    %1401 = vmatpush1.msra.mxu0 0.0
    %1402 = vmatprep.subr.mxu0 0.0
    %1403 = vmatpush1.msra.mxu0 0.0
    %1404 = vmatprep.subr.mxu0 0.0
    %1405 = vmatpush1.msra.mxu0 0.0
    %1406 = vmatprep.subr.mxu0 0.0
    %1407 = vmatpush1.msra.mxu0 0.0
    %1408 = vmatprep.subr.mxu0 0.0
    %1409 = vmatpush1.msra.mxu0 0.0
    %1410 = vmatprep.subr.mxu0 0.0
    %1411 = vmatpush1.msra.mxu0 0.0
    %1412 = vmatprep.subr.mxu0 0.0
    %1413 = vmatpush1.msra.mxu0 0.0
    %1414 = vmatprep.subr.mxu0 0.0
    %1415 = vmatpush1.msra.mxu0 0.0
    %1416 = vmatprep.subr.mxu0 0.0
    %1417 = vmatpush1.msra.mxu0 0.0
    %1418 = vmatprep.subr.mxu0 0.0
    %1419 = vmatpush1.msra.mxu0 0.0
    %1420 = vmatprep.subr.mxu0 0.0
    %1421 = vmatpush1.msra.mxu0 0.0
    %1422 = vmatprep.subr.mxu0 0.0
    %1423 = vmatpush1.msra.mxu0 0.0
    %1424 = vmatprep.subr.mxu0 0.0
    %1425 = vmatpush1.msra.mxu0 0.0
    %1426 = vmatprep.subr.mxu0 0.0
    %1427 = vmatpush1.msra.mxu0 0.0
    %1428 = vmatprep.subr.mxu0 0.0
    %1429 = vmatpush1.msra.mxu0 0.0
    %1430 = vmatprep.subr.mxu0 0.0
    %1431 = vmatpush1.msra.mxu0 0.0
    %1432 = vmatprep.subr.mxu0 0.0
    %1433 = vmatpush1.msra.mxu0 0.0
    %1434 = vmatprep.subr.mxu0 0.0
    %1435 = vmatpush1.msra.mxu0 0.0
    %1436 = vmatprep.subr.mxu0 0.0
    %1437 = vmatpush1.msra.mxu0 0.0
    %1438 = vmatprep.subr.mxu0 0.0
    %1439 = vmatpush1.msra.mxu0 0.0
    %1440 = vmatprep.subr.mxu0 0.0
    %1441 = vmatpush1.msra.mxu0 0.0
    %1442 = vmatprep.subr.mxu0 0.0
    %1443 = vmatpush1.msra.mxu0 0.0
    %1444 = vmatprep.subr.mxu0 0.0
    %1445 = vmatpush1.msra.mxu0 0.0
    %1446 = vmatprep.subr.mxu0 0.0
    %1447 = vmatpush1.msra.mxu0 0.0
    %1448 = vmatprep.subr.mxu0 0.0
    %1449 = vmatpush1.msra.mxu0 0.0
    %1450 = vmatprep.subr.mxu0 0.0
    %1451 = vmatpush1.msra.mxu0 0.0
    %1452 = vmatprep.mubr.f32.mxu0 0.0
    %1453 = vmatmul.mubr.f32.gmra.mrb[0].mxu0 %v588
    %v1454 = vpop.f32.mrb[0].mxu0
    %v1455 = vadd.f32 0.0, %v1454
    %v1456 = vpop.f32.mrb[0].mxu0
    %v1457 = vadd.f32 0.0, %v1456
    %1458 = vmatprep.mubr.f32.mxu0 0.0
    %1459 = vmatmul.mubr.f32.gmra.mrb[0].mxu0 %v590
    %v1460 = vpop.f32.mrb[0].mxu0
    %v1461 = vadd.f32 0.0, %v1460
    %v1462 = vpop.f32.mrb[0].mxu0
    %v1463 = vadd.f32 0.0, %v1462
    %1464 = vmatprep.mubr.f32.mxu0 0.0
    %1465 = vmatmul.mubr.f32.gmra.mrb[0].mxu0 %v592
    %v1466 = vpop.f32.mrb[0].mxu0
    %v1467 = vadd.f32 0.0, %v1466
    %v1468 = vpop.f32.mrb[0].mxu0
    %v1469 = vadd.f32 0.0, %v1468
    %1470 = vmatprep.mubr.f32.mxu0 0.0
    %1471 = vmatmul.mubr.f32.gmra.mrb[0].mxu0 %v594
    %v1472 = vpop.f32.mrb[0].mxu0
    %v1473 = vadd.f32 0.0, %v1472
    %v1474 = vpop.f32.mrb[0].mxu0
    %v1475 = vadd.f32 0.0, %v1474
    %1476 = vmatprep.mubr.f32.mxu0 0.0
    %1477 = vmatmul.mubr.f32.gmra.mrb[0].mxu0 %v596
    %v1478 = vpop.f32.mrb[0].mxu0
    %v1479 = vadd.f32 0.0, %v1478
    %v1480 = vpop.f32.mrb[0].mxu0
    %v1481 = vadd.f32 0.0, %v1480
    %1482 = vmatprep.mubr.f32.mxu0 0.0
    %1483 = vmatmul.mubr.f32.gmra.mrb[0].mxu0 %v598
    %v1484 = vpop.f32.mrb[0].mxu0
    %v1485 = vadd.f32 0.0, %v1484
    %v1486 = vpop.f32.mrb[0].mxu0
    %v1487 = vadd.f32 0.0, %v1486
    %1488 = vmatprep.mubr.f32.mxu0 0.0
    %1489 = vmatmul.mubr.f32.gmra.mrb[0].mxu0 %v600
    %v1490 = vpop.f32.mrb[0].mxu0
    %v1491 = vadd.f32 0.0, %v1490
    %v1492 = vpop.f32.mrb[0].mxu0
    %v1493 = vadd.f32 0.0, %v1492
    %1494 = vmatprep.mubr.f32.mxu0 0.0
    %1495 = vmatmul.mubr.f32.gmra.mrb[0].mxu0 %v602
    %v1496 = vpop.f32.mrb[0].mxu0
    %v1497 = vadd.f32 0.0, %v1496
    %v1498 = vpop.f32.mrb[0].mxu0
    %v1499 = vadd.f32 0.0, %v1498
    %1500 = vmatprep.mubr.f32.mxu0 0.0
    %1501 = vmatmul.mubr.f32.gmra.mrb[0].mxu0 %v604
    %v1502 = vpop.f32.mrb[0].mxu0
    %v1503 = vadd.f32 0.0, %v1502
    %v1504 = vpop.f32.mrb[0].mxu0
    %v1505 = vadd.f32 0.0, %v1504
    %1506 = vmatprep.mubr.f32.mxu0 0.0
    %1507 = vmatmul.mubr.f32.gmra.mrb[0].mxu0 %v606
    %v1508 = vpop.f32.mrb[0].mxu0
    %v1509 = vadd.f32 0.0, %v1508
    %v1510 = vpop.f32.mrb[0].mxu0
    %v1511 = vadd.f32 0.0, %v1510
    %1512 = vmatprep.mubr.f32.mxu0 0.0
    %1513 = vmatmul.mubr.f32.gmra.mrb[0].mxu0 %v608
    %v1514 = vpop.f32.mrb[0].mxu0
    %v1515 = vadd.f32 0.0, %v1514
    %v1516 = vpop.f32.mrb[0].mxu0
    %v1517 = vadd.f32 0.0, %v1516
    %1518 = vmatprep.mubr.f32.mxu0 0.0
    %1519 = vmatmul.mubr.f32.gmra.mrb[0].mxu0 %v610
    %v1520 = vpop.f32.mrb[0].mxu0
    %v1521 = vadd.f32 0.0, %v1520
    %v1522 = vpop.f32.mrb[0].mxu0
    %v1523 = vadd.f32 0.0, %v1522
    %1524 = vmatprep.mubr.f32.mxu0 0.0
    %1525 = vmatmul.mubr.f32.gmra.mrb[0].mxu0 %v612
    %v1526 = vpop.f32.mrb[0].mxu0
    %v1527 = vadd.f32 0.0, %v1526
    %v1528 = vpop.f32.mrb[0].mxu0
    %v1529 = vadd.f32 0.0, %v1528
    %1530 = vmatprep.mubr.f32.mxu0 0.0
    %1531 = vmatmul.mubr.f32.gmra.mrb[0].mxu0 %v614
    %v1532 = vpop.f32.mrb[0].mxu0
    %v1533 = vadd.f32 0.0, %v1532
    %v1534 = vpop.f32.mrb[0].mxu0
    %v1535 = vadd.f32 0.0, %v1534
    %1536 = vmatprep.mubr.f32.mxu0 0.0
    %1537 = vmatmul.mubr.f32.gmra.mrb[0].mxu0 %v616
    %v1538 = vpop.f32.mrb[0].mxu0
    %v1539 = vadd.f32 0.0, %v1538
    %v1540 = vpop.f32.mrb[0].mxu0
    %v1541 = vadd.f32 0.0, %v1540
    %1542 = vmatprep.mubr.f32.mxu0 0.0
    %1543 = vmatmul.mubr.f32.gmra.mrb[0].mxu0 %v618
    %v1544 = vpop.f32.mrb[0].mxu0
    %v1545 = vadd.f32 0.0, %v1544
    %v1546 = vpop.f32.mrb[0].mxu0
    %v1547 = vadd.f32 0.0, %v1546
    %1548 = vdwg.mxu0
    %1549 = vmatprep.subr.mxu0 %v82
    %1550 = vmatpush1.msra.mxu0 %v81
    %1551 = vmatprep.subr.mxu0 %v84
    %1552 = vmatpush1.msra.mxu0 %v83
    %1553 = vmatprep.subr.mxu0 %v86
    %1554 = vmatpush1.msra.mxu0 %v85
    %1555 = vmatprep.subr.mxu0 %v367
    %1556 = vmatpush1.msra.mxu0 %v364
    %1557 = vmatprep.subr.mxu0 0.0
    %1558 = vmatpush1.msra.mxu0 0.0
    %1559 = vmatprep.subr.mxu0 0.0
    %1560 = vmatpush1.msra.mxu0 0.0
    %1561 = vmatprep.subr.mxu0 0.0
    %1562 = vmatpush1.msra.mxu0 0.0
    %1563 = vmatprep.subr.mxu0 0.0
    %1564 = vmatpush1.msra.mxu0 0.0
    %1565 = vmatprep.subr.mxu0 0.0
    %1566 = vmatpush1.msra.mxu0 0.0
    %1567 = vmatprep.subr.mxu0 0.0
    %1568 = vmatpush1.msra.mxu0 0.0
    %1569 = vmatprep.subr.mxu0 0.0
    %1570 = vmatpush1.msra.mxu0 0.0
    %1571 = vmatprep.subr.mxu0 0.0
    %1572 = vmatpush1.msra.mxu0 0.0
    %1573 = vmatprep.subr.mxu0 0.0
    %1574 = vmatpush1.msra.mxu0 0.0
    %1575 = vmatprep.subr.mxu0 0.0
    %1576 = vmatpush1.msra.mxu0 0.0
    %1577 = vmatprep.subr.mxu0 0.0
    %1578 = vmatpush1.msra.mxu0 0.0
    %1579 = vmatprep.subr.mxu0 0.0
    %1580 = vmatpush1.msra.mxu0 0.0
    %1581 = vmatprep.subr.mxu0 0.0
    %1582 = vmatpush1.msra.mxu0 0.0
    %1583 = vmatprep.subr.mxu0 0.0
    %1584 = vmatpush1.msra.mxu0 0.0
    %1585 = vmatprep.subr.mxu0 0.0
    %1586 = vmatpush1.msra.mxu0 0.0
    %1587 = vmatprep.subr.mxu0 0.0
    %1588 = vmatpush1.msra.mxu0 0.0
    %1589 = vmatprep.subr.mxu0 0.0
    %1590 = vmatpush1.msra.mxu0 0.0
    %1591 = vmatprep.subr.mxu0 0.0
    %1592 = vmatpush1.msra.mxu0 0.0
    %1593 = vmatprep.subr.mxu0 0.0
    %1594 = vmatpush1.msra.mxu0 0.0
    %1595 = vmatprep.subr.mxu0 0.0
    %1596 = vmatpush1.msra.mxu0 0.0
    %1597 = vmatprep.subr.mxu0 0.0
    %1598 = vmatpush1.msra.mxu0 0.0
    %1599 = vmatprep.subr.mxu0 0.0
    %1600 = vmatpush1.msra.mxu0 0.0
    %1601 = vmatprep.subr.mxu0 0.0
    %1602 = vmatpush1.msra.mxu0 0.0
    %1603 = vmatprep.subr.mxu0 0.0
    %1604 = vmatpush1.msra.mxu0 0.0
    %1605 = vmatprep.subr.mxu0 0.0
    %1606 = vmatpush1.msra.mxu0 0.0
    %1607 = vmatprep.subr.mxu0 0.0
    %1608 = vmatpush1.msra.mxu0 0.0
    %1609 = vmatprep.subr.mxu0 0.0
    %1610 = vmatpush1.msra.mxu0 0.0
    %1611 = vmatprep.subr.mxu0 0.0
    %1612 = vmatpush1.msra.mxu0 0.0
    %1613 = vmatprep.mubr.f32.mxu0 0.0
    %1614 = vmatmul.mubr.f32.gmra.mrb[0].mxu0 %v100
    %v1615 = vpop.f32.mrb[0].mxu0
    %v1616 = vadd.f32 %v1455, %v1615
    %v1617 = vpop.f32.mrb[0].mxu0
    %v1618 = vadd.f32 %v1457, %v1617
    %1619 = vmatprep.mubr.f32.mxu0 0.0
    %1620 = vmatmul.mubr.f32.gmra.mrb[0].mxu0 %v103
    %v1621 = vpop.f32.mrb[0].mxu0
    %v1622 = vadd.f32 %v1461, %v1621
    %v1623 = vpop.f32.mrb[0].mxu0
    %v1624 = vadd.f32 %v1463, %v1623
    %1625 = vmatprep.mubr.f32.mxu0 0.0
    %1626 = vmatmul.mubr.f32.gmra.mrb[0].mxu0 %v106
    %v1627 = vpop.f32.mrb[0].mxu0
    %v1628 = vadd.f32 %v1467, %v1627
    %v1629 = vpop.f32.mrb[0].mxu0
    %v1630 = vadd.f32 %v1469, %v1629
    %1631 = vmatprep.mubr.f32.mxu0 0.0
    %1632 = vmatmul.mubr.f32.gmra.mrb[0].mxu0 %v109
    %v1633 = vpop.f32.mrb[0].mxu0
    %v1634 = vadd.f32 %v1473, %v1633
    %v1635 = vpop.f32.mrb[0].mxu0
    %v1636 = vadd.f32 %v1475, %v1635
    %1637 = vmatprep.mubr.f32.mxu0 0.0
    %1638 = vmatmul.mubr.f32.gmra.mrb[0].mxu0 %v112
    %v1639 = vpop.f32.mrb[0].mxu0
    %v1640 = vadd.f32 %v1479, %v1639
    %v1641 = vpop.f32.mrb[0].mxu0
    %v1642 = vadd.f32 %v1481, %v1641
    %1643 = vmatprep.mubr.f32.mxu0 0.0
    %1644 = vmatmul.mubr.f32.gmra.mrb[0].mxu0 %v115
    %v1645 = vpop.f32.mrb[0].mxu0
    %v1646 = vadd.f32 %v1485, %v1645
    %v1647 = vpop.f32.mrb[0].mxu0
    %v1648 = vadd.f32 %v1487, %v1647
    %1649 = vmatprep.mubr.f32.mxu0 0.0
    %1650 = vmatmul.mubr.f32.gmra.mrb[0].mxu0 %v118
    %v1651 = vpop.f32.mrb[0].mxu0
    %v1652 = vadd.f32 %v1491, %v1651
    %v1653 = vpop.f32.mrb[0].mxu0
    %v1654 = vadd.f32 %v1493, %v1653
    %1655 = vmatprep.mubr.f32.mxu0 0.0
    %1656 = vmatmul.mubr.f32.gmra.mrb[0].mxu0 %v121
    %v1657 = vpop.f32.mrb[0].mxu0
    %v1658 = vadd.f32 %v1497, %v1657
    %v1659 = vpop.f32.mrb[0].mxu0
    %v1660 = vadd.f32 %v1499, %v1659
    %1661 = vmatprep.mubr.f32.mxu0 0.0
    %1662 = vmatmul.mubr.f32.gmra.mrb[0].mxu0 %v124
    %v1663 = vpop.f32.mrb[0].mxu0
    %v1664 = vadd.f32 %v1503, %v1663
    %v1665 = vpop.f32.mrb[0].mxu0
    %v1666 = vadd.f32 %v1505, %v1665
    %1667 = vmatprep.mubr.f32.mxu0 0.0
    %1668 = vmatmul.mubr.f32.gmra.mrb[0].mxu0 %v127
    %v1669 = vpop.f32.mrb[0].mxu0
    %v1670 = vadd.f32 %v1509, %v1669
    %v1671 = vpop.f32.mrb[0].mxu0
    %v1672 = vadd.f32 %v1511, %v1671
    %1673 = vmatprep.mubr.f32.mxu0 0.0
    %1674 = vmatmul.mubr.f32.gmra.mrb[0].mxu0 %v130
    %v1675 = vpop.f32.mrb[0].mxu0
    %v1676 = vadd.f32 %v1515, %v1675
    %v1677 = vpop.f32.mrb[0].mxu0
    %v1678 = vadd.f32 %v1517, %v1677
    %1679 = vmatprep.mubr.f32.mxu0 0.0
    %1680 = vmatmul.mubr.f32.gmra.mrb[0].mxu0 %v133
    %v1681 = vpop.f32.mrb[0].mxu0
    %v1682 = vadd.f32 %v1521, %v1681
    %v1683 = vpop.f32.mrb[0].mxu0
    %v1684 = vadd.f32 %v1523, %v1683
    %1685 = vmatprep.mubr.f32.mxu0 0.0
    %1686 = vmatmul.mubr.f32.gmra.mrb[0].mxu0 %v136
    %v1687 = vpop.f32.mrb[0].mxu0
    %v1688 = vadd.f32 %v1527, %v1687
    %v1689 = vpop.f32.mrb[0].mxu0
    %v1690 = vadd.f32 %v1529, %v1689
    %1691 = vmatprep.mubr.f32.mxu0 0.0
    %1692 = vmatmul.mubr.f32.gmra.mrb[0].mxu0 %v139
    %v1693 = vpop.f32.mrb[0].mxu0
    %v1694 = vadd.f32 %v1533, %v1693
    %v1695 = vpop.f32.mrb[0].mxu0
    %v1696 = vadd.f32 %v1535, %v1695
    %1697 = vmatprep.mubr.f32.mxu0 0.0
    %1698 = vmatmul.mubr.f32.gmra.mrb[0].mxu0 %v142
    %v1699 = vpop.f32.mrb[0].mxu0
    %v1700 = vadd.f32 %v1539, %v1699
    %v1701 = vpop.f32.mrb[0].mxu0
    %v1702 = vadd.f32 %v1541, %v1701
    %1703 = vmatprep.mubr.f32.mxu0 0.0
    %1704 = vmatmul.mubr.f32.gmra.mrb[0].mxu0 %v145
    %v1705 = vpop.f32.mrb[0].mxu0
    %v1706 = vadd.f32 %v1545, %v1705
    %v1707 = vpop.f32.mrb[0].mxu0
    %v1708 = vadd.f32 %v1547, %v1707
    %1709 = vdwg.mxu0
    %1710 = vmatprep.subr.mxu0 %v581
    %1711 = vmatpush1.msra.mxu0 %v580
    %1712 = vmatprep.subr.mxu0 %v583
    %1713 = vmatpush1.msra.mxu0 %v582
    %1714 = vmatprep.subr.mxu0 %v585
    %1715 = vmatpush1.msra.mxu0 %v584
    %1716 = vmatprep.subr.mxu0 %v624
    %1717 = vmatpush1.msra.mxu0 %v621
    %1718 = vmatprep.subr.mxu0 0.0
    %1719 = vmatpush1.msra.mxu0 0.0
    %1720 = vmatprep.subr.mxu0 0.0
    %1721 = vmatpush1.msra.mxu0 0.0
    %1722 = vmatprep.subr.mxu0 0.0
    %1723 = vmatpush1.msra.mxu0 0.0
    %1724 = vmatprep.subr.mxu0 0.0
    %1725 = vmatpush1.msra.mxu0 0.0
    %1726 = vmatprep.subr.mxu0 0.0
    %1727 = vmatpush1.msra.mxu0 0.0
    %1728 = vmatprep.subr.mxu0 0.0
    %1729 = vmatpush1.msra.mxu0 0.0
    %1730 = vmatprep.subr.mxu0 0.0
    %1731 = vmatpush1.msra.mxu0 0.0
    %1732 = vmatprep.subr.mxu0 0.0
    %1733 = vmatpush1.msra.mxu0 0.0
    %1734 = vmatprep.subr.mxu0 0.0
    %1735 = vmatpush1.msra.mxu0 0.0
    %1736 = vmatprep.subr.mxu0 0.0
    %1737 = vmatpush1.msra.mxu0 0.0
    %1738 = vmatprep.subr.mxu0 0.0
    %1739 = vmatpush1.msra.mxu0 0.0
    %1740 = vmatprep.subr.mxu0 0.0
    %1741 = vmatpush1.msra.mxu0 0.0
    %1742 = vmatprep.subr.mxu0 0.0
    %1743 = vmatpush1.msra.mxu0 0.0
    %1744 = vmatprep.subr.mxu0 0.0
    %1745 = vmatpush1.msra.mxu0 0.0
    %1746 = vmatprep.subr.mxu0 0.0
    %1747 = vmatpush1.msra.mxu0 0.0
    %1748 = vmatprep.subr.mxu0 0.0
    %1749 = vmatpush1.msra.mxu0 0.0
    %1750 = vmatprep.subr.mxu0 0.0
    %1751 = vmatpush1.msra.mxu0 0.0
    %1752 = vmatprep.subr.mxu0 0.0
    %1753 = vmatpush1.msra.mxu0 0.0
    %1754 = vmatprep.subr.mxu0 0.0
    %1755 = vmatpush1.msra.mxu0 0.0
    %1756 = vmatprep.subr.mxu0 0.0
    %1757 = vmatpush1.msra.mxu0 0.0
    %1758 = vmatprep.subr.mxu0 0.0
    %1759 = vmatpush1.msra.mxu0 0.0
    %1760 = vmatprep.subr.mxu0 0.0
    %1761 = vmatpush1.msra.mxu0 0.0
    %1762 = vmatprep.subr.mxu0 0.0
    %1763 = vmatpush1.msra.mxu0 0.0
    %1764 = vmatprep.subr.mxu0 0.0
    %1765 = vmatpush1.msra.mxu0 0.0
    %1766 = vmatprep.subr.mxu0 0.0
    %1767 = vmatpush1.msra.mxu0 0.0
    %1768 = vmatprep.subr.mxu0 0.0
    %1769 = vmatpush1.msra.mxu0 0.0
    %1770 = vmatprep.subr.mxu0 0.0
    %1771 = vmatpush1.msra.mxu0 0.0
    %1772 = vmatprep.subr.mxu0 0.0
    %1773 = vmatpush1.msra.mxu0 0.0
    %1774 = vmatprep.mubr.f32.mxu0 0.0
    %1775 = vmatmul.mubr.f32.gmra.mrb[0].mxu0 %v876
    %v1776 = vpop.f32.mrb[0].mxu0
    %v1777 = vadd.f32 0.0, %v1776
    %v1778 = vpop.f32.mrb[0].mxu0
    %v1779 = vadd.f32 0.0, %v1778
    %1780 = vmatprep.mubr.f32.mxu0 0.0
    %1781 = vmatmul.mubr.f32.gmra.mrb[0].mxu0 %v878
    %v1782 = vpop.f32.mrb[0].mxu0
    %v1783 = vadd.f32 0.0, %v1782
    %v1784 = vpop.f32.mrb[0].mxu0
    %v1785 = vadd.f32 0.0, %v1784
    %1786 = vmatprep.mubr.f32.mxu0 0.0
    %1787 = vmatmul.mubr.f32.gmra.mrb[0].mxu0 %v880
    %v1788 = vpop.f32.mrb[0].mxu0
    %v1789 = vadd.f32 0.0, %v1788
    %v1790 = vpop.f32.mrb[0].mxu0
    %v1791 = vadd.f32 0.0, %v1790
    %1792 = vmatprep.mubr.f32.mxu0 0.0
    %1793 = vmatmul.mubr.f32.gmra.mrb[0].mxu0 %v882
    %v1794 = vpop.f32.mrb[0].mxu0
    %v1795 = vadd.f32 0.0, %v1794
    %v1796 = vpop.f32.mrb[0].mxu0
    %v1797 = vadd.f32 0.0, %v1796
    %1798 = vmatprep.mubr.f32.mxu0 0.0
    %1799 = vmatmul.mubr.f32.gmra.mrb[0].mxu0 %v884
    %v1800 = vpop.f32.mrb[0].mxu0
    %v1801 = vadd.f32 0.0, %v1800
    %v1802 = vpop.f32.mrb[0].mxu0
    %v1803 = vadd.f32 0.0, %v1802
    %1804 = vmatprep.mubr.f32.mxu0 0.0
    %1805 = vmatmul.mubr.f32.gmra.mrb[0].mxu0 %v886
    %v1806 = vpop.f32.mrb[0].mxu0
    %v1807 = vadd.f32 0.0, %v1806
    %v1808 = vpop.f32.mrb[0].mxu0
    %v1809 = vadd.f32 0.0, %v1808
    %1810 = vmatprep.mubr.f32.mxu0 0.0
    %1811 = vmatmul.mubr.f32.gmra.mrb[0].mxu0 %v888
    %v1812 = vpop.f32.mrb[0].mxu0
    %v1813 = vadd.f32 0.0, %v1812
    %v1814 = vpop.f32.mrb[0].mxu0
    %v1815 = vadd.f32 0.0, %v1814
    %1816 = vmatprep.mubr.f32.mxu0 0.0
    %1817 = vmatmul.mubr.f32.gmra.mrb[0].mxu0 %v890
    %v1818 = vpop.f32.mrb[0].mxu0
    %v1819 = vadd.f32 0.0, %v1818
    %v1820 = vpop.f32.mrb[0].mxu0
    %v1821 = vadd.f32 0.0, %v1820
    %1822 = vmatprep.mubr.f32.mxu0 0.0
    %1823 = vmatmul.mubr.f32.gmra.mrb[0].mxu0 %v892
    %v1824 = vpop.f32.mrb[0].mxu0
    %v1825 = vadd.f32 0.0, %v1824
    %v1826 = vpop.f32.mrb[0].mxu0
    %v1827 = vadd.f32 0.0, %v1826
    %1828 = vmatprep.mubr.f32.mxu0 0.0
    %1829 = vmatmul.mubr.f32.gmra.mrb[0].mxu0 %v894
    %v1830 = vpop.f32.mrb[0].mxu0
    %v1831 = vadd.f32 0.0, %v1830
    %v1832 = vpop.f32.mrb[0].mxu0
    %v1833 = vadd.f32 0.0, %v1832
    %1834 = vmatprep.mubr.f32.mxu0 0.0
    %1835 = vmatmul.mubr.f32.gmra.mrb[0].mxu0 %v896
    %v1836 = vpop.f32.mrb[0].mxu0
    %v1837 = vadd.f32 0.0, %v1836
    %v1838 = vpop.f32.mrb[0].mxu0
    %v1839 = vadd.f32 0.0, %v1838
    %1840 = vmatprep.mubr.f32.mxu0 0.0
    %1841 = vmatmul.mubr.f32.gmra.mrb[0].mxu0 %v898
    %v1842 = vpop.f32.mrb[0].mxu0
    %v1843 = vadd.f32 0.0, %v1842
    %v1844 = vpop.f32.mrb[0].mxu0
    %v1845 = vadd.f32 0.0, %v1844
    %1846 = vmatprep.mubr.f32.mxu0 0.0
    %1847 = vmatmul.mubr.f32.gmra.mrb[0].mxu0 %v900
    %v1848 = vpop.f32.mrb[0].mxu0
    %v1849 = vadd.f32 0.0, %v1848
    %v1850 = vpop.f32.mrb[0].mxu0
    %v1851 = vadd.f32 0.0, %v1850
    %1852 = vmatprep.mubr.f32.mxu0 0.0
    %1853 = vmatmul.mubr.f32.gmra.mrb[0].mxu0 %v902
    %v1854 = vpop.f32.mrb[0].mxu0
    %v1855 = vadd.f32 0.0, %v1854
    %v1856 = vpop.f32.mrb[0].mxu0
    %v1857 = vadd.f32 0.0, %v1856
    %1858 = vmatprep.mubr.f32.mxu0 0.0
    %1859 = vmatmul.mubr.f32.gmra.mrb[0].mxu0 %v904
    %v1860 = vpop.f32.mrb[0].mxu0
    %v1861 = vadd.f32 0.0, %v1860
    %v1862 = vpop.f32.mrb[0].mxu0
    %v1863 = vadd.f32 0.0, %v1862
    %1864 = vmatprep.mubr.f32.mxu0 0.0
    %1865 = vmatmul.mubr.f32.gmra.mrb[0].mxu0 %v906
    %v1866 = vpop.f32.mrb[0].mxu0
    %v1867 = vadd.f32 0.0, %v1866
    %v1868 = vpop.f32.mrb[0].mxu0
    %v1869 = vadd.f32 0.0, %v1868
    %1870 = vdwg.mxu0
    %v1871 = vadd.f32 %v1616, %v1777
    %v1872 = vadd.f32 %v1618, %v1779
    %v1873 = vadd.f32 %v1622, %v1783
    %v1874 = vadd.f32 %v1624, %v1785
    %v1875 = vadd.f32 %v1628, %v1789
    %v1876 = vadd.f32 %v1630, %v1791
    %v1877 = vadd.f32 %v1634, %v1795
    %v1878 = vadd.f32 %v1636, %v1797
    %v1879 = vadd.f32 %v1640, %v1801
    %v1880 = vadd.f32 %v1642, %v1803
    %v1881 = vadd.f32 %v1646, %v1807
    %v1882 = vadd.f32 %v1648, %v1809
    %v1883 = vadd.f32 %v1652, %v1813
    %v1884 = vadd.f32 %v1654, %v1815
    %v1885 = vadd.f32 %v1658, %v1819
    %v1886 = vadd.f32 %v1660, %v1821
    %v1887 = vadd.f32 %v1664, %v1825
    %v1888 = vadd.f32 %v1666, %v1827
    %v1889 = vadd.f32 %v1670, %v1831
    %v1890 = vadd.f32 %v1672, %v1833
    %v1891 = vadd.f32 %v1676, %v1837
    %v1892 = vadd.f32 %v1678, %v1839
    %v1893 = vadd.f32 %v1682, %v1843
    %v1894 = vadd.f32 %v1684, %v1845
    %v1895 = vadd.f32 %v1688, %v1849
    %v1896 = vadd.f32 %v1690, %v1851
    %v1897 = vadd.f32 %v1694, %v1855
    %v1898 = vadd.f32 %v1696, %v1857
    %v1899 = vadd.f32 %v1700, %v1861
    %v1900 = vadd.f32 %v1702, %v1863
    %v1901 = vadd.f32 %v1706, %v1867
    %v1902 = vadd.f32 %v1708, %v1869
    %1903 = vmatprep.subr.mxu0 %v869
    %1904 = vmatpush1.msra.mxu0 %v868
    %1905 = vmatprep.subr.mxu0 %v871
    %1906 = vmatpush1.msra.mxu0 %v870
    %1907 = vmatprep.subr.mxu0 %v873
    %1908 = vmatpush1.msra.mxu0 %v872
    %1909 = vmatprep.subr.mxu0 %v912
    %1910 = vmatpush1.msra.mxu0 %v909
    %1911 = vmatprep.subr.mxu0 0.0
    %1912 = vmatpush1.msra.mxu0 0.0
    %1913 = vmatprep.subr.mxu0 0.0
    %1914 = vmatpush1.msra.mxu0 0.0
    %1915 = vmatprep.subr.mxu0 0.0
    %1916 = vmatpush1.msra.mxu0 0.0
    %1917 = vmatprep.subr.mxu0 0.0
    %1918 = vmatpush1.msra.mxu0 0.0
    %1919 = vmatprep.subr.mxu0 0.0
    %1920 = vmatpush1.msra.mxu0 0.0
    %1921 = vmatprep.subr.mxu0 0.0
    %1922 = vmatpush1.msra.mxu0 0.0
    %1923 = vmatprep.subr.mxu0 0.0
    %1924 = vmatpush1.msra.mxu0 0.0
    %1925 = vmatprep.subr.mxu0 0.0
    %1926 = vmatpush1.msra.mxu0 0.0
    %1927 = vmatprep.subr.mxu0 0.0
    %1928 = vmatpush1.msra.mxu0 0.0
    %1929 = vmatprep.subr.mxu0 0.0
    %1930 = vmatpush1.msra.mxu0 0.0
    %1931 = vmatprep.subr.mxu0 0.0
    %1932 = vmatpush1.msra.mxu0 0.0
    %1933 = vmatprep.subr.mxu0 0.0
    %1934 = vmatpush1.msra.mxu0 0.0
    %1935 = vmatprep.subr.mxu0 0.0
    %1936 = vmatpush1.msra.mxu0 0.0
    %1937 = vmatprep.subr.mxu0 0.0
    %1938 = vmatpush1.msra.mxu0 0.0
    %1939 = vmatprep.subr.mxu0 0.0
    %1940 = vmatpush1.msra.mxu0 0.0
    %1941 = vmatprep.subr.mxu0 0.0
    %1942 = vmatpush1.msra.mxu0 0.0
    %1943 = vmatprep.subr.mxu0 0.0
    %1944 = vmatpush1.msra.mxu0 0.0
    %1945 = vmatprep.subr.mxu0 0.0
    %1946 = vmatpush1.msra.mxu0 0.0
    %1947 = vmatprep.subr.mxu0 0.0
    %1948 = vmatpush1.msra.mxu0 0.0
    %1949 = vmatprep.subr.mxu0 0.0
    %1950 = vmatpush1.msra.mxu0 0.0
    %1951 = vmatprep.subr.mxu0 0.0
    %1952 = vmatpush1.msra.mxu0 0.0
    %1953 = vmatprep.subr.mxu0 0.0
    %1954 = vmatpush1.msra.mxu0 0.0
    %1955 = vmatprep.subr.mxu0 0.0
    %1956 = vmatpush1.msra.mxu0 0.0
    %1957 = vmatprep.subr.mxu0 0.0
    %1958 = vmatpush1.msra.mxu0 0.0
    %1959 = vmatprep.subr.mxu0 0.0
    %1960 = vmatpush1.msra.mxu0 0.0
    %1961 = vmatprep.subr.mxu0 0.0
    %1962 = vmatpush1.msra.mxu0 0.0
    %1963 = vmatprep.subr.mxu0 0.0
    %1964 = vmatpush1.msra.mxu0 0.0
    %1965 = vmatprep.subr.mxu0 0.0
    %1966 = vmatpush1.msra.mxu0 0.0
    %1967 = vmatprep.mubr.f32.mxu0 0.0
    %1968 = vmatmul.mubr.f32.gmra.mrb[0].mxu0 %v1157
    %v1969 = vpop.f32.mrb[0].mxu0
    %v1970 = vadd.f32 0.0, %v1969
    %v1971 = vpop.f32.mrb[0].mxu0
    %v1972 = vadd.f32 0.0, %v1971
    %1973 = vmatprep.mubr.f32.mxu0 0.0
    %1974 = vmatmul.mubr.f32.gmra.mrb[0].mxu0 %v1159
    %v1975 = vpop.f32.mrb[0].mxu0
    %v1976 = vadd.f32 0.0, %v1975
    %v1977 = vpop.f32.mrb[0].mxu0
    %v1978 = vadd.f32 0.0, %v1977
    %1979 = vmatprep.mubr.f32.mxu0 0.0
    %1980 = vmatmul.mubr.f32.gmra.mrb[0].mxu0 %v1161
    %v1981 = vpop.f32.mrb[0].mxu0
    %v1982 = vadd.f32 0.0, %v1981
    %v1983 = vpop.f32.mrb[0].mxu0
    %v1984 = vadd.f32 0.0, %v1983
    %1985 = vmatprep.mubr.f32.mxu0 0.0
    %1986 = vmatmul.mubr.f32.gmra.mrb[0].mxu0 %v1163
    %v1987 = vpop.f32.mrb[0].mxu0
    %v1988 = vadd.f32 0.0, %v1987
    %v1989 = vpop.f32.mrb[0].mxu0
    %v1990 = vadd.f32 0.0, %v1989
    %1991 = vmatprep.mubr.f32.mxu0 0.0
    %1992 = vmatmul.mubr.f32.gmra.mrb[0].mxu0 %v1165
    %v1993 = vpop.f32.mrb[0].mxu0
    %v1994 = vadd.f32 0.0, %v1993
    %v1995 = vpop.f32.mrb[0].mxu0
    %v1996 = vadd.f32 0.0, %v1995
    %1997 = vmatprep.mubr.f32.mxu0 0.0
    %1998 = vmatmul.mubr.f32.gmra.mrb[0].mxu0 %v1167
    %v1999 = vpop.f32.mrb[0].mxu0
    %v2000 = vadd.f32 0.0, %v1999
    %v2001 = vpop.f32.mrb[0].mxu0
    %v2002 = vadd.f32 0.0, %v2001
    %2003 = vmatprep.mubr.f32.mxu0 0.0
    %2004 = vmatmul.mubr.f32.gmra.mrb[0].mxu0 %v1169
    %v2005 = vpop.f32.mrb[0].mxu0
    %v2006 = vadd.f32 0.0, %v2005
    %v2007 = vpop.f32.mrb[0].mxu0
    %v2008 = vadd.f32 0.0, %v2007
    %2009 = vmatprep.mubr.f32.mxu0 0.0
    %2010 = vmatmul.mubr.f32.gmra.mrb[0].mxu0 %v1171
    %v2011 = vpop.f32.mrb[0].mxu0
    %v2012 = vadd.f32 0.0, %v2011
    %v2013 = vpop.f32.mrb[0].mxu0
    %v2014 = vadd.f32 0.0, %v2013
    %2015 = vmatprep.mubr.f32.mxu0 0.0
    %2016 = vmatmul.mubr.f32.gmra.mrb[0].mxu0 %v1173
    %v2017 = vpop.f32.mrb[0].mxu0
    %v2018 = vadd.f32 0.0, %v2017
    %v2019 = vpop.f32.mrb[0].mxu0
    %v2020 = vadd.f32 0.0, %v2019
    %2021 = vmatprep.mubr.f32.mxu0 0.0
    %2022 = vmatmul.mubr.f32.gmra.mrb[0].mxu0 %v1175
    %v2023 = vpop.f32.mrb[0].mxu0
    %v2024 = vadd.f32 0.0, %v2023
    %v2025 = vpop.f32.mrb[0].mxu0
    %v2026 = vadd.f32 0.0, %v2025
    %2027 = vmatprep.mubr.f32.mxu0 0.0
    %2028 = vmatmul.mubr.f32.gmra.mrb[0].mxu0 %v1177
    %v2029 = vpop.f32.mrb[0].mxu0
    %v2030 = vadd.f32 0.0, %v2029
    %v2031 = vpop.f32.mrb[0].mxu0
    %v2032 = vadd.f32 0.0, %v2031
    %2033 = vmatprep.mubr.f32.mxu0 0.0
    %2034 = vmatmul.mubr.f32.gmra.mrb[0].mxu0 %v1179
    %v2035 = vpop.f32.mrb[0].mxu0
    %v2036 = vadd.f32 0.0, %v2035
    %v2037 = vpop.f32.mrb[0].mxu0
    %v2038 = vadd.f32 0.0, %v2037
    %2039 = vmatprep.mubr.f32.mxu0 0.0
    %2040 = vmatmul.mubr.f32.gmra.mrb[0].mxu0 %v1181
    %v2041 = vpop.f32.mrb[0].mxu0
    %v2042 = vadd.f32 0.0, %v2041
    %v2043 = vpop.f32.mrb[0].mxu0
    %v2044 = vadd.f32 0.0, %v2043
    %2045 = vmatprep.mubr.f32.mxu0 0.0
    %2046 = vmatmul.mubr.f32.gmra.mrb[0].mxu0 %v1183
    %v2047 = vpop.f32.mrb[0].mxu0
    %v2048 = vadd.f32 0.0, %v2047
    %v2049 = vpop.f32.mrb[0].mxu0
    %v2050 = vadd.f32 0.0, %v2049
    %2051 = vmatprep.mubr.f32.mxu0 0.0
    %2052 = vmatmul.mubr.f32.gmra.mrb[0].mxu0 %v1185
    %v2053 = vpop.f32.mrb[0].mxu0
    %v2054 = vadd.f32 0.0, %v2053
    %v2055 = vpop.f32.mrb[0].mxu0
    %v2056 = vadd.f32 0.0, %v2055
    %2057 = vmatprep.mubr.f32.mxu0 0.0
    %2058 = vmatmul.mubr.f32.gmra.mrb[0].mxu0 %v1187
    %v2059 = vpop.f32.mrb[0].mxu0
    %v2060 = vadd.f32 0.0, %v2059
    %v2061 = vpop.f32.mrb[0].mxu0
    %v2062 = vadd.f32 0.0, %v2061
    %2063 = vdwg.mxu0
    %v2064 = vadd.f32 %v1871, %v1970
    %v2065 = vadd.f32 %v1872, %v1972
    %v2066 = vadd.f32 %v1873, %v1976
    %v2067 = vadd.f32 %v1874, %v1978
    %v2068 = vadd.f32 %v1875, %v1982
    %v2069 = vadd.f32 %v1876, %v1984
    %v2070 = vadd.f32 %v1877, %v1988
    %v2071 = vadd.f32 %v1878, %v1990
    %v2072 = vadd.f32 %v1879, %v1994
    %v2073 = vadd.f32 %v1880, %v1996
    %v2074 = vadd.f32 %v1881, %v2000
    %v2075 = vadd.f32 %v1882, %v2002
    %v2076 = vadd.f32 %v1883, %v2006
    %v2077 = vadd.f32 %v1884, %v2008
    %v2078 = vadd.f32 %v1885, %v2012
    %v2079 = vadd.f32 %v1886, %v2014
    %v2080 = vadd.f32 %v1887, %v2018
    %v2081 = vadd.f32 %v1888, %v2020
    %v2082 = vadd.f32 %v1889, %v2024
    %v2083 = vadd.f32 %v1890, %v2026
    %v2084 = vadd.f32 %v1891, %v2030
    %v2085 = vadd.f32 %v1892, %v2032
    %v2086 = vadd.f32 %v1893, %v2036
    %v2087 = vadd.f32 %v1894, %v2038
    %v2088 = vadd.f32 %v1895, %v2042
    %v2089 = vadd.f32 %v1896, %v2044
    %v2090 = vadd.f32 %v1897, %v2048
    %v2091 = vadd.f32 %v1898, %v2050
    %v2092 = vadd.f32 %v1899, %v2054
    %v2093 = vadd.f32 %v1900, %v2056
    %v2094 = vadd.f32 %v1901, %v2060
    %v2095 = vadd.f32 %v1902, %v2062
    %v2096 = vrot.slane %v36, 2
    %v2097 = vrot.slane %v37, 2
    %v2098 = vsel %vm1107, %v2096, %v2097
    %v2099 = vrot.slane %v38, 2
    %v2100 = vsel %vm1107, %v2097, %v2099
    %v2101 = vrot.slane %v42, 2
    %v2102 = vrot.slane %v43, 2
    %v2103 = vsel %vm1107, %v2101, %v2102
    %v2104 = vrot.slane %v44, 2
    %v2105 = vsel %vm1107, %v2102, %v2104
    %v2106 = vrot.slane %v48, 2
    %v2107 = vrot.slane %v49, 2
    %v2108 = vsel %vm1107, %v2106, %v2107
    %v2109 = vrot.slane %v50, 2
    %v2110 = vsel %vm1107, %v2107, %v2109
    %v2111 = vrot.slane %v54, 2
    %v2112 = vrot.slane %v55, 2
    %v2113 = vsel %vm1107, %v2111, %v2112
    %v2114 = vrot.slane %v56, 2
    %v2115 = vsel %vm1107, %v2112, %v2114
    %v2116 = vrot.slane %v60, 2
    %v2117 = vrot.slane %v61, 2
    %v2118 = vsel %vm1107, %v2116, %v2117
    %v2119 = vrot.slane %v62, 2
    %v2120 = vsel %vm1107, %v2117, %v2119
    %v2121 = vrot.slane %v66, 2
    %v2122 = vrot.slane %v67, 2
    %v2123 = vsel %vm1107, %v2121, %v2122
    %v2124 = vrot.slane %v68, 2
    %v2125 = vsel %vm1107, %v2122, %v2124
    %v2126 = vrot.slane %v72, 2
    %v2127 = vrot.slane %v73, 2
    %v2128 = vsel %vm1107, %v2126, %v2127
    %v2129 = vrot.slane %v74, 2
    %v2130 = vsel %vm1107, %v2127, %v2129
    %v2131 = vrot.slane %v78, 2
    %v2132 = vrot.slane %v79, 2
    %v2133 = vsel %vm1107, %v2131, %v2132
    %v2134 = vrot.slane %v80, 2
    %v2135 = vsel %vm1107, %v2132, %v2134
    %v2136 = vsel %vm98, %v2098, 0
    %v2138 = vsel %vm98, %v2100, 0
    %v2140 = vsel %vm98, %v2103, 0
    %v2142 = vsel %vm98, %v2105, 0
    %v2144 = vsel %vm98, %v2108, 0
    %v2146 = vsel %vm98, %v2110, 0
    %v2148 = vsel %vm98, %v2113, 0
    %v2150 = vsel %vm98, %v2115, 0
    %v2152 = vsel %vm98, %v2118, 0
    %v2154 = vsel %vm98, %v2120, 0
    %v2156 = vsel %vm98, %v2123, 0
    %v2158 = vsel %vm98, %v2125, 0
    %v2160 = vsel %vm98, %v2128, 0
    %v2162 = vsel %vm98, %v2130, 0
    %v2164 = vsel %vm98, %v2133, 0
    %v2166 = vsel %vm98, %v2135, 0
    %2168 = vmatprep.subr.mxu0 %v1150
    %2169 = vmatpush1.msra.mxu0 %v1149
    %2170 = vmatprep.subr.mxu0 %v1152
    %2171 = vmatpush1.msra.mxu0 %v1151
    %2172 = vmatprep.subr.mxu0 %v1154
    %2173 = vmatpush1.msra.mxu0 %v1153
    %2174 = vmatprep.subr.mxu0 %v1193
    %2175 = vmatpush1.msra.mxu0 %v1190
    %2176 = vmatprep.subr.mxu0 0.0
    %2177 = vmatpush1.msra.mxu0 0.0
    %2178 = vmatprep.subr.mxu0 0.0
    %2179 = vmatpush1.msra.mxu0 0.0
    %2180 = vmatprep.subr.mxu0 0.0
    %2181 = vmatpush1.msra.mxu0 0.0
    %2182 = vmatprep.subr.mxu0 0.0
    %2183 = vmatpush1.msra.mxu0 0.0
    %2184 = vmatprep.subr.mxu0 0.0
    %2185 = vmatpush1.msra.mxu0 0.0
    %2186 = vmatprep.subr.mxu0 0.0
    %2187 = vmatpush1.msra.mxu0 0.0
    %2188 = vmatprep.subr.mxu0 0.0
    %2189 = vmatpush1.msra.mxu0 0.0
    %2190 = vmatprep.subr.mxu0 0.0
    %2191 = vmatpush1.msra.mxu0 0.0
    %2192 = vmatprep.subr.mxu0 0.0
    %2193 = vmatpush1.msra.mxu0 0.0
    %2194 = vmatprep.subr.mxu0 0.0
    %2195 = vmatpush1.msra.mxu0 0.0
    %2196 = vmatprep.subr.mxu0 0.0
    %2197 = vmatpush1.msra.mxu0 0.0
    %2198 = vmatprep.subr.mxu0 0.0
    %2199 = vmatpush1.msra.mxu0 0.0
    %2200 = vmatprep.subr.mxu0 0.0
    %2201 = vmatpush1.msra.mxu0 0.0
    %2202 = vmatprep.subr.mxu0 0.0
    %2203 = vmatpush1.msra.mxu0 0.0
    %2204 = vmatprep.subr.mxu0 0.0
    %2205 = vmatpush1.msra.mxu0 0.0
    %2206 = vmatprep.subr.mxu0 0.0
    %2207 = vmatpush1.msra.mxu0 0.0
    %2208 = vmatprep.subr.mxu0 0.0
    %2209 = vmatpush1.msra.mxu0 0.0
    %2210 = vmatprep.subr.mxu0 0.0
    %2211 = vmatpush1.msra.mxu0 0.0
    %2212 = vmatprep.subr.mxu0 0.0
    %2213 = vmatpush1.msra.mxu0 0.0
    %2214 = vmatprep.subr.mxu0 0.0
    %2215 = vmatpush1.msra.mxu0 0.0
    %2216 = vmatprep.subr.mxu0 0.0
    %2217 = vmatpush1.msra.mxu0 0.0
    %2218 = vmatprep.subr.mxu0 0.0
    %2219 = vmatpush1.msra.mxu0 0.0
    %2220 = vmatprep.subr.mxu0 0.0
    %2221 = vmatpush1.msra.mxu0 0.0
    %2222 = vmatprep.subr.mxu0 0.0
    %2223 = vmatpush1.msra.mxu0 0.0
    %2224 = vmatprep.subr.mxu0 0.0
    %2225 = vmatpush1.msra.mxu0 0.0
    %2226 = vmatprep.subr.mxu0 0.0
    %2227 = vmatpush1.msra.mxu0 0.0
    %2228 = vmatprep.subr.mxu0 0.0
    %2229 = vmatpush1.msra.mxu0 0.0
    %2230 = vmatprep.subr.mxu0 0.0
    %2231 = vmatpush1.msra.mxu0 0.0
    %2232 = vmatprep.mubr.f32.mxu0 0.0
    %2233 = vmatmul.mubr.f32.gmra.mrb[0].mxu0 %v2136
    %v2234 = vpop.f32.mrb[0].mxu0
    %v2235 = vadd.f32 0.0, %v2234
    %v2236 = vpop.f32.mrb[0].mxu0
    %v2237 = vadd.f32 0.0, %v2236
    %2238 = vmatprep.mubr.f32.mxu0 0.0
    %2239 = vmatmul.mubr.f32.gmra.mrb[0].mxu0 %v2138
    %v2240 = vpop.f32.mrb[0].mxu0
    %v2241 = vadd.f32 0.0, %v2240
    %v2242 = vpop.f32.mrb[0].mxu0
    %v2243 = vadd.f32 0.0, %v2242
    %2244 = vmatprep.mubr.f32.mxu0 0.0
    %2245 = vmatmul.mubr.f32.gmra.mrb[0].mxu0 %v2140
    %v2246 = vpop.f32.mrb[0].mxu0
    %v2247 = vadd.f32 0.0, %v2246
    %v2248 = vpop.f32.mrb[0].mxu0
    %v2249 = vadd.f32 0.0, %v2248
    %2250 = vmatprep.mubr.f32.mxu0 0.0
    %2251 = vmatmul.mubr.f32.gmra.mrb[0].mxu0 %v2142
    %v2252 = vpop.f32.mrb[0].mxu0
    %v2253 = vadd.f32 0.0, %v2252
    %v2254 = vpop.f32.mrb[0].mxu0
    %v2255 = vadd.f32 0.0, %v2254
    %2256 = vmatprep.mubr.f32.mxu0 0.0
    %2257 = vmatmul.mubr.f32.gmra.mrb[0].mxu0 %v2144
    %v2258 = vpop.f32.mrb[0].mxu0
    %v2259 = vadd.f32 0.0, %v2258
    %v2260 = vpop.f32.mrb[0].mxu0
    %v2261 = vadd.f32 0.0, %v2260
    %2262 = vmatprep.mubr.f32.mxu0 0.0
    %2263 = vmatmul.mubr.f32.gmra.mrb[0].mxu0 %v2146
    %v2264 = vpop.f32.mrb[0].mxu0
    %v2265 = vadd.f32 0.0, %v2264
    %v2266 = vpop.f32.mrb[0].mxu0
    %v2267 = vadd.f32 0.0, %v2266
    %2268 = vmatprep.mubr.f32.mxu0 0.0
    %2269 = vmatmul.mubr.f32.gmra.mrb[0].mxu0 %v2148
    %v2270 = vpop.f32.mrb[0].mxu0
    %v2271 = vadd.f32 0.0, %v2270
    %v2272 = vpop.f32.mrb[0].mxu0
    %v2273 = vadd.f32 0.0, %v2272
    %2274 = vmatprep.mubr.f32.mxu0 0.0
    %2275 = vmatmul.mubr.f32.gmra.mrb[0].mxu0 %v2150
    %v2276 = vpop.f32.mrb[0].mxu0
    %v2277 = vadd.f32 0.0, %v2276
    %v2278 = vpop.f32.mrb[0].mxu0
    %v2279 = vadd.f32 0.0, %v2278
    %2280 = vmatprep.mubr.f32.mxu0 0.0
    %2281 = vmatmul.mubr.f32.gmra.mrb[0].mxu0 %v2152
    %v2282 = vpop.f32.mrb[0].mxu0
    %v2283 = vadd.f32 0.0, %v2282
    %v2284 = vpop.f32.mrb[0].mxu0
    %v2285 = vadd.f32 0.0, %v2284
    %2286 = vmatprep.mubr.f32.mxu0 0.0
    %2287 = vmatmul.mubr.f32.gmra.mrb[0].mxu0 %v2154
    %v2288 = vpop.f32.mrb[0].mxu0
    %v2289 = vadd.f32 0.0, %v2288
    %v2290 = vpop.f32.mrb[0].mxu0
    %v2291 = vadd.f32 0.0, %v2290
    %2292 = vmatprep.mubr.f32.mxu0 0.0
    %2293 = vmatmul.mubr.f32.gmra.mrb[0].mxu0 %v2156
    %v2294 = vpop.f32.mrb[0].mxu0
    %v2295 = vadd.f32 0.0, %v2294
    %v2296 = vpop.f32.mrb[0].mxu0
    %v2297 = vadd.f32 0.0, %v2296
    %2298 = vmatprep.mubr.f32.mxu0 0.0
    %2299 = vmatmul.mubr.f32.gmra.mrb[0].mxu0 %v2158
    %v2300 = vpop.f32.mrb[0].mxu0
    %v2301 = vadd.f32 0.0, %v2300
    %v2302 = vpop.f32.mrb[0].mxu0
    %v2303 = vadd.f32 0.0, %v2302
    %2304 = vmatprep.mubr.f32.mxu0 0.0
    %2305 = vmatmul.mubr.f32.gmra.mrb[0].mxu0 %v2160
    %v2306 = vpop.f32.mrb[0].mxu0
    %v2307 = vadd.f32 0.0, %v2306
    %v2308 = vpop.f32.mrb[0].mxu0
    %v2309 = vadd.f32 0.0, %v2308
    %2310 = vmatprep.mubr.f32.mxu0 0.0
    %2311 = vmatmul.mubr.f32.gmra.mrb[0].mxu0 %v2162
    %v2312 = vpop.f32.mrb[0].mxu0
    %v2313 = vadd.f32 0.0, %v2312
    %v2314 = vpop.f32.mrb[0].mxu0
    %v2315 = vadd.f32 0.0, %v2314
    %2316 = vmatprep.mubr.f32.mxu0 0.0
    %2317 = vmatmul.mubr.f32.gmra.mrb[0].mxu0 %v2164
    %v2318 = vpop.f32.mrb[0].mxu0
    %v2319 = vadd.f32 0.0, %v2318
    %v2320 = vpop.f32.mrb[0].mxu0
    %v2321 = vadd.f32 0.0, %v2320
    %2322 = vmatprep.mubr.f32.mxu0 0.0
    %2323 = vmatmul.mubr.f32.gmra.mrb[0].mxu0 %v2166
    %v2324 = vpop.f32.mrb[0].mxu0
    %v2325 = vadd.f32 0.0, %v2324
    %v2326 = vpop.f32.mrb[0].mxu0
    %v2327 = vadd.f32 0.0, %v2326
    %2328 = vdwg.mxu0
    %v2329 = vadd.f32 %v2064, %v2235
    %v2330 = vadd.f32 %v2065, %v2237
    %v2331 = vadd.f32 %v2066, %v2241
    %v2332 = vadd.f32 %v2067, %v2243
    %v2333 = vadd.f32 %v2068, %v2247
    %v2334 = vadd.f32 %v2069, %v2249
    %v2335 = vadd.f32 %v2070, %v2253
    %v2336 = vadd.f32 %v2071, %v2255
    %v2337 = vadd.f32 %v2072, %v2259
    %v2338 = vadd.f32 %v2073, %v2261
    %v2339 = vadd.f32 %v2074, %v2265
    %v2340 = vadd.f32 %v2075, %v2267
    %v2341 = vadd.f32 %v2076, %v2271
    %v2342 = vadd.f32 %v2077, %v2273
    %v2343 = vadd.f32 %v2078, %v2277
    %v2344 = vadd.f32 %v2079, %v2279
    %v2345 = vadd.f32 %v2080, %v2283
    %v2346 = vadd.f32 %v2081, %v2285
    %v2347 = vadd.f32 %v2082, %v2289
    %v2348 = vadd.f32 %v2083, %v2291
    %v2349 = vadd.f32 %v2084, %v2295
    %v2350 = vadd.f32 %v2085, %v2297
    %v2351 = vadd.f32 %v2086, %v2301
    %v2352 = vadd.f32 %v2087, %v2303
    %v2353 = vadd.f32 %v2088, %v2307
    %v2354 = vadd.f32 %v2089, %v2309
    %v2355 = vadd.f32 %v2090, %v2313
    %v2356 = vadd.f32 %v2091, %v2315
    %v2357 = vadd.f32 %v2092, %v2319
    %v2358 = vadd.f32 %v2093, %v2321
    %v2359 = vadd.f32 %v2094, %v2325
    %v2360 = vadd.f32 %v2095, %v2327
    %v2361 = vmax.f32 %v1356, %v2329
    %v2362 = vmax.f32 %v1357, %v2330
    %v2363 = vmax.f32 %v1358, %v2331
    %v2364 = vmax.f32 %v1359, %v2332
    %v2365 = vmax.f32 %v1360, %v2333
    %v2366 = vmax.f32 %v1361, %v2334
    %v2367 = vmax.f32 %v1362, %v2335
    %v2368 = vmax.f32 %v1363, %v2336
    %v2369 = vmax.f32 %v1364, %v2337
    %v2370 = vmax.f32 %v1365, %v2338
    %v2371 = vmax.f32 %v1366, %v2339
    %v2372 = vmax.f32 %v1367, %v2340
    %v2373 = vmax.f32 %v1368, %v2341
    %v2374 = vmax.f32 %v1369, %v2342
    %v2375 = vmax.f32 %v1370, %v2343
    %v2376 = vmax.f32 %v1371, %v2344
    %v2377 = vmax.f32 %v1372, %v2345
    %v2378 = vmax.f32 %v1373, %v2346
    %v2379 = vmax.f32 %v1374, %v2347
    %v2380 = vmax.f32 %v1375, %v2348
    %v2381 = vmax.f32 %v1376, %v2349
    %v2382 = vmax.f32 %v1377, %v2350
    %v2383 = vmax.f32 %v1378, %v2351
    %v2384 = vmax.f32 %v1379, %v2352
    %v2385 = vmax.f32 %v1380, %v2353
    %v2386 = vmax.f32 %v1381, %v2354
    %v2387 = vmax.f32 %v1382, %v2355
    %v2388 = vmax.f32 %v1383, %v2356
    %v2389 = vmax.f32 %v1384, %v2357
    %v2390 = vmax.f32 %v1385, %v2358
    %v2391 = vmax.f32 %v1386, %v2359
    %v2392 = vmax.f32 %v1387, %v2360
    %2425 = vrot.lane.b32.xlu0 %v2361, 8
    %v2426 = vpop.permute.xlu0 %2425
    %2427 = vrot.lane.b32.xlu0 %v2362, 8
    %v2428 = vpop.permute.xlu0 %2427
    %2429 = vrot.lane.b32.xlu0 %v2363, 8
    %v2430 = vpop.permute.xlu0 %2429
    %2431 = vrot.lane.b32.xlu0 %v2364, 8
    %v2432 = vpop.permute.xlu0 %2431
    %2433 = vrot.lane.b32.xlu0 %v2365, 8
    %v2434 = vpop.permute.xlu0 %2433
    %2435 = vrot.lane.b32.xlu0 %v2366, 8
    %v2436 = vpop.permute.xlu0 %2435
    %2437 = vrot.lane.b32.xlu0 %v2367, 8
    %v2438 = vpop.permute.xlu0 %2437
    %2439 = vrot.lane.b32.xlu0 %v2368, 8
    %v2440 = vpop.permute.xlu0 %2439
    %2441 = vrot.lane.b32.xlu0 %v2369, 8
    %v2442 = vpop.permute.xlu0 %2441
    %2443 = vrot.lane.b32.xlu0 %v2370, 8
    %v2444 = vpop.permute.xlu0 %2443
    %2445 = vrot.lane.b32.xlu0 %v2371, 8
    %v2446 = vpop.permute.xlu0 %2445
    %2447 = vrot.lane.b32.xlu0 %v2372, 8
    %v2448 = vpop.permute.xlu0 %2447
    %2449 = vrot.lane.b32.xlu0 %v2373, 8
    %v2450 = vpop.permute.xlu0 %2449
    %2451 = vrot.lane.b32.xlu0 %v2374, 8
    %v2452 = vpop.permute.xlu0 %2451
    %2453 = vrot.lane.b32.xlu0 %v2375, 8
    %v2454 = vpop.permute.xlu0 %2453
    %2455 = vrot.lane.b32.xlu0 %v2376, 8
    %v2456 = vpop.permute.xlu0 %2455
    %2457 = vrot.lane.b32.xlu0 %v2377, 8
    %v2458 = vpop.permute.xlu0 %2457
    %2459 = vrot.lane.b32.xlu0 %v2378, 8
    %v2460 = vpop.permute.xlu0 %2459
    %2461 = vrot.lane.b32.xlu0 %v2379, 8
    %v2462 = vpop.permute.xlu0 %2461
    %2463 = vrot.lane.b32.xlu0 %v2380, 8
    %v2464 = vpop.permute.xlu0 %2463
    %2465 = vrot.lane.b32.xlu0 %v2381, 8
    %v2466 = vpop.permute.xlu0 %2465
    %2467 = vrot.lane.b32.xlu0 %v2382, 8
    %v2468 = vpop.permute.xlu0 %2467
    %2469 = vrot.lane.b32.xlu0 %v2383, 8
    %v2470 = vpop.permute.xlu0 %2469
    %2471 = vrot.lane.b32.xlu0 %v2384, 8
    %v2472 = vpop.permute.xlu0 %2471
    %2473 = vrot.lane.b32.xlu0 %v2385, 8
    %v2474 = vpop.permute.xlu0 %2473
    %2475 = vrot.lane.b32.xlu0 %v2386, 8
    %v2476 = vpop.permute.xlu0 %2475
    %2477 = vrot.lane.b32.xlu0 %v2387, 8
    %v2478 = vpop.permute.xlu0 %2477
    %2479 = vrot.lane.b32.xlu0 %v2388, 8
    %v2480 = vpop.permute.xlu0 %2479
    %2481 = vrot.lane.b32.xlu0 %v2389, 8
    %v2482 = vpop.permute.xlu0 %2481
    %2483 = vrot.lane.b32.xlu0 %v2390, 8
    %v2484 = vpop.permute.xlu0 %2483
    %2485 = vrot.lane.b32.xlu0 %v2391, 8
    %v2486 = vpop.permute.xlu0 %2485
    %2487 = vrot.lane.b32.xlu0 %v2392, 8
    %v2488 = vpop.permute.xlu0 %2487
    %vm2489 = vcmask 64512
    %v2490 = vsel %vm2489, %v2426, %v2428
    %v2491 = vsel %vm2489, %v2430, %v2432
    %v2492 = vsel %vm2489, %v2434, %v2436
    %v2493 = vsel %vm2489, %v2438, %v2440
    %v2494 = vsel %vm2489, %v2442, %v2444
    %v2495 = vsel %vm2489, %v2446, %v2448
    %v2496 = vsel %vm2489, %v2450, %v2452
    %v2497 = vsel %vm2489, %v2454, %v2456
    %v2498 = vsel %vm2489, %v2458, %v2460
    %v2499 = vsel %vm2489, %v2462, %v2464
    %v2500 = vsel %vm2489, %v2466, %v2468
    %v2501 = vsel %vm2489, %v2470, %v2472
    %v2502 = vsel %vm2489, %v2474, %v2476
    %v2503 = vsel %vm2489, %v2478, %v2480
    %v2504 = vsel %vm2489, %v2482, %v2484
    %v2505 = vsel %vm2489, %v2486, %v2488
    %v2522 = vmax.f32 %v2361, %v2490
    %v2523 = vmax.f32 %v2363, %v2491
    %v2524 = vmax.f32 %v2365, %v2492
    %v2525 = vmax.f32 %v2367, %v2493
    %v2526 = vmax.f32 %v2369, %v2494
    %v2527 = vmax.f32 %v2371, %v2495
    %v2528 = vmax.f32 %v2373, %v2496
    %v2529 = vmax.f32 %v2375, %v2497
    %v2530 = vmax.f32 %v2377, %v2498
    %v2531 = vmax.f32 %v2379, %v2499
    %v2532 = vmax.f32 %v2381, %v2500
    %v2533 = vmax.f32 %v2383, %v2501
    %v2534 = vmax.f32 %v2385, %v2502
    %v2535 = vmax.f32 %v2387, %v2503
    %v2536 = vmax.f32 %v2389, %v2504
    %v2537 = vmax.f32 %v2391, %v2505
    %v2538 = vmax.f32 %v2522, 0.0
    %v2539 = vmax.f32 %v2523, 0.0
    %v2540 = vmax.f32 %v2524, 0.0
    %v2541 = vmax.f32 %v2525, 0.0
    %v2542 = vmax.f32 %v2526, 0.0
    %v2543 = vmax.f32 %v2527, 0.0
    %v2544 = vmax.f32 %v2528, 0.0
    %v2545 = vmax.f32 %v2529, 0.0
    %v2546 = vmax.f32 %v2530, 0.0
    %v2547 = vmax.f32 %v2531, 0.0
    %v2548 = vmax.f32 %v2532, 0.0
    %v2549 = vmax.f32 %v2533, 0.0
    %v2550 = vmax.f32 %v2534, 0.0
    %v2551 = vmax.f32 %v2535, 0.0
    %v2552 = vmax.f32 %v2536, 0.0
    %v2553 = vmax.f32 %v2537, 0.0
    %v2554 = vld [vmem:[%s2] sm:$0xff]
    %v2555 = vld [vmem:[%s2 + $0x8] sm:$0xff]
    %v2556 = vld [vmem:[%s2 + $0x10] sm:$0xff]
    %v2557 = vld [vmem:[%s2 + $0x18] sm:$0xff]
    %v2558 = vld [vmem:[%s2 + $0x20] sm:$0xff]
    %v2559 = vld [vmem:[%s2 + $0x28] sm:$0xff]
    %v2560 = vld [vmem:[%s2 + $0x30] sm:$0xff]
    %v2561 = vld [vmem:[%s2 + $0x38] sm:$0xff]
    %v2562 = vld [vmem:[%s2 + $0x40] sm:$0xff]
    %v2563 = vld [vmem:[%s2 + $0x48] sm:$0xff]
    %v2564 = vld [vmem:[%s2 + $0x50] sm:$0xff]
    %v2565 = vld [vmem:[%s2 + $0x58] sm:$0xff]
    %v2566 = vld [vmem:[%s2 + $0x60] sm:$0xff]
    %v2567 = vld [vmem:[%s2 + $0x68] sm:$0xff]
    %v2568 = vld [vmem:[%s2 + $0x70] sm:$0xff]
    %v2569 = vld [vmem:[%s2 + $0x78] sm:$0xff]
    %v2570 = vld [vmem:[%s2 + $0x80] sm:$0xff]
    %v2571 = vld [vmem:[%s2 + $0x88] sm:$0xff]
    %v2572 = vld [vmem:[%s2 + $0x90] sm:$0xff]
    %v2573 = vld [vmem:[%s2 + $0x98] sm:$0xff]
    %v2574 = vld [vmem:[%s2 + $0xa0] sm:$0xff]
    %v2575 = vld [vmem:[%s2 + $0xa8] sm:$0xff]
    %v2576 = vld [vmem:[%s2 + $0xb0] sm:$0xff]
    %v2577 = vld [vmem:[%s2 + $0xb8] sm:$0xff]
    %v2578 = vld [vmem:[%s2 + $0xc0] sm:$0xff]
    %v2579 = vld [vmem:[%s2 + $0xc8] sm:$0xff]
    %v2580 = vld [vmem:[%s2 + $0xd0] sm:$0xff]
    %v2581 = vld [vmem:[%s2 + $0xd8] sm:$0xff]
    %v2582 = vld [vmem:[%s2 + $0xe0] sm:$0xff]
    %v2583 = vld [vmem:[%s2 + $0xe8] sm:$0xff]
    %v2600 = vrot.slane %v2538, 1
    %v2601 = vrot.slane %v2539, 1
    %v2602 = vsel %vm538, %v2600, %v2601
    %v2603 = vrot.slane %v2540, 1
    %v2604 = vrot.slane %v2541, 1
    %v2605 = vsel %vm538, %v2603, %v2604
    %v2606 = vrot.slane %v2542, 1
    %v2607 = vrot.slane %v2543, 1
    %v2608 = vsel %vm538, %v2606, %v2607
    %v2609 = vrot.slane %v2544, 1
    %v2610 = vrot.slane %v2545, 1
    %v2611 = vsel %vm538, %v2609, %v2610
    %v2612 = vrot.slane %v2546, 1
    %v2613 = vrot.slane %v2547, 1
    %v2614 = vsel %vm538, %v2612, %v2613
    %v2615 = vrot.slane %v2548, 1
    %v2616 = vrot.slane %v2549, 1
    %v2617 = vsel %vm538, %v2615, %v2616
    %v2618 = vrot.slane %v2550, 1
    %v2619 = vrot.slane %v2551, 1
    %v2620 = vsel %vm538, %v2618, %v2619
    %v2621 = vrot.slane %v2552, 1
    %v2622 = vrot.slane %v2553, 1
    %v2623 = vsel %vm538, %v2621, %v2622
    %s2624 = scalar_lea.vmem %s2, 240
    %v2625 = vld [vmem:[%s2624] sm:$0xff]
    %v2626 = vld [vmem:[%s2624 + $0x8] sm:$0xff]
    %v2627 = vld [vmem:[%s2624 + $0x10] sm:$0xff]
    %v2628 = vld [vmem:[%s2624 + $0x18] sm:$0xff]
    %v2629 = vld [vmem:[%s2624 + $0x20] sm:$0xff]
    %v2630 = vld [vmem:[%s2624 + $0x28] sm:$0xff]
    %v2631 = vld [vmem:[%s2624 + $0x30] sm:$0xff]
    %v2632 = vld [vmem:[%s2624 + $0x38] sm:$0xff]
    %v2633 = vld [vmem:[%s2624 + $0x40] sm:$0xff]
    %v2634 = vld [vmem:[%s2624 + $0x48] sm:$0xff]
    %v2635 = vld [vmem:[%s2624 + $0x50] sm:$0xff]
    %v2636 = vld [vmem:[%s2624 + $0x58] sm:$0xff]
    %v2637 = vld [vmem:[%s2624 + $0x60] sm:$0xff]
    %v2638 = vld [vmem:[%s2624 + $0x68] sm:$0xff]
    %v2639 = vld [vmem:[%s2624 + $0x70] sm:$0xff]
    %v2640 = vld [vmem:[%s2624 + $0x78] sm:$0xff]
    %v2641 = vld [vmem:[%s2624 + $0x80] sm:$0xff]
    %v2642 = vld [vmem:[%s2624 + $0x88] sm:$0xff]
    %v2643 = vld [vmem:[%s2624 + $0x90] sm:$0xff]
    %v2644 = vld [vmem:[%s2624 + $0x98] sm:$0xff]
    %v2645 = vld [vmem:[%s2624 + $0xa0] sm:$0xff]
    %v2646 = vld [vmem:[%s2624 + $0xa8] sm:$0xff]
    %v2647 = vld [vmem:[%s2624 + $0xb0] sm:$0xff]
    %v2648 = vld [vmem:[%s2624 + $0xb8] sm:$0xff]
    %v2649 = vld [vmem:[%s2624 + $0xc0] sm:$0xff]
    %v2650 = vld [vmem:[%s2624 + $0xc8] sm:$0xff]
    %v2651 = vld [vmem:[%s2624 + $0xd0] sm:$0xff]
    %v2652 = vld [vmem:[%s2624 + $0xd8] sm:$0xff]
    %v2653 = vld [vmem:[%s2624 + $0xe0] sm:$0xff]
    %v2654 = vld [vmem:[%s2624 + $0xe8] sm:$0xff]
    %vm2655 = vcmask 982016
    %v2656 = vsel %vm2655, %v2602, 0
    %v2658 = vsel %vm2655, %v2605, 0
    %v2660 = vsel %vm2655, %v2608, 0
    %v2662 = vsel %vm2655, %v2611, 0
    %v2664 = vsel %vm2655, %v2614, 0
    %v2666 = vsel %vm2655, %v2617, 0
    %v2668 = vsel %vm2655, %v2620, 0
    %v2670 = vsel %vm2655, %v2623, 0
    %2672 = vmatprep.subr.mxu0 %v2626
    %2673 = vmatpush1.msra.mxu0 %v2625
    %2674 = vmatprep.subr.mxu0 %v2628
    %2675 = vmatpush1.msra.mxu0 %v2627
    %2676 = vmatprep.subr.mxu0 %v2630
    %2677 = vmatpush1.msra.mxu0 %v2629
    %2678 = vmatprep.subr.mxu0 %v2632
    %2679 = vmatpush1.msra.mxu0 %v2631
    %2680 = vmatprep.subr.mxu0 %v2634
    %2681 = vmatpush1.msra.mxu0 %v2633
    %2682 = vmatprep.subr.mxu0 %v2636
    %2683 = vmatpush1.msra.mxu0 %v2635
    %2684 = vmatprep.subr.mxu0 %v2638
    %2685 = vmatpush1.msra.mxu0 %v2637
    %2686 = vmatprep.subr.mxu0 %v2640
    %2687 = vmatpush1.msra.mxu0 %v2639
    %2688 = vmatprep.subr.mxu0 %v2642
    %2689 = vmatpush1.msra.mxu0 %v2641
    %2690 = vmatprep.subr.mxu0 %v2644
    %2691 = vmatpush1.msra.mxu0 %v2643
    %2692 = vmatprep.subr.mxu0 %v2646
    %2693 = vmatpush1.msra.mxu0 %v2645
    %2694 = vmatprep.subr.mxu0 %v2648
    %2695 = vmatpush1.msra.mxu0 %v2647
    %2696 = vmatprep.subr.mxu0 %v2650
    %2697 = vmatpush1.msra.mxu0 %v2649
    %2698 = vmatprep.subr.mxu0 %v2652
    %2699 = vmatpush1.msra.mxu0 %v2651
    %2700 = vmatprep.subr.mxu0 %v2654
    %2701 = vmatpush1.msra.mxu0 %v2653
    %2702 = vmatprep.subr.mxu0 0.0
    %2703 = vmatpush1.msra.mxu0 0.0
    %2704 = vmatprep.subr.mxu0 0.0
    %2705 = vmatpush1.msra.mxu0 0.0
    %2706 = vmatprep.subr.mxu0 0.0
    %2707 = vmatpush1.msra.mxu0 0.0
    %2708 = vmatprep.subr.mxu0 0.0
    %2709 = vmatpush1.msra.mxu0 0.0
    %2710 = vmatprep.subr.mxu0 0.0
    %2711 = vmatpush1.msra.mxu0 0.0
    %2712 = vmatprep.subr.mxu0 0.0
    %2713 = vmatpush1.msra.mxu0 0.0
    %2714 = vmatprep.subr.mxu0 0.0
    %2715 = vmatpush1.msra.mxu0 0.0
    %2716 = vmatprep.subr.mxu0 0.0
    %2717 = vmatpush1.msra.mxu0 0.0
    %2718 = vmatprep.subr.mxu0 0.0
    %2719 = vmatpush1.msra.mxu0 0.0
    %2720 = vmatprep.subr.mxu0 0.0
    %2721 = vmatpush1.msra.mxu0 0.0
    %2722 = vmatprep.subr.mxu0 0.0
    %2723 = vmatpush1.msra.mxu0 0.0
    %2724 = vmatprep.subr.mxu0 0.0
    %2725 = vmatpush1.msra.mxu0 0.0
    %2726 = vmatprep.subr.mxu0 0.0
    %2727 = vmatpush1.msra.mxu0 0.0
    %2728 = vmatprep.subr.mxu0 0.0
    %2729 = vmatpush1.msra.mxu0 0.0
    %2730 = vmatprep.subr.mxu0 0.0
    %2731 = vmatpush1.msra.mxu0 0.0
    %2732 = vmatprep.subr.mxu0 0.0
    %2733 = vmatpush1.msra.mxu0 0.0
    %2734 = vmatprep.subr.mxu0 0.0
    %2735 = vmatpush1.msra.mxu0 0.0
    %2736 = vmatprep.mubr.f32.mxu0 0.0
    %2737 = vmatmul.mubr.f32.gmra.mrb[0].mxu0 %v2656
    %v2738 = vpop.f32.mrb[0].mxu0
    %v2739 = vadd.f32 0.0, %v2738
    %v2740 = vpop.f32.mrb[0].mxu0
    %v2741 = vadd.f32 0.0, %v2740
    %2742 = vmatprep.mubr.f32.mxu0 0.0
    %2743 = vmatmul.mubr.f32.gmra.mrb[0].mxu0 %v2658
    %v2744 = vpop.f32.mrb[0].mxu0
    %v2745 = vadd.f32 0.0, %v2744
    %v2746 = vpop.f32.mrb[0].mxu0
    %v2747 = vadd.f32 0.0, %v2746
    %2748 = vmatprep.mubr.f32.mxu0 0.0
    %2749 = vmatmul.mubr.f32.gmra.mrb[0].mxu0 %v2660
    %v2750 = vpop.f32.mrb[0].mxu0
    %v2751 = vadd.f32 0.0, %v2750
    %v2752 = vpop.f32.mrb[0].mxu0
    %v2753 = vadd.f32 0.0, %v2752
    %2754 = vmatprep.mubr.f32.mxu0 0.0
    %2755 = vmatmul.mubr.f32.gmra.mrb[0].mxu0 %v2662
    %v2756 = vpop.f32.mrb[0].mxu0
    %v2757 = vadd.f32 0.0, %v2756
    %v2758 = vpop.f32.mrb[0].mxu0
    %v2759 = vadd.f32 0.0, %v2758
    %2760 = vmatprep.mubr.f32.mxu0 0.0
    %2761 = vmatmul.mubr.f32.gmra.mrb[0].mxu0 %v2664
    %v2762 = vpop.f32.mrb[0].mxu0
    %v2763 = vadd.f32 0.0, %v2762
    %v2764 = vpop.f32.mrb[0].mxu0
    %v2765 = vadd.f32 0.0, %v2764
    %2766 = vmatprep.mubr.f32.mxu0 0.0
    %2767 = vmatmul.mubr.f32.gmra.mrb[0].mxu0 %v2666
    %v2768 = vpop.f32.mrb[0].mxu0
    %v2769 = vadd.f32 0.0, %v2768
    %v2770 = vpop.f32.mrb[0].mxu0
    %v2771 = vadd.f32 0.0, %v2770
    %2772 = vmatprep.mubr.f32.mxu0 0.0
    %2773 = vmatmul.mubr.f32.gmra.mrb[0].mxu0 %v2668
    %v2774 = vpop.f32.mrb[0].mxu0
    %v2775 = vadd.f32 0.0, %v2774
    %v2776 = vpop.f32.mrb[0].mxu0
    %v2777 = vadd.f32 0.0, %v2776
    %2778 = vmatprep.mubr.f32.mxu0 0.0
    %2779 = vmatmul.mubr.f32.gmra.mrb[0].mxu0 %v2670
    %v2780 = vpop.f32.mrb[0].mxu0
    %v2781 = vadd.f32 0.0, %v2780
    %v2782 = vpop.f32.mrb[0].mxu0
    %v2783 = vadd.f32 0.0, %v2782
    %2784 = vdwg.mxu0
    %v2785 = vsel %vm2655, %v2538, 0
    %v2787 = vsel %vm2655, %v2540, 0
    %v2789 = vsel %vm2655, %v2542, 0
    %v2791 = vsel %vm2655, %v2544, 0
    %v2793 = vsel %vm2655, %v2546, 0
    %v2795 = vsel %vm2655, %v2548, 0
    %v2797 = vsel %vm2655, %v2550, 0
    %v2799 = vsel %vm2655, %v2552, 0
    %2801 = vmatprep.subr.mxu0 %v2555
    %2802 = vmatpush1.msra.mxu0 %v2554
    %2803 = vmatprep.subr.mxu0 %v2557
    %2804 = vmatpush1.msra.mxu0 %v2556
    %2805 = vmatprep.subr.mxu0 %v2559
    %2806 = vmatpush1.msra.mxu0 %v2558
    %2807 = vmatprep.subr.mxu0 %v2561
    %2808 = vmatpush1.msra.mxu0 %v2560
    %2809 = vmatprep.subr.mxu0 %v2563
    %2810 = vmatpush1.msra.mxu0 %v2562
    %2811 = vmatprep.subr.mxu0 %v2565
    %2812 = vmatpush1.msra.mxu0 %v2564
    %2813 = vmatprep.subr.mxu0 %v2567
    %2814 = vmatpush1.msra.mxu0 %v2566
    %2815 = vmatprep.subr.mxu0 %v2569
    %2816 = vmatpush1.msra.mxu0 %v2568
    %2817 = vmatprep.subr.mxu0 %v2571
    %2818 = vmatpush1.msra.mxu0 %v2570
    %2819 = vmatprep.subr.mxu0 %v2573
    %2820 = vmatpush1.msra.mxu0 %v2572
    %2821 = vmatprep.subr.mxu0 %v2575
    %2822 = vmatpush1.msra.mxu0 %v2574
    %2823 = vmatprep.subr.mxu0 %v2577
    %2824 = vmatpush1.msra.mxu0 %v2576
    %2825 = vmatprep.subr.mxu0 %v2579
    %2826 = vmatpush1.msra.mxu0 %v2578
    %2827 = vmatprep.subr.mxu0 %v2581
    %2828 = vmatpush1.msra.mxu0 %v2580
    %2829 = vmatprep.subr.mxu0 %v2583
    %2830 = vmatpush1.msra.mxu0 %v2582
    %2831 = vmatprep.subr.mxu0 0.0
    %2832 = vmatpush1.msra.mxu0 0.0
    %2833 = vmatprep.subr.mxu0 0.0
    %2834 = vmatpush1.msra.mxu0 0.0
    %2835 = vmatprep.subr.mxu0 0.0
    %2836 = vmatpush1.msra.mxu0 0.0
    %2837 = vmatprep.subr.mxu0 0.0
    %2838 = vmatpush1.msra.mxu0 0.0
    %2839 = vmatprep.subr.mxu0 0.0
    %2840 = vmatpush1.msra.mxu0 0.0
    %2841 = vmatprep.subr.mxu0 0.0
    %2842 = vmatpush1.msra.mxu0 0.0
    %2843 = vmatprep.subr.mxu0 0.0
    %2844 = vmatpush1.msra.mxu0 0.0
    %2845 = vmatprep.subr.mxu0 0.0
    %2846 = vmatpush1.msra.mxu0 0.0
    %2847 = vmatprep.subr.mxu0 0.0
    %2848 = vmatpush1.msra.mxu0 0.0
    %2849 = vmatprep.subr.mxu0 0.0
    %2850 = vmatpush1.msra.mxu0 0.0
    %2851 = vmatprep.subr.mxu0 0.0
    %2852 = vmatpush1.msra.mxu0 0.0
    %2853 = vmatprep.subr.mxu0 0.0
    %2854 = vmatpush1.msra.mxu0 0.0
    %2855 = vmatprep.subr.mxu0 0.0
    %2856 = vmatpush1.msra.mxu0 0.0
    %2857 = vmatprep.subr.mxu0 0.0
    %2858 = vmatpush1.msra.mxu0 0.0
    %2859 = vmatprep.subr.mxu0 0.0
    %2860 = vmatpush1.msra.mxu0 0.0
    %2861 = vmatprep.subr.mxu0 0.0
    %2862 = vmatpush1.msra.mxu0 0.0
    %2863 = vmatprep.subr.mxu0 0.0
    %2864 = vmatpush1.msra.mxu0 0.0
    %2865 = vmatprep.mubr.f32.mxu0 0.0
    %2866 = vmatmul.mubr.f32.gmra.mrb[0].mxu0 %v2785
    %v2867 = vpop.f32.mrb[0].mxu0
    %v2868 = vadd.f32 %v2739, %v2867
    %v2869 = vpop.f32.mrb[0].mxu0
    %v2870 = vadd.f32 %v2741, %v2869
    %2871 = vmatprep.mubr.f32.mxu0 0.0
    %2872 = vmatmul.mubr.f32.gmra.mrb[0].mxu0 %v2787
    %v2873 = vpop.f32.mrb[0].mxu0
    %v2874 = vadd.f32 %v2745, %v2873
    %v2875 = vpop.f32.mrb[0].mxu0
    %v2876 = vadd.f32 %v2747, %v2875
    %2877 = vmatprep.mubr.f32.mxu0 0.0
    %2878 = vmatmul.mubr.f32.gmra.mrb[0].mxu0 %v2789
    %v2879 = vpop.f32.mrb[0].mxu0
    %v2880 = vadd.f32 %v2751, %v2879
    %v2881 = vpop.f32.mrb[0].mxu0
    %v2882 = vadd.f32 %v2753, %v2881
    %2883 = vmatprep.mubr.f32.mxu0 0.0
    %2884 = vmatmul.mubr.f32.gmra.mrb[0].mxu0 %v2791
    %v2885 = vpop.f32.mrb[0].mxu0
    %v2886 = vadd.f32 %v2757, %v2885
    %v2887 = vpop.f32.mrb[0].mxu0
    %v2888 = vadd.f32 %v2759, %v2887
    %2889 = vmatprep.mubr.f32.mxu0 0.0
    %2890 = vmatmul.mubr.f32.gmra.mrb[0].mxu0 %v2793
    %v2891 = vpop.f32.mrb[0].mxu0
    %v2892 = vadd.f32 %v2763, %v2891
    %v2893 = vpop.f32.mrb[0].mxu0
    %v2894 = vadd.f32 %v2765, %v2893
    %2895 = vmatprep.mubr.f32.mxu0 0.0
    %2896 = vmatmul.mubr.f32.gmra.mrb[0].mxu0 %v2795
    %v2897 = vpop.f32.mrb[0].mxu0
    %v2898 = vadd.f32 %v2769, %v2897
    %v2899 = vpop.f32.mrb[0].mxu0
    %v2900 = vadd.f32 %v2771, %v2899
    %2901 = vmatprep.mubr.f32.mxu0 0.0
    %2902 = vmatmul.mubr.f32.gmra.mrb[0].mxu0 %v2797
    %v2903 = vpop.f32.mrb[0].mxu0
    %v2904 = vadd.f32 %v2775, %v2903
    %v2905 = vpop.f32.mrb[0].mxu0
    %v2906 = vadd.f32 %v2777, %v2905
    %2907 = vmatprep.mubr.f32.mxu0 0.0
    %2908 = vmatmul.mubr.f32.gmra.mrb[0].mxu0 %v2799
    %v2909 = vpop.f32.mrb[0].mxu0
    %v2910 = vadd.f32 %v2781, %v2909
    %v2911 = vpop.f32.mrb[0].mxu0
    %v2912 = vadd.f32 %v2783, %v2911
    %2913 = vdwg.mxu0
    %v2914 = vrot.slane %v2538, 2
    %v2915 = vrot.slane %v2539, 2
    %v2916 = vsel %vm1107, %v2914, %v2915
    %v2917 = vrot.slane %v2540, 2
    %v2918 = vrot.slane %v2541, 2
    %v2919 = vsel %vm1107, %v2917, %v2918
    %v2920 = vrot.slane %v2542, 2
    %v2921 = vrot.slane %v2543, 2
    %v2922 = vsel %vm1107, %v2920, %v2921
    %v2923 = vrot.slane %v2544, 2
    %v2924 = vrot.slane %v2545, 2
    %v2925 = vsel %vm1107, %v2923, %v2924
    %v2926 = vrot.slane %v2546, 2
    %v2927 = vrot.slane %v2547, 2
    %v2928 = vsel %vm1107, %v2926, %v2927
    %v2929 = vrot.slane %v2548, 2
    %v2930 = vrot.slane %v2549, 2
    %v2931 = vsel %vm1107, %v2929, %v2930
    %v2932 = vrot.slane %v2550, 2
    %v2933 = vrot.slane %v2551, 2
    %v2934 = vsel %vm1107, %v2932, %v2933
    %v2935 = vrot.slane %v2552, 2
    %v2936 = vrot.slane %v2553, 2
    %v2937 = vsel %vm1107, %v2935, %v2936
    %s2938 = scalar_lea.vmem %s2, 480
    %v2939 = vld [vmem:[%s2938] sm:$0xff]
    %v2940 = vld [vmem:[%s2938 + $0x8] sm:$0xff]
    %v2941 = vld [vmem:[%s2938 + $0x10] sm:$0xff]
    %v2942 = vld [vmem:[%s2938 + $0x18] sm:$0xff]
    %v2943 = vld [vmem:[%s2938 + $0x20] sm:$0xff]
    %v2944 = vld [vmem:[%s2938 + $0x28] sm:$0xff]
    %v2945 = vld [vmem:[%s2938 + $0x30] sm:$0xff]
    %v2946 = vld [vmem:[%s2938 + $0x38] sm:$0xff]
    %v2947 = vld [vmem:[%s2938 + $0x40] sm:$0xff]
    %v2948 = vld [vmem:[%s2938 + $0x48] sm:$0xff]
    %v2949 = vld [vmem:[%s2938 + $0x50] sm:$0xff]
    %v2950 = vld [vmem:[%s2938 + $0x58] sm:$0xff]
    %v2951 = vld [vmem:[%s2938 + $0x60] sm:$0xff]
    %v2952 = vld [vmem:[%s2938 + $0x68] sm:$0xff]
    %v2953 = vld [vmem:[%s2938 + $0x70] sm:$0xff]
    %v2954 = vld [vmem:[%s2938 + $0x78] sm:$0xff]
    %v2955 = vld [vmem:[%s2938 + $0x80] sm:$0xff]
    %v2956 = vld [vmem:[%s2938 + $0x88] sm:$0xff]
    %v2957 = vld [vmem:[%s2938 + $0x90] sm:$0xff]
    %v2958 = vld [vmem:[%s2938 + $0x98] sm:$0xff]
    %v2959 = vld [vmem:[%s2938 + $0xa0] sm:$0xff]
    %v2960 = vld [vmem:[%s2938 + $0xa8] sm:$0xff]
    %v2961 = vld [vmem:[%s2938 + $0xb0] sm:$0xff]
    %v2962 = vld [vmem:[%s2938 + $0xb8] sm:$0xff]
    %v2963 = vld [vmem:[%s2938 + $0xc0] sm:$0xff]
    %v2964 = vld [vmem:[%s2938 + $0xc8] sm:$0xff]
    %v2965 = vld [vmem:[%s2938 + $0xd0] sm:$0xff]
    %v2966 = vld [vmem:[%s2938 + $0xd8] sm:$0xff]
    %v2967 = vld [vmem:[%s2938 + $0xe0] sm:$0xff]
    %v2968 = vld [vmem:[%s2938 + $0xe8] sm:$0xff]
    %v2969 = vsel %vm2655, %v2916, 0
    %v2971 = vsel %vm2655, %v2919, 0
    %v2973 = vsel %vm2655, %v2922, 0
    %v2975 = vsel %vm2655, %v2925, 0
    %v2977 = vsel %vm2655, %v2928, 0
    %v2979 = vsel %vm2655, %v2931, 0
    %v2981 = vsel %vm2655, %v2934, 0
    %v2983 = vsel %vm2655, %v2937, 0
    %2985 = vmatprep.subr.mxu0 %v2940
    %2986 = vmatpush1.msra.mxu0 %v2939
    %2987 = vmatprep.subr.mxu0 %v2942
    %2988 = vmatpush1.msra.mxu0 %v2941
    %2989 = vmatprep.subr.mxu0 %v2944
    %2990 = vmatpush1.msra.mxu0 %v2943
    %2991 = vmatprep.subr.mxu0 %v2946
    %2992 = vmatpush1.msra.mxu0 %v2945
    %2993 = vmatprep.subr.mxu0 %v2948
    %2994 = vmatpush1.msra.mxu0 %v2947
    %2995 = vmatprep.subr.mxu0 %v2950
    %2996 = vmatpush1.msra.mxu0 %v2949
    %2997 = vmatprep.subr.mxu0 %v2952
    %2998 = vmatpush1.msra.mxu0 %v2951
    %2999 = vmatprep.subr.mxu0 %v2954
    %3000 = vmatpush1.msra.mxu0 %v2953
    %3001 = vmatprep.subr.mxu0 %v2956
    %3002 = vmatpush1.msra.mxu0 %v2955
    %3003 = vmatprep.subr.mxu0 %v2958
    %3004 = vmatpush1.msra.mxu0 %v2957
    %3005 = vmatprep.subr.mxu0 %v2960
    %3006 = vmatpush1.msra.mxu0 %v2959
    %3007 = vmatprep.subr.mxu0 %v2962
    %3008 = vmatpush1.msra.mxu0 %v2961
    %3009 = vmatprep.subr.mxu0 %v2964
    %3010 = vmatpush1.msra.mxu0 %v2963
    %3011 = vmatprep.subr.mxu0 %v2966
    %3012 = vmatpush1.msra.mxu0 %v2965
    %3013 = vmatprep.subr.mxu0 %v2968
    %3014 = vmatpush1.msra.mxu0 %v2967
    %3015 = vmatprep.subr.mxu0 0.0
    %3016 = vmatpush1.msra.mxu0 0.0
    %3017 = vmatprep.subr.mxu0 0.0
    %3018 = vmatpush1.msra.mxu0 0.0
    %3019 = vmatprep.subr.mxu0 0.0
    %3020 = vmatpush1.msra.mxu0 0.0
    %3021 = vmatprep.subr.mxu0 0.0
    %3022 = vmatpush1.msra.mxu0 0.0
    %3023 = vmatprep.subr.mxu0 0.0
    %3024 = vmatpush1.msra.mxu0 0.0
    %3025 = vmatprep.subr.mxu0 0.0
    %3026 = vmatpush1.msra.mxu0 0.0
    %3027 = vmatprep.subr.mxu0 0.0
    %3028 = vmatpush1.msra.mxu0 0.0
    %3029 = vmatprep.subr.mxu0 0.0
    %3030 = vmatpush1.msra.mxu0 0.0
    %3031 = vmatprep.subr.mxu0 0.0
    %3032 = vmatpush1.msra.mxu0 0.0
    %3033 = vmatprep.subr.mxu0 0.0
    %3034 = vmatpush1.msra.mxu0 0.0
    %3035 = vmatprep.subr.mxu0 0.0
    %3036 = vmatpush1.msra.mxu0 0.0
    %3037 = vmatprep.subr.mxu0 0.0
    %3038 = vmatpush1.msra.mxu0 0.0
    %3039 = vmatprep.subr.mxu0 0.0
    %3040 = vmatpush1.msra.mxu0 0.0
    %3041 = vmatprep.subr.mxu0 0.0
    %3042 = vmatpush1.msra.mxu0 0.0
    %3043 = vmatprep.subr.mxu0 0.0
    %3044 = vmatpush1.msra.mxu0 0.0
    %3045 = vmatprep.subr.mxu0 0.0
    %3046 = vmatpush1.msra.mxu0 0.0
    %3047 = vmatprep.subr.mxu0 0.0
    %3048 = vmatpush1.msra.mxu0 0.0
    %3049 = vmatprep.mubr.f32.mxu0 0.0
    %3050 = vmatmul.mubr.f32.gmra.mrb[0].mxu0 %v2969
    %v3051 = vpop.f32.mrb[0].mxu0
    %v3052 = vadd.f32 0.0, %v3051
    %v3053 = vpop.f32.mrb[0].mxu0
    %v3054 = vadd.f32 0.0, %v3053
    %3055 = vmatprep.mubr.f32.mxu0 0.0
    %3056 = vmatmul.mubr.f32.gmra.mrb[0].mxu0 %v2971
    %v3057 = vpop.f32.mrb[0].mxu0
    %v3058 = vadd.f32 0.0, %v3057
    %v3059 = vpop.f32.mrb[0].mxu0
    %v3060 = vadd.f32 0.0, %v3059
    %3061 = vmatprep.mubr.f32.mxu0 0.0
    %3062 = vmatmul.mubr.f32.gmra.mrb[0].mxu0 %v2973
    %v3063 = vpop.f32.mrb[0].mxu0
    %v3064 = vadd.f32 0.0, %v3063
    %v3065 = vpop.f32.mrb[0].mxu0
    %v3066 = vadd.f32 0.0, %v3065
    %3067 = vmatprep.mubr.f32.mxu0 0.0
    %3068 = vmatmul.mubr.f32.gmra.mrb[0].mxu0 %v2975
    %v3069 = vpop.f32.mrb[0].mxu0
    %v3070 = vadd.f32 0.0, %v3069
    %v3071 = vpop.f32.mrb[0].mxu0
    %v3072 = vadd.f32 0.0, %v3071
    %3073 = vmatprep.mubr.f32.mxu0 0.0
    %3074 = vmatmul.mubr.f32.gmra.mrb[0].mxu0 %v2977
    %v3075 = vpop.f32.mrb[0].mxu0
    %v3076 = vadd.f32 0.0, %v3075
    %v3077 = vpop.f32.mrb[0].mxu0
    %v3078 = vadd.f32 0.0, %v3077
    %3079 = vmatprep.mubr.f32.mxu0 0.0
    %3080 = vmatmul.mubr.f32.gmra.mrb[0].mxu0 %v2979
    %v3081 = vpop.f32.mrb[0].mxu0
    %v3082 = vadd.f32 0.0, %v3081
    %v3083 = vpop.f32.mrb[0].mxu0
    %v3084 = vadd.f32 0.0, %v3083
    %3085 = vmatprep.mubr.f32.mxu0 0.0
    %3086 = vmatmul.mubr.f32.gmra.mrb[0].mxu0 %v2981
    %v3087 = vpop.f32.mrb[0].mxu0
    %v3088 = vadd.f32 0.0, %v3087
    %v3089 = vpop.f32.mrb[0].mxu0
    %v3090 = vadd.f32 0.0, %v3089
    %3091 = vmatprep.mubr.f32.mxu0 0.0
    %3092 = vmatmul.mubr.f32.gmra.mrb[0].mxu0 %v2983
    %v3093 = vpop.f32.mrb[0].mxu0
    %v3094 = vadd.f32 0.0, %v3093
    %v3095 = vpop.f32.mrb[0].mxu0
    %v3096 = vadd.f32 0.0, %v3095
    %3097 = vdwg.mxu0
    %v3098 = vadd.f32 %v2868, %v3052
    %v3099 = vadd.f32 %v2870, %v3054
    %v3100 = vadd.f32 %v2874, %v3058
    %v3101 = vadd.f32 %v2876, %v3060
    %v3102 = vadd.f32 %v2880, %v3064
    %v3103 = vadd.f32 %v2882, %v3066
    %v3104 = vadd.f32 %v2886, %v3070
    %v3105 = vadd.f32 %v2888, %v3072
    %v3106 = vadd.f32 %v2892, %v3076
    %v3107 = vadd.f32 %v2894, %v3078
    %v3108 = vadd.f32 %v2898, %v3082
    %v3109 = vadd.f32 %v2900, %v3084
    %v3110 = vadd.f32 %v2904, %v3088
    %v3111 = vadd.f32 %v2906, %v3090
    %v3112 = vadd.f32 %v2910, %v3094
    %v3113 = vadd.f32 %v2912, %v3096
    %vm3114 = vcmask 1044480
    %v3115 = vrot.slane %v2538, 3
    %v3116 = vrot.slane %v2539, 3
    %v3117 = vsel %vm3114, %v3115, %v3116
    %v3118 = vrot.slane %v2540, 3
    %v3119 = vrot.slane %v2541, 3
    %v3120 = vsel %vm3114, %v3118, %v3119
    %v3121 = vrot.slane %v2542, 3
    %v3122 = vrot.slane %v2543, 3
    %v3123 = vsel %vm3114, %v3121, %v3122
    %v3124 = vrot.slane %v2544, 3
    %v3125 = vrot.slane %v2545, 3
    %v3126 = vsel %vm3114, %v3124, %v3125
    %v3127 = vrot.slane %v2546, 3
    %v3128 = vrot.slane %v2547, 3
    %v3129 = vsel %vm3114, %v3127, %v3128
    %v3130 = vrot.slane %v2548, 3
    %v3131 = vrot.slane %v2549, 3
    %v3132 = vsel %vm3114, %v3130, %v3131
    %v3133 = vrot.slane %v2550, 3
    %v3134 = vrot.slane %v2551, 3
    %v3135 = vsel %vm3114, %v3133, %v3134
    %v3136 = vrot.slane %v2552, 3
    %v3137 = vrot.slane %v2553, 3
    %v3138 = vsel %vm3114, %v3136, %v3137
    %s3139 = scalar_lea.vmem %s2, 720
    %v3140 = vld [vmem:[%s3139] sm:$0xff]
    %v3141 = vld [vmem:[%s3139 + $0x8] sm:$0xff]
    %v3142 = vld [vmem:[%s3139 + $0x10] sm:$0xff]
    %v3143 = vld [vmem:[%s3139 + $0x18] sm:$0xff]
    %v3144 = vld [vmem:[%s3139 + $0x20] sm:$0xff]
    %v3145 = vld [vmem:[%s3139 + $0x28] sm:$0xff]
    %v3146 = vld [vmem:[%s3139 + $0x30] sm:$0xff]
    %v3147 = vld [vmem:[%s3139 + $0x38] sm:$0xff]
    %v3148 = vld [vmem:[%s3139 + $0x40] sm:$0xff]
    %v3149 = vld [vmem:[%s3139 + $0x48] sm:$0xff]
    %v3150 = vld [vmem:[%s3139 + $0x50] sm:$0xff]
    %v3151 = vld [vmem:[%s3139 + $0x58] sm:$0xff]
    %v3152 = vld [vmem:[%s3139 + $0x60] sm:$0xff]
    %v3153 = vld [vmem:[%s3139 + $0x68] sm:$0xff]
    %v3154 = vld [vmem:[%s3139 + $0x70] sm:$0xff]
    %v3155 = vld [vmem:[%s3139 + $0x78] sm:$0xff]
    %v3156 = vld [vmem:[%s3139 + $0x80] sm:$0xff]
    %v3157 = vld [vmem:[%s3139 + $0x88] sm:$0xff]
    %v3158 = vld [vmem:[%s3139 + $0x90] sm:$0xff]
    %v3159 = vld [vmem:[%s3139 + $0x98] sm:$0xff]
    %v3160 = vld [vmem:[%s3139 + $0xa0] sm:$0xff]
    %v3161 = vld [vmem:[%s3139 + $0xa8] sm:$0xff]
    %v3162 = vld [vmem:[%s3139 + $0xb0] sm:$0xff]
    %v3163 = vld [vmem:[%s3139 + $0xb8] sm:$0xff]
    %v3164 = vld [vmem:[%s3139 + $0xc0] sm:$0xff]
    %v3165 = vld [vmem:[%s3139 + $0xc8] sm:$0xff]
    %v3166 = vld [vmem:[%s3139 + $0xd0] sm:$0xff]
    %v3167 = vld [vmem:[%s3139 + $0xd8] sm:$0xff]
    %v3168 = vld [vmem:[%s3139 + $0xe0] sm:$0xff]
    %v3169 = vld [vmem:[%s3139 + $0xe8] sm:$0xff]
    %v3170 = vsel %vm2655, %v3117, 0
    %v3172 = vsel %vm2655, %v3120, 0
    %v3174 = vsel %vm2655, %v3123, 0
    %v3176 = vsel %vm2655, %v3126, 0
    %v3178 = vsel %vm2655, %v3129, 0
    %v3180 = vsel %vm2655, %v3132, 0
    %v3182 = vsel %vm2655, %v3135, 0
    %v3184 = vsel %vm2655, %v3138, 0
    %3186 = vmatprep.subr.mxu0 %v3141
    %3187 = vmatpush1.msra.mxu0 %v3140
    %3188 = vmatprep.subr.mxu0 %v3143
    %3189 = vmatpush1.msra.mxu0 %v3142
    %3190 = vmatprep.subr.mxu0 %v3145
    %3191 = vmatpush1.msra.mxu0 %v3144
    %3192 = vmatprep.subr.mxu0 %v3147
    %3193 = vmatpush1.msra.mxu0 %v3146
    %3194 = vmatprep.subr.mxu0 %v3149
    %3195 = vmatpush1.msra.mxu0 %v3148
    %3196 = vmatprep.subr.mxu0 %v3151
    %3197 = vmatpush1.msra.mxu0 %v3150
    %3198 = vmatprep.subr.mxu0 %v3153
    %3199 = vmatpush1.msra.mxu0 %v3152
    %3200 = vmatprep.subr.mxu0 %v3155
    %3201 = vmatpush1.msra.mxu0 %v3154
    %3202 = vmatprep.subr.mxu0 %v3157
    %3203 = vmatpush1.msra.mxu0 %v3156
    %3204 = vmatprep.subr.mxu0 %v3159
    %3205 = vmatpush1.msra.mxu0 %v3158
    %3206 = vmatprep.subr.mxu0 %v3161
    %3207 = vmatpush1.msra.mxu0 %v3160
    %3208 = vmatprep.subr.mxu0 %v3163
    %3209 = vmatpush1.msra.mxu0 %v3162
    %3210 = vmatprep.subr.mxu0 %v3165
    %3211 = vmatpush1.msra.mxu0 %v3164
    %3212 = vmatprep.subr.mxu0 %v3167
    %3213 = vmatpush1.msra.mxu0 %v3166
    %3214 = vmatprep.subr.mxu0 %v3169
    %3215 = vmatpush1.msra.mxu0 %v3168
    %3216 = vmatprep.subr.mxu0 0.0
    %3217 = vmatpush1.msra.mxu0 0.0
    %3218 = vmatprep.subr.mxu0 0.0
    %3219 = vmatpush1.msra.mxu0 0.0
    %3220 = vmatprep.subr.mxu0 0.0
    %3221 = vmatpush1.msra.mxu0 0.0
    %3222 = vmatprep.subr.mxu0 0.0
    %3223 = vmatpush1.msra.mxu0 0.0
    %3224 = vmatprep.subr.mxu0 0.0
    %3225 = vmatpush1.msra.mxu0 0.0
    %3226 = vmatprep.subr.mxu0 0.0
    %3227 = vmatpush1.msra.mxu0 0.0
    %3228 = vmatprep.subr.mxu0 0.0
    %3229 = vmatpush1.msra.mxu0 0.0
    %3230 = vmatprep.subr.mxu0 0.0
    %3231 = vmatpush1.msra.mxu0 0.0
    %3232 = vmatprep.subr.mxu0 0.0
    %3233 = vmatpush1.msra.mxu0 0.0
    %3234 = vmatprep.subr.mxu0 0.0
    %3235 = vmatpush1.msra.mxu0 0.0
    %3236 = vmatprep.subr.mxu0 0.0
    %3237 = vmatpush1.msra.mxu0 0.0
    %3238 = vmatprep.subr.mxu0 0.0
    %3239 = vmatpush1.msra.mxu0 0.0
    %3240 = vmatprep.subr.mxu0 0.0
    %3241 = vmatpush1.msra.mxu0 0.0
    %3242 = vmatprep.subr.mxu0 0.0
    %3243 = vmatpush1.msra.mxu0 0.0
    %3244 = vmatprep.subr.mxu0 0.0
    %3245 = vmatpush1.msra.mxu0 0.0
    %3246 = vmatprep.subr.mxu0 0.0
    %3247 = vmatpush1.msra.mxu0 0.0
    %3248 = vmatprep.subr.mxu0 0.0
    %3249 = vmatpush1.msra.mxu0 0.0
    %3250 = vmatprep.mubr.f32.mxu0 0.0
    %3251 = vmatmul.mubr.f32.gmra.mrb[0].mxu0 %v3170
    %v3252 = vpop.f32.mrb[0].mxu0
    %v3253 = vadd.f32 0.0, %v3252
    %v3254 = vpop.f32.mrb[0].mxu0
    %v3255 = vadd.f32 0.0, %v3254
    %3256 = vmatprep.mubr.f32.mxu0 0.0
    %3257 = vmatmul.mubr.f32.gmra.mrb[0].mxu0 %v3172
    %v3258 = vpop.f32.mrb[0].mxu0
    %v3259 = vadd.f32 0.0, %v3258
    %v3260 = vpop.f32.mrb[0].mxu0
    %v3261 = vadd.f32 0.0, %v3260
    %3262 = vmatprep.mubr.f32.mxu0 0.0
    %3263 = vmatmul.mubr.f32.gmra.mrb[0].mxu0 %v3174
    %v3264 = vpop.f32.mrb[0].mxu0
    %v3265 = vadd.f32 0.0, %v3264
    %v3266 = vpop.f32.mrb[0].mxu0
    %v3267 = vadd.f32 0.0, %v3266
    %3268 = vmatprep.mubr.f32.mxu0 0.0
    %3269 = vmatmul.mubr.f32.gmra.mrb[0].mxu0 %v3176
    %v3270 = vpop.f32.mrb[0].mxu0
    %v3271 = vadd.f32 0.0, %v3270
    %v3272 = vpop.f32.mrb[0].mxu0
    %v3273 = vadd.f32 0.0, %v3272
    %3274 = vmatprep.mubr.f32.mxu0 0.0
    %3275 = vmatmul.mubr.f32.gmra.mrb[0].mxu0 %v3178
    %v3276 = vpop.f32.mrb[0].mxu0
    %v3277 = vadd.f32 0.0, %v3276
    %v3278 = vpop.f32.mrb[0].mxu0
    %v3279 = vadd.f32 0.0, %v3278
    %3280 = vmatprep.mubr.f32.mxu0 0.0
    %3281 = vmatmul.mubr.f32.gmra.mrb[0].mxu0 %v3180
    %v3282 = vpop.f32.mrb[0].mxu0
    %v3283 = vadd.f32 0.0, %v3282
    %v3284 = vpop.f32.mrb[0].mxu0
    %v3285 = vadd.f32 0.0, %v3284
    %3286 = vmatprep.mubr.f32.mxu0 0.0
    %3287 = vmatmul.mubr.f32.gmra.mrb[0].mxu0 %v3182
    %v3288 = vpop.f32.mrb[0].mxu0
    %v3289 = vadd.f32 0.0, %v3288
    %v3290 = vpop.f32.mrb[0].mxu0
    %v3291 = vadd.f32 0.0, %v3290
    %3292 = vmatprep.mubr.f32.mxu0 0.0
    %3293 = vmatmul.mubr.f32.gmra.mrb[0].mxu0 %v3184
    %v3294 = vpop.f32.mrb[0].mxu0
    %v3295 = vadd.f32 0.0, %v3294
    %v3296 = vpop.f32.mrb[0].mxu0
    %v3297 = vadd.f32 0.0, %v3296
    %3298 = vdwg.mxu0
    %v3299 = vadd.f32 %v3098, %v3253
    %v3300 = vadd.f32 %v3099, %v3255
    %v3301 = vadd.f32 %v3100, %v3259
    %v3302 = vadd.f32 %v3101, %v3261
    %v3303 = vadd.f32 %v3102, %v3265
    %v3304 = vadd.f32 %v3103, %v3267
    %v3305 = vadd.f32 %v3104, %v3271
    %v3306 = vadd.f32 %v3105, %v3273
    %v3307 = vadd.f32 %v3106, %v3277
    %v3308 = vadd.f32 %v3107, %v3279
    %v3309 = vadd.f32 %v3108, %v3283
    %v3310 = vadd.f32 %v3109, %v3285
    %v3311 = vadd.f32 %v3110, %v3289
    %v3312 = vadd.f32 %v3111, %v3291
    %v3313 = vadd.f32 %v3112, %v3295
    %v3314 = vadd.f32 %v3113, %v3297
    %v3315 = vrot.slane %v2538, 4
    %v3316 = vrot.slane %v2539, 4
    %v3317 = vsel %vm147, %v3315, %v3316
    %v3318 = vrot.slane %v2540, 4
    %v3319 = vrot.slane %v2541, 4
    %v3320 = vsel %vm147, %v3318, %v3319
    %v3321 = vrot.slane %v2542, 4
    %v3322 = vrot.slane %v2543, 4
    %v3323 = vsel %vm147, %v3321, %v3322
    %v3324 = vrot.slane %v2544, 4
    %v3325 = vrot.slane %v2545, 4
    %v3326 = vsel %vm147, %v3324, %v3325
    %v3327 = vrot.slane %v2546, 4
    %v3328 = vrot.slane %v2547, 4
    %v3329 = vsel %vm147, %v3327, %v3328
    %v3330 = vrot.slane %v2548, 4
    %v3331 = vrot.slane %v2549, 4
    %v3332 = vsel %vm147, %v3330, %v3331
    %v3333 = vrot.slane %v2550, 4
    %v3334 = vrot.slane %v2551, 4
    %v3335 = vsel %vm147, %v3333, %v3334
    %v3336 = vrot.slane %v2552, 4
    %v3337 = vrot.slane %v2553, 4
    %v3338 = vsel %vm147, %v3336, %v3337
    %s3339 = scalar_lea.vmem %s2, 960
    %v3340 = vld [vmem:[%s3339] sm:$0xff]
    %v3341 = vld [vmem:[%s3339 + $0x8] sm:$0xff]
    %v3342 = vld [vmem:[%s3339 + $0x10] sm:$0xff]
    %v3343 = vld [vmem:[%s3339 + $0x18] sm:$0xff]
    %v3344 = vld [vmem:[%s3339 + $0x20] sm:$0xff]
    %v3345 = vld [vmem:[%s3339 + $0x28] sm:$0xff]
    %v3346 = vld [vmem:[%s3339 + $0x30] sm:$0xff]
    %v3347 = vld [vmem:[%s3339 + $0x38] sm:$0xff]
    %v3348 = vld [vmem:[%s3339 + $0x40] sm:$0xff]
    %v3349 = vld [vmem:[%s3339 + $0x48] sm:$0xff]
    %v3350 = vld [vmem:[%s3339 + $0x50] sm:$0xff]
    %v3351 = vld [vmem:[%s3339 + $0x58] sm:$0xff]
    %v3352 = vld [vmem:[%s3339 + $0x60] sm:$0xff]
    %v3353 = vld [vmem:[%s3339 + $0x68] sm:$0xff]
    %v3354 = vld [vmem:[%s3339 + $0x70] sm:$0xff]
    %v3355 = vld [vmem:[%s3339 + $0x78] sm:$0xff]
    %v3356 = vld [vmem:[%s3339 + $0x80] sm:$0xff]
    %v3357 = vld [vmem:[%s3339 + $0x88] sm:$0xff]
    %v3358 = vld [vmem:[%s3339 + $0x90] sm:$0xff]
    %v3359 = vld [vmem:[%s3339 + $0x98] sm:$0xff]
    %v3360 = vld [vmem:[%s3339 + $0xa0] sm:$0xff]
    %v3361 = vld [vmem:[%s3339 + $0xa8] sm:$0xff]
    %v3362 = vld [vmem:[%s3339 + $0xb0] sm:$0xff]
    %v3363 = vld [vmem:[%s3339 + $0xb8] sm:$0xff]
    %v3364 = vld [vmem:[%s3339 + $0xc0] sm:$0xff]
    %v3365 = vld [vmem:[%s3339 + $0xc8] sm:$0xff]
    %v3366 = vld [vmem:[%s3339 + $0xd0] sm:$0xff]
    %v3367 = vld [vmem:[%s3339 + $0xd8] sm:$0xff]
    %v3368 = vld [vmem:[%s3339 + $0xe0] sm:$0xff]
    %v3369 = vld [vmem:[%s3339 + $0xe8] sm:$0xff]
    %v3370 = vsel %vm2655, %v3317, 0
    %v3372 = vsel %vm2655, %v3320, 0
    %v3374 = vsel %vm2655, %v3323, 0
    %v3376 = vsel %vm2655, %v3326, 0
    %v3378 = vsel %vm2655, %v3329, 0
    %v3380 = vsel %vm2655, %v3332, 0
    %v3382 = vsel %vm2655, %v3335, 0
    %v3384 = vsel %vm2655, %v3338, 0
    %3386 = vmatprep.subr.mxu0 %v3341
    %3387 = vmatpush1.msra.mxu0 %v3340
    %3388 = vmatprep.subr.mxu0 %v3343
    %3389 = vmatpush1.msra.mxu0 %v3342
    %3390 = vmatprep.subr.mxu0 %v3345
    %3391 = vmatpush1.msra.mxu0 %v3344
    %3392 = vmatprep.subr.mxu0 %v3347
    %3393 = vmatpush1.msra.mxu0 %v3346
    %3394 = vmatprep.subr.mxu0 %v3349
    %3395 = vmatpush1.msra.mxu0 %v3348
    %3396 = vmatprep.subr.mxu0 %v3351
    %3397 = vmatpush1.msra.mxu0 %v3350
    %3398 = vmatprep.subr.mxu0 %v3353
    %3399 = vmatpush1.msra.mxu0 %v3352
    %3400 = vmatprep.subr.mxu0 %v3355
    %3401 = vmatpush1.msra.mxu0 %v3354
    %3402 = vmatprep.subr.mxu0 %v3357
    %3403 = vmatpush1.msra.mxu0 %v3356
    %3404 = vmatprep.subr.mxu0 %v3359
    %3405 = vmatpush1.msra.mxu0 %v3358
    %3406 = vmatprep.subr.mxu0 %v3361
    %3407 = vmatpush1.msra.mxu0 %v3360
    %3408 = vmatprep.subr.mxu0 %v3363
    %3409 = vmatpush1.msra.mxu0 %v3362
    %3410 = vmatprep.subr.mxu0 %v3365
    %3411 = vmatpush1.msra.mxu0 %v3364
    %3412 = vmatprep.subr.mxu0 %v3367
    %3413 = vmatpush1.msra.mxu0 %v3366
    %3414 = vmatprep.subr.mxu0 %v3369
    %3415 = vmatpush1.msra.mxu0 %v3368
    %3416 = vmatprep.subr.mxu0 0.0
    %3417 = vmatpush1.msra.mxu0 0.0
    %3418 = vmatprep.subr.mxu0 0.0
    %3419 = vmatpush1.msra.mxu0 0.0
    %3420 = vmatprep.subr.mxu0 0.0
    %3421 = vmatpush1.msra.mxu0 0.0
    %3422 = vmatprep.subr.mxu0 0.0
    %3423 = vmatpush1.msra.mxu0 0.0
    %3424 = vmatprep.subr.mxu0 0.0
    %3425 = vmatpush1.msra.mxu0 0.0
    %3426 = vmatprep.subr.mxu0 0.0
    %3427 = vmatpush1.msra.mxu0 0.0
    %3428 = vmatprep.subr.mxu0 0.0
    %3429 = vmatpush1.msra.mxu0 0.0
    %3430 = vmatprep.subr.mxu0 0.0
    %3431 = vmatpush1.msra.mxu0 0.0
    %3432 = vmatprep.subr.mxu0 0.0
    %3433 = vmatpush1.msra.mxu0 0.0
    %3434 = vmatprep.subr.mxu0 0.0
    %3435 = vmatpush1.msra.mxu0 0.0
    %3436 = vmatprep.subr.mxu0 0.0
    %3437 = vmatpush1.msra.mxu0 0.0
    %3438 = vmatprep.subr.mxu0 0.0
    %3439 = vmatpush1.msra.mxu0 0.0
    %3440 = vmatprep.subr.mxu0 0.0
    %3441 = vmatpush1.msra.mxu0 0.0
    %3442 = vmatprep.subr.mxu0 0.0
    %3443 = vmatpush1.msra.mxu0 0.0
    %3444 = vmatprep.subr.mxu0 0.0
    %3445 = vmatpush1.msra.mxu0 0.0
    %3446 = vmatprep.subr.mxu0 0.0
    %3447 = vmatpush1.msra.mxu0 0.0
    %3448 = vmatprep.subr.mxu0 0.0
    %3449 = vmatpush1.msra.mxu0 0.0
    %3450 = vmatprep.mubr.f32.mxu0 0.0
    %3451 = vmatmul.mubr.f32.gmra.mrb[0].mxu0 %v3370
    %v3452 = vpop.f32.mrb[0].mxu0
    %v3453 = vadd.f32 0.0, %v3452
    %v3454 = vpop.f32.mrb[0].mxu0
    %v3455 = vadd.f32 0.0, %v3454
    %3456 = vmatprep.mubr.f32.mxu0 0.0
    %3457 = vmatmul.mubr.f32.gmra.mrb[0].mxu0 %v3372
    %v3458 = vpop.f32.mrb[0].mxu0
    %v3459 = vadd.f32 0.0, %v3458
    %v3460 = vpop.f32.mrb[0].mxu0
    %v3461 = vadd.f32 0.0, %v3460
    %3462 = vmatprep.mubr.f32.mxu0 0.0
    %3463 = vmatmul.mubr.f32.gmra.mrb[0].mxu0 %v3374
    %v3464 = vpop.f32.mrb[0].mxu0
    %v3465 = vadd.f32 0.0, %v3464
    %v3466 = vpop.f32.mrb[0].mxu0
    %v3467 = vadd.f32 0.0, %v3466
    %3468 = vmatprep.mubr.f32.mxu0 0.0
    %3469 = vmatmul.mubr.f32.gmra.mrb[0].mxu0 %v3376
    %v3470 = vpop.f32.mrb[0].mxu0
    %v3471 = vadd.f32 0.0, %v3470
    %v3472 = vpop.f32.mrb[0].mxu0
    %v3473 = vadd.f32 0.0, %v3472
    %3474 = vmatprep.mubr.f32.mxu0 0.0
    %3475 = vmatmul.mubr.f32.gmra.mrb[0].mxu0 %v3378
    %v3476 = vpop.f32.mrb[0].mxu0
    %v3477 = vadd.f32 0.0, %v3476
    %v3478 = vpop.f32.mrb[0].mxu0
    %v3479 = vadd.f32 0.0, %v3478
    %3480 = vmatprep.mubr.f32.mxu0 0.0
    %3481 = vmatmul.mubr.f32.gmra.mrb[0].mxu0 %v3380
    %v3482 = vpop.f32.mrb[0].mxu0
    %v3483 = vadd.f32 0.0, %v3482
    %v3484 = vpop.f32.mrb[0].mxu0
    %v3485 = vadd.f32 0.0, %v3484
    %3486 = vmatprep.mubr.f32.mxu0 0.0
    %3487 = vmatmul.mubr.f32.gmra.mrb[0].mxu0 %v3382
    %v3488 = vpop.f32.mrb[0].mxu0
    %v3489 = vadd.f32 0.0, %v3488
    %v3490 = vpop.f32.mrb[0].mxu0
    %v3491 = vadd.f32 0.0, %v3490
    %3492 = vmatprep.mubr.f32.mxu0 0.0
    %3493 = vmatmul.mubr.f32.gmra.mrb[0].mxu0 %v3384
    %v3494 = vpop.f32.mrb[0].mxu0
    %v3495 = vadd.f32 0.0, %v3494
    %v3496 = vpop.f32.mrb[0].mxu0
    %v3497 = vadd.f32 0.0, %v3496
    %3498 = vdwg.mxu0
    %v3499 = vadd.f32 %v3299, %v3453
    %v3500 = vadd.f32 %v3300, %v3455
    %v3501 = vadd.f32 %v3301, %v3459
    %v3502 = vadd.f32 %v3302, %v3461
    %v3503 = vadd.f32 %v3303, %v3465
    %v3504 = vadd.f32 %v3304, %v3467
    %v3505 = vadd.f32 %v3305, %v3471
    %v3506 = vadd.f32 %v3306, %v3473
    %v3507 = vadd.f32 %v3307, %v3477
    %v3508 = vadd.f32 %v3308, %v3479
    %v3509 = vadd.f32 %v3309, %v3483
    %v3510 = vadd.f32 %v3310, %v3485
    %v3511 = vadd.f32 %v3311, %v3489
    %v3512 = vadd.f32 %v3312, %v3491
    %v3513 = vadd.f32 %v3313, %v3495
    %v3514 = vadd.f32 %v3314, %v3497
    %v3515 = vmax.f32 %v3499, 0.0
    %v3516 = vmax.f32 %v3500, 0.0
    %v3517 = vmax.f32 %v3501, 0.0
    %v3518 = vmax.f32 %v3502, 0.0
    %v3519 = vmax.f32 %v3503, 0.0
    %v3520 = vmax.f32 %v3504, 0.0
    %v3521 = vmax.f32 %v3505, 0.0
    %v3522 = vmax.f32 %v3506, 0.0
    %v3523 = vmax.f32 %v3507, 0.0
    %v3524 = vmax.f32 %v3508, 0.0
    %v3525 = vmax.f32 %v3509, 0.0
    %v3526 = vmax.f32 %v3510, 0.0
    %v3527 = vmax.f32 %v3511, 0.0
    %v3528 = vmax.f32 %v3512, 0.0
    %v3529 = vmax.f32 %v3513, 0.0
    %v3530 = vmax.f32 %v3514, 0.0
    %v3531 = vld [vmem:[#allocation2] sm:$0xff]
    %v3532 = vld [vmem:[#allocation2 + $0x8] sm:$0xff]
    %v3533 = vld [vmem:[#allocation2 + $0x10] sm:$0xff]
    %v3534 = vld [vmem:[#allocation2 + $0x18] sm:$0xff]
    %v3535 = vld [vmem:[#allocation2 + $0x20] sm:$0xff]
    %v3536 = vld [vmem:[#allocation2 + $0x28] sm:$0xff]
    %v3537 = vld [vmem:[#allocation2 + $0x30] sm:$0xff]
    %v3538 = vld [vmem:[#allocation2 + $0x38] sm:$0xff]
    %v3539 = vld [vmem:[#allocation2 + $0x40] sm:$0xff]
    %v3540 = vld [vmem:[#allocation2 + $0x48] sm:$0xff]
    %v3541 = vld [vmem:[#allocation2 + $0x50] sm:$0xff]
    %v3542 = vld [vmem:[#allocation2 + $0x58] sm:$0xff]
    %v3543 = vld [vmem:[#allocation2 + $0x60] sm:$0xff]
    %v3544 = vld [vmem:[#allocation2 + $0x68] sm:$0xff]
    %v3545 = vld [vmem:[#allocation2 + $0x70] sm:$0xff]
    %v3546 = vld [vmem:[#allocation2 + $0x78] sm:$0xff]
    %v3547 = vld [vmem:[#allocation2 + $0x80] sm:$0xff]
    %v3548 = vld [vmem:[#allocation2 + $0x88] sm:$0xff]
    %v3549 = vld [vmem:[#allocation2 + $0x90] sm:$0xff]
    %v3550 = vld [vmem:[#allocation2 + $0x98] sm:$0xff]
    %s3551 = scalar_lea.vmem [#allocation2], 160
    %v3552 = vld [vmem:[%s3551] sm:$0xff]
    %v3553 = vld [vmem:[%s3551 + $0x8] sm:$0xff]
    %v3554 = vld [vmem:[%s3551 + $0x10] sm:$0xff]
    %v3555 = vld [vmem:[%s3551 + $0x18] sm:$0xff]
    %v3556 = vld [vmem:[%s3551 + $0x20] sm:$0xff]
    %v3557 = vld [vmem:[%s3551 + $0x28] sm:$0xff]
    %v3558 = vld [vmem:[%s3551 + $0x30] sm:$0xff]
    %v3559 = vld [vmem:[%s3551 + $0x38] sm:$0xff]
    %v3560 = vld [vmem:[%s3551 + $0x40] sm:$0xff]
    %v3561 = vld [vmem:[%s3551 + $0x48] sm:$0xff]
    %v3562 = vld [vmem:[%s3551 + $0x50] sm:$0xff]
    %v3563 = vld [vmem:[%s3551 + $0x58] sm:$0xff]
    %v3564 = vld [vmem:[%s3551 + $0x60] sm:$0xff]
    %v3565 = vld [vmem:[%s3551 + $0x68] sm:$0xff]
    %v3566 = vld [vmem:[%s3551 + $0x70] sm:$0xff]
    %v3567 = vld [vmem:[%s3551 + $0x78] sm:$0xff]
    %v3568 = vld [vmem:[%s3551 + $0x80] sm:$0xff]
    %v3569 = vld [vmem:[%s3551 + $0x88] sm:$0xff]
    %v3570 = vld [vmem:[%s3551 + $0x90] sm:$0xff]
    %v3571 = vld [vmem:[%s3551 + $0x98] sm:$0xff]
    %v3588 = vrot.slane %v3515, 1
    %vm3589 = vcmask 1041409
    %v3590 = vsel %vm3589, %v3517, %v3588
    %v3591 = vrot.slane %v3519, 7
    %vm3592 = vcmask 1042434
    %v3593 = vsel %vm3592, %v3591, %v3590
    %v3594 = vrot.slane %v3521, 6
    %vm3595 = vcmask 1043459
    %v3596 = vsel %vm3595, %v3594, %v3593
    %v3597 = vrot.slane %v3523, 5
    %vm3598 = vcmask 1044484
    %v3599 = vsel %vm3598, %v3597, %v3596
    %v3600 = vrot.slane %v3525, 4
    %vm3601 = vcmask 1045509
    %v3602 = vsel %vm3601, %v3600, %v3599
    %v3603 = vrot.slane %v3527, 3
    %vm3604 = vcmask 1046534
    %v3605 = vsel %vm3604, %v3603, %v3602
    %v3606 = vrot.slane %v3529, 2
    %vm3607 = vcmask 1047559
    %v3608 = vsel %vm3607, %v3606, %v3605
    %v3609 = vrot.slane %v3516, 1
    %v3610 = vsel %vm3589, %v3518, %v3609
    %v3611 = vrot.slane %v3520, 7
    %v3612 = vsel %vm3592, %v3611, %v3610
    %v3613 = vrot.slane %v3522, 6
    %v3614 = vsel %vm3595, %v3613, %v3612
    %v3615 = vrot.slane %v3524, 5
    %v3616 = vsel %vm3598, %v3615, %v3614
    %v3617 = vrot.slane %v3526, 4
    %v3618 = vsel %vm3601, %v3617, %v3616
    %v3619 = vrot.slane %v3528, 3
    %v3620 = vsel %vm3604, %v3619, %v3618
    %v3621 = vrot.slane %v3530, 2
    %v3622 = vsel %vm3607, %v3621, %v3620
    %vm3624 = vcmask 261120
    %v3625 = vsel %vm3624, %v3622, 0
    %3627 = vmatprep.subr.mxu0 0.0
    %3628 = vmatpush1.msra.mxu0 %v3552
    %3629 = vmatprep.subr.mxu0 0.0
    %3630 = vmatpush1.msra.mxu0 %v3553
    %3631 = vmatprep.subr.mxu0 0.0
    %3632 = vmatpush1.msra.mxu0 %v3554
    %3633 = vmatprep.subr.mxu0 0.0
    %3634 = vmatpush1.msra.mxu0 %v3555
    %3635 = vmatprep.subr.mxu0 0.0
    %3636 = vmatpush1.msra.mxu0 %v3556
    %3637 = vmatprep.subr.mxu0 0.0
    %3638 = vmatpush1.msra.mxu0 %v3557
    %3639 = vmatprep.subr.mxu0 0.0
    %3640 = vmatpush1.msra.mxu0 %v3558
    %3641 = vmatprep.subr.mxu0 0.0
    %3642 = vmatpush1.msra.mxu0 %v3559
    %3643 = vmatprep.subr.mxu0 0.0
    %3644 = vmatpush1.msra.mxu0 %v3560
    %3645 = vmatprep.subr.mxu0 0.0
    %3646 = vmatpush1.msra.mxu0 %v3561
    %3647 = vmatprep.subr.mxu0 0.0
    %3648 = vmatpush1.msra.mxu0 %v3562
    %3649 = vmatprep.subr.mxu0 0.0
    %3650 = vmatpush1.msra.mxu0 %v3563
    %3651 = vmatprep.subr.mxu0 0.0
    %3652 = vmatpush1.msra.mxu0 %v3564
    %3653 = vmatprep.subr.mxu0 0.0
    %3654 = vmatpush1.msra.mxu0 %v3565
    %3655 = vmatprep.subr.mxu0 0.0
    %3656 = vmatpush1.msra.mxu0 %v3566
    %3657 = vmatprep.subr.mxu0 0.0
    %3658 = vmatpush1.msra.mxu0 %v3567
    %3659 = vmatprep.subr.mxu0 0.0
    %3660 = vmatpush1.msra.mxu0 %v3568
    %3661 = vmatprep.subr.mxu0 0.0
    %3662 = vmatpush1.msra.mxu0 %v3569
    %3663 = vmatprep.subr.mxu0 0.0
    %3664 = vmatpush1.msra.mxu0 %v3570
    %3665 = vmatprep.subr.mxu0 0.0
    %3666 = vmatpush1.msra.mxu0 %v3571
    %3667 = vmatprep.subr.mxu0 0.0
    %3668 = vmatpush1.msra.mxu0 0.0
    %3669 = vmatprep.subr.mxu0 0.0
    %3670 = vmatpush1.msra.mxu0 0.0
    %3671 = vmatprep.subr.mxu0 0.0
    %3672 = vmatpush1.msra.mxu0 0.0
    %3673 = vmatprep.subr.mxu0 0.0
    %3674 = vmatpush1.msra.mxu0 0.0
    %3675 = vmatprep.subr.mxu0 0.0
    %3676 = vmatpush1.msra.mxu0 0.0
    %3677 = vmatprep.subr.mxu0 0.0
    %3678 = vmatpush1.msra.mxu0 0.0
    %3679 = vmatprep.subr.mxu0 0.0
    %3680 = vmatpush1.msra.mxu0 0.0
    %3681 = vmatprep.subr.mxu0 0.0
    %3682 = vmatpush1.msra.mxu0 0.0
    %3683 = vmatprep.subr.mxu0 0.0
    %3684 = vmatpush1.msra.mxu0 0.0
    %3685 = vmatprep.subr.mxu0 0.0
    %3686 = vmatpush1.msra.mxu0 0.0
    %3687 = vmatprep.subr.mxu0 0.0
    %3688 = vmatpush1.msra.mxu0 0.0
    %3689 = vmatprep.subr.mxu0 0.0
    %3690 = vmatpush1.msra.mxu0 0.0
    %3691 = vmatprep.mubr.f32.mxu0 %v3625
    %3692 = vmatmul.mubr.f32.gmra.mrb[0].mxu0 %v3608
    %v3693 = vpop.f32.mrb[0].mxu0
    %v3694 = vadd.f32 0.0, %v3693
    %v3695 = vpop.f32.mrb[0].mxu0
    %3696 = vdwg.mxu0
    %v3697 = vrot.slane %v3517, 7
    %v3698 = vsel %vm3589, %v3697, %v3515
    %v3699 = vrot.slane %v3519, 6
    %v3700 = vsel %vm3592, %v3699, %v3698
    %v3701 = vrot.slane %v3521, 5
    %v3702 = vsel %vm3595, %v3701, %v3700
    %v3703 = vrot.slane %v3523, 4
    %v3704 = vsel %vm3598, %v3703, %v3702
    %v3705 = vrot.slane %v3525, 3
    %v3706 = vsel %vm3601, %v3705, %v3704
    %v3707 = vrot.slane %v3527, 2
    %v3708 = vsel %vm3604, %v3707, %v3706
    %v3709 = vrot.slane %v3529, 1
    %v3710 = vsel %vm3607, %v3709, %v3708
    %v3711 = vrot.slane %v3518, 7
    %v3712 = vsel %vm3589, %v3711, %v3516
    %v3713 = vrot.slane %v3520, 6
    %v3714 = vsel %vm3592, %v3713, %v3712
    %v3715 = vrot.slane %v3522, 5
    %v3716 = vsel %vm3595, %v3715, %v3714
    %v3717 = vrot.slane %v3524, 4
    %v3718 = vsel %vm3598, %v3717, %v3716
    %v3719 = vrot.slane %v3526, 3
    %v3720 = vsel %vm3601, %v3719, %v3718
    %v3721 = vrot.slane %v3528, 2
    %v3722 = vsel %vm3604, %v3721, %v3720
    %v3723 = vrot.slane %v3530, 1
    %v3724 = vsel %vm3607, %v3723, %v3722
    %v3726 = vsel %vm3624, %v3724, 0
    %3728 = vmatprep.subr.mxu0 0.0
    %3729 = vmatpush1.msra.mxu0 %v3531
    %3730 = vmatprep.subr.mxu0 0.0
    %3731 = vmatpush1.msra.mxu0 %v3532
    %3732 = vmatprep.subr.mxu0 0.0
    %3733 = vmatpush1.msra.mxu0 %v3533
    %3734 = vmatprep.subr.mxu0 0.0
    %3735 = vmatpush1.msra.mxu0 %v3534
    %3736 = vmatprep.subr.mxu0 0.0
    %3737 = vmatpush1.msra.mxu0 %v3535
    %3738 = vmatprep.subr.mxu0 0.0
    %3739 = vmatpush1.msra.mxu0 %v3536
    %3740 = vmatprep.subr.mxu0 0.0
    %3741 = vmatpush1.msra.mxu0 %v3537
    %3742 = vmatprep.subr.mxu0 0.0
    %3743 = vmatpush1.msra.mxu0 %v3538
    %3744 = vmatprep.subr.mxu0 0.0
    %3745 = vmatpush1.msra.mxu0 %v3539
    %3746 = vmatprep.subr.mxu0 0.0
    %3747 = vmatpush1.msra.mxu0 %v3540
    %3748 = vmatprep.subr.mxu0 0.0
    %3749 = vmatpush1.msra.mxu0 %v3541
    %3750 = vmatprep.subr.mxu0 0.0
    %3751 = vmatpush1.msra.mxu0 %v3542
    %3752 = vmatprep.subr.mxu0 0.0
    %3753 = vmatpush1.msra.mxu0 %v3543
    %3754 = vmatprep.subr.mxu0 0.0
    %3755 = vmatpush1.msra.mxu0 %v3544
    %3756 = vmatprep.subr.mxu0 0.0
    %3757 = vmatpush1.msra.mxu0 %v3545
    %3758 = vmatprep.subr.mxu0 0.0
    %3759 = vmatpush1.msra.mxu0 %v3546
    %3760 = vmatprep.subr.mxu0 0.0
    %3761 = vmatpush1.msra.mxu0 %v3547
    %3762 = vmatprep.subr.mxu0 0.0
    %3763 = vmatpush1.msra.mxu0 %v3548
    %3764 = vmatprep.subr.mxu0 0.0
    %3765 = vmatpush1.msra.mxu0 %v3549
    %3766 = vmatprep.subr.mxu0 0.0
    %3767 = vmatpush1.msra.mxu0 %v3550
    %3768 = vmatprep.subr.mxu0 0.0
    %3769 = vmatpush1.msra.mxu0 0.0
    %3770 = vmatprep.subr.mxu0 0.0
    %3771 = vmatpush1.msra.mxu0 0.0
    %3772 = vmatprep.subr.mxu0 0.0
    %3773 = vmatpush1.msra.mxu0 0.0
    %3774 = vmatprep.subr.mxu0 0.0
    %3775 = vmatpush1.msra.mxu0 0.0
    %3776 = vmatprep.subr.mxu0 0.0
    %3777 = vmatpush1.msra.mxu0 0.0
    %3778 = vmatprep.subr.mxu0 0.0
    %3779 = vmatpush1.msra.mxu0 0.0
    %3780 = vmatprep.subr.mxu0 0.0
    %3781 = vmatpush1.msra.mxu0 0.0
    %3782 = vmatprep.subr.mxu0 0.0
    %3783 = vmatpush1.msra.mxu0 0.0
    %3784 = vmatprep.subr.mxu0 0.0
    %3785 = vmatpush1.msra.mxu0 0.0
    %3786 = vmatprep.subr.mxu0 0.0
    %3787 = vmatpush1.msra.mxu0 0.0
    %3788 = vmatprep.subr.mxu0 0.0
    %3789 = vmatpush1.msra.mxu0 0.0
    %3790 = vmatprep.subr.mxu0 0.0
    %3791 = vmatpush1.msra.mxu0 0.0
    %3792 = vmatprep.mubr.f32.mxu0 %v3726
    %3793 = vmatmul.mubr.f32.gmra.mrb[0].mxu0 %v3710
    %v3794 = vpop.f32.mrb[0].mxu0
    %v3795 = vadd.f32 %v3694, %v3794
    %v3796 = vpop.f32.mrb[0].mxu0
    %3797 = vdwg.mxu0
    %s3798 = scalar_lea.vmem [#allocation2], 320
    %v3799 = vld [vmem:[%s3798] sm:$0xff]
    %v3800 = vld [vmem:[%s3798 + $0x8] sm:$0xff]
    %v3801 = vld [vmem:[%s3798 + $0x10] sm:$0xff]
    %v3802 = vld [vmem:[%s3798 + $0x18] sm:$0xff]
    %v3803 = vld [vmem:[%s3798 + $0x20] sm:$0xff]
    %v3804 = vld [vmem:[%s3798 + $0x28] sm:$0xff]
    %v3805 = vld [vmem:[%s3798 + $0x30] sm:$0xff]
    %v3806 = vld [vmem:[%s3798 + $0x38] sm:$0xff]
    %v3807 = vld [vmem:[%s3798 + $0x40] sm:$0xff]
    %v3808 = vld [vmem:[%s3798 + $0x48] sm:$0xff]
    %v3809 = vld [vmem:[%s3798 + $0x50] sm:$0xff]
    %v3810 = vld [vmem:[%s3798 + $0x58] sm:$0xff]
    %v3811 = vld [vmem:[%s3798 + $0x60] sm:$0xff]
    %v3812 = vld [vmem:[%s3798 + $0x68] sm:$0xff]
    %v3813 = vld [vmem:[%s3798 + $0x70] sm:$0xff]
    %v3814 = vld [vmem:[%s3798 + $0x78] sm:$0xff]
    %v3815 = vld [vmem:[%s3798 + $0x80] sm:$0xff]
    %v3816 = vld [vmem:[%s3798 + $0x88] sm:$0xff]
    %v3817 = vld [vmem:[%s3798 + $0x90] sm:$0xff]
    %v3818 = vld [vmem:[%s3798 + $0x98] sm:$0xff]
    %v3819 = vrot.slane %v3515, 2
    %v3820 = vrot.slane %v3517, 1
    %v3821 = vsel %vm3589, %v3820, %v3819
    %v3822 = vsel %vm3592, %v3519, %v3821
    %v3823 = vrot.slane %v3521, 7
    %v3824 = vsel %vm3595, %v3823, %v3822
    %v3825 = vrot.slane %v3523, 6
    %v3826 = vsel %vm3598, %v3825, %v3824
    %v3827 = vrot.slane %v3525, 5
    %v3828 = vsel %vm3601, %v3827, %v3826
    %v3829 = vrot.slane %v3527, 4
    %v3830 = vsel %vm3604, %v3829, %v3828
    %v3831 = vrot.slane %v3529, 3
    %v3832 = vsel %vm3607, %v3831, %v3830
    %v3833 = vrot.slane %v3516, 2
    %v3834 = vrot.slane %v3518, 1
    %v3835 = vsel %vm3589, %v3834, %v3833
    %v3836 = vsel %vm3592, %v3520, %v3835
    %v3837 = vrot.slane %v3522, 7
    %v3838 = vsel %vm3595, %v3837, %v3836
    %v3839 = vrot.slane %v3524, 6
    %v3840 = vsel %vm3598, %v3839, %v3838
    %v3841 = vrot.slane %v3526, 5
    %v3842 = vsel %vm3601, %v3841, %v3840
    %v3843 = vrot.slane %v3528, 4
    %v3844 = vsel %vm3604, %v3843, %v3842
    %v3845 = vrot.slane %v3530, 3
    %v3846 = vsel %vm3607, %v3845, %v3844
    %v3848 = vsel %vm3624, %v3846, 0
    %3850 = vmatprep.subr.mxu0 0.0
    %3851 = vmatpush1.msra.mxu0 %v3799
    %3852 = vmatprep.subr.mxu0 0.0
    %3853 = vmatpush1.msra.mxu0 %v3800
    %3854 = vmatprep.subr.mxu0 0.0
    %3855 = vmatpush1.msra.mxu0 %v3801
    %3856 = vmatprep.subr.mxu0 0.0
    %3857 = vmatpush1.msra.mxu0 %v3802
    %3858 = vmatprep.subr.mxu0 0.0
    %3859 = vmatpush1.msra.mxu0 %v3803
    %3860 = vmatprep.subr.mxu0 0.0
    %3861 = vmatpush1.msra.mxu0 %v3804
    %3862 = vmatprep.subr.mxu0 0.0
    %3863 = vmatpush1.msra.mxu0 %v3805
    %3864 = vmatprep.subr.mxu0 0.0
    %3865 = vmatpush1.msra.mxu0 %v3806
    %3866 = vmatprep.subr.mxu0 0.0
    %3867 = vmatpush1.msra.mxu0 %v3807
    %3868 = vmatprep.subr.mxu0 0.0
    %3869 = vmatpush1.msra.mxu0 %v3808
    %3870 = vmatprep.subr.mxu0 0.0
    %3871 = vmatpush1.msra.mxu0 %v3809
    %3872 = vmatprep.subr.mxu0 0.0
    %3873 = vmatpush1.msra.mxu0 %v3810
    %3874 = vmatprep.subr.mxu0 0.0
    %3875 = vmatpush1.msra.mxu0 %v3811
    %3876 = vmatprep.subr.mxu0 0.0
    %3877 = vmatpush1.msra.mxu0 %v3812
    %3878 = vmatprep.subr.mxu0 0.0
    %3879 = vmatpush1.msra.mxu0 %v3813
    %3880 = vmatprep.subr.mxu0 0.0
    %3881 = vmatpush1.msra.mxu0 %v3814
    %3882 = vmatprep.subr.mxu0 0.0
    %3883 = vmatpush1.msra.mxu0 %v3815
    %3884 = vmatprep.subr.mxu0 0.0
    %3885 = vmatpush1.msra.mxu0 %v3816
    %3886 = vmatprep.subr.mxu0 0.0
    %3887 = vmatpush1.msra.mxu0 %v3817
    %3888 = vmatprep.subr.mxu0 0.0
    %3889 = vmatpush1.msra.mxu0 %v3818
    %3890 = vmatprep.subr.mxu0 0.0
    %3891 = vmatpush1.msra.mxu0 0.0
    %3892 = vmatprep.subr.mxu0 0.0
    %3893 = vmatpush1.msra.mxu0 0.0
    %3894 = vmatprep.subr.mxu0 0.0
    %3895 = vmatpush1.msra.mxu0 0.0
    %3896 = vmatprep.subr.mxu0 0.0
    %3897 = vmatpush1.msra.mxu0 0.0
    %3898 = vmatprep.subr.mxu0 0.0
    %3899 = vmatpush1.msra.mxu0 0.0
    %3900 = vmatprep.subr.mxu0 0.0
    %3901 = vmatpush1.msra.mxu0 0.0
    %3902 = vmatprep.subr.mxu0 0.0
    %3903 = vmatpush1.msra.mxu0 0.0
    %3904 = vmatprep.subr.mxu0 0.0
    %3905 = vmatpush1.msra.mxu0 0.0
    %3906 = vmatprep.subr.mxu0 0.0
    %3907 = vmatpush1.msra.mxu0 0.0
    %3908 = vmatprep.subr.mxu0 0.0
    %3909 = vmatpush1.msra.mxu0 0.0
    %3910 = vmatprep.subr.mxu0 0.0
    %3911 = vmatpush1.msra.mxu0 0.0
    %3912 = vmatprep.subr.mxu0 0.0
    %3913 = vmatpush1.msra.mxu0 0.0
    %3914 = vmatprep.mubr.f32.mxu0 %v3848
    %3915 = vmatmul.mubr.f32.gmra.mrb[0].mxu0 %v3832
    %v3916 = vpop.f32.mrb[0].mxu0
    %v3917 = vadd.f32 0.0, %v3916
    %v3918 = vpop.f32.mrb[0].mxu0
    %3919 = vdwg.mxu0
    %v3920 = vadd.f32 %v3795, %v3917
    %s3921 = scalar_lea.vmem [#allocation2], 480
    %v3922 = vld [vmem:[%s3921] sm:$0xff]
    %v3923 = vld [vmem:[%s3921 + $0x8] sm:$0xff]
    %v3924 = vld [vmem:[%s3921 + $0x10] sm:$0xff]
    %v3925 = vld [vmem:[%s3921 + $0x18] sm:$0xff]
    %v3926 = vld [vmem:[%s3921 + $0x20] sm:$0xff]
    %v3927 = vld [vmem:[%s3921 + $0x28] sm:$0xff]
    %v3928 = vld [vmem:[%s3921 + $0x30] sm:$0xff]
    %v3929 = vld [vmem:[%s3921 + $0x38] sm:$0xff]
    %v3930 = vld [vmem:[%s3921 + $0x40] sm:$0xff]
    %v3931 = vld [vmem:[%s3921 + $0x48] sm:$0xff]
    %v3932 = vld [vmem:[%s3921 + $0x50] sm:$0xff]
    %v3933 = vld [vmem:[%s3921 + $0x58] sm:$0xff]
    %v3934 = vld [vmem:[%s3921 + $0x60] sm:$0xff]
    %v3935 = vld [vmem:[%s3921 + $0x68] sm:$0xff]
    %v3936 = vld [vmem:[%s3921 + $0x70] sm:$0xff]
    %v3937 = vld [vmem:[%s3921 + $0x78] sm:$0xff]
    %v3938 = vld [vmem:[%s3921 + $0x80] sm:$0xff]
    %v3939 = vld [vmem:[%s3921 + $0x88] sm:$0xff]
    %v3940 = vld [vmem:[%s3921 + $0x90] sm:$0xff]
    %v3941 = vld [vmem:[%s3921 + $0x98] sm:$0xff]
    %v3942 = vrot.slane %v3515, 3
    %v3943 = vrot.slane %v3517, 2
    %v3944 = vsel %vm3589, %v3943, %v3942
    %v3945 = vrot.slane %v3519, 1
    %v3946 = vsel %vm3592, %v3945, %v3944
    %v3947 = vsel %vm3595, %v3521, %v3946
    %v3948 = vrot.slane %v3523, 7
    %v3949 = vsel %vm3598, %v3948, %v3947
    %v3950 = vrot.slane %v3525, 6
    %v3951 = vsel %vm3601, %v3950, %v3949
    %v3952 = vrot.slane %v3527, 5
    %v3953 = vsel %vm3604, %v3952, %v3951
    %v3954 = vrot.slane %v3529, 4
    %v3955 = vsel %vm3607, %v3954, %v3953
    %v3956 = vrot.slane %v3516, 3
    %v3957 = vrot.slane %v3518, 2
    %v3958 = vsel %vm3589, %v3957, %v3956
    %v3959 = vrot.slane %v3520, 1
    %v3960 = vsel %vm3592, %v3959, %v3958
    %v3961 = vsel %vm3595, %v3522, %v3960
    %v3962 = vrot.slane %v3524, 7
    %v3963 = vsel %vm3598, %v3962, %v3961
    %v3964 = vrot.slane %v3526, 6
    %v3965 = vsel %vm3601, %v3964, %v3963
    %v3966 = vrot.slane %v3528, 5
    %v3967 = vsel %vm3604, %v3966, %v3965
    %v3968 = vrot.slane %v3530, 4
    %v3969 = vsel %vm3607, %v3968, %v3967
    %v3971 = vsel %vm3624, %v3969, 0
    %3973 = vmatprep.subr.mxu0 0.0
    %3974 = vmatpush1.msra.mxu0 %v3922
    %3975 = vmatprep.subr.mxu0 0.0
    %3976 = vmatpush1.msra.mxu0 %v3923
    %3977 = vmatprep.subr.mxu0 0.0
    %3978 = vmatpush1.msra.mxu0 %v3924
    %3979 = vmatprep.subr.mxu0 0.0
    %3980 = vmatpush1.msra.mxu0 %v3925
    %3981 = vmatprep.subr.mxu0 0.0
    %3982 = vmatpush1.msra.mxu0 %v3926
    %3983 = vmatprep.subr.mxu0 0.0
    %3984 = vmatpush1.msra.mxu0 %v3927
    %3985 = vmatprep.subr.mxu0 0.0
    %3986 = vmatpush1.msra.mxu0 %v3928
    %3987 = vmatprep.subr.mxu0 0.0
    %3988 = vmatpush1.msra.mxu0 %v3929
    %3989 = vmatprep.subr.mxu0 0.0
    %3990 = vmatpush1.msra.mxu0 %v3930
    %3991 = vmatprep.subr.mxu0 0.0
    %3992 = vmatpush1.msra.mxu0 %v3931
    %3993 = vmatprep.subr.mxu0 0.0
    %3994 = vmatpush1.msra.mxu0 %v3932
    %3995 = vmatprep.subr.mxu0 0.0
    %3996 = vmatpush1.msra.mxu0 %v3933
    %3997 = vmatprep.subr.mxu0 0.0
    %3998 = vmatpush1.msra.mxu0 %v3934
    %3999 = vmatprep.subr.mxu0 0.0
    %4000 = vmatpush1.msra.mxu0 %v3935
    %4001 = vmatprep.subr.mxu0 0.0
    %4002 = vmatpush1.msra.mxu0 %v3936
    %4003 = vmatprep.subr.mxu0 0.0
    %4004 = vmatpush1.msra.mxu0 %v3937
    %4005 = vmatprep.subr.mxu0 0.0
    %4006 = vmatpush1.msra.mxu0 %v3938
    %4007 = vmatprep.subr.mxu0 0.0
    %4008 = vmatpush1.msra.mxu0 %v3939
    %4009 = vmatprep.subr.mxu0 0.0
    %4010 = vmatpush1.msra.mxu0 %v3940
    %4011 = vmatprep.subr.mxu0 0.0
    %4012 = vmatpush1.msra.mxu0 %v3941
    %4013 = vmatprep.subr.mxu0 0.0
    %4014 = vmatpush1.msra.mxu0 0.0
    %4015 = vmatprep.subr.mxu0 0.0
    %4016 = vmatpush1.msra.mxu0 0.0
    %4017 = vmatprep.subr.mxu0 0.0
    %4018 = vmatpush1.msra.mxu0 0.0
    %4019 = vmatprep.subr.mxu0 0.0
    %4020 = vmatpush1.msra.mxu0 0.0
    %4021 = vmatprep.subr.mxu0 0.0
    %4022 = vmatpush1.msra.mxu0 0.0
    %4023 = vmatprep.subr.mxu0 0.0
    %4024 = vmatpush1.msra.mxu0 0.0
    %4025 = vmatprep.subr.mxu0 0.0
    %4026 = vmatpush1.msra.mxu0 0.0
    %4027 = vmatprep.subr.mxu0 0.0
    %4028 = vmatpush1.msra.mxu0 0.0
    %4029 = vmatprep.subr.mxu0 0.0
    %4030 = vmatpush1.msra.mxu0 0.0
    %4031 = vmatprep.subr.mxu0 0.0
    %4032 = vmatpush1.msra.mxu0 0.0
    %4033 = vmatprep.subr.mxu0 0.0
    %4034 = vmatpush1.msra.mxu0 0.0
    %4035 = vmatprep.subr.mxu0 0.0
    %4036 = vmatpush1.msra.mxu0 0.0
    %4037 = vmatprep.mubr.f32.mxu0 %v3971
    %4038 = vmatmul.mubr.f32.gmra.mrb[0].mxu0 %v3955
    %v4039 = vpop.f32.mrb[0].mxu0
    %v4040 = vadd.f32 0.0, %v4039
    %v4041 = vpop.f32.mrb[0].mxu0
    %4042 = vdwg.mxu0
    %v4043 = vadd.f32 %v3920, %v4040
    %s4044 = scalar_lea.vmem [#allocation2], 640
    %v4045 = vld [vmem:[%s4044] sm:$0xff]
    %v4046 = vld [vmem:[%s4044 + $0x8] sm:$0xff]
    %v4047 = vld [vmem:[%s4044 + $0x10] sm:$0xff]
    %v4048 = vld [vmem:[%s4044 + $0x18] sm:$0xff]
    %v4049 = vld [vmem:[%s4044 + $0x20] sm:$0xff]
    %v4050 = vld [vmem:[%s4044 + $0x28] sm:$0xff]
    %v4051 = vld [vmem:[%s4044 + $0x30] sm:$0xff]
    %v4052 = vld [vmem:[%s4044 + $0x38] sm:$0xff]
    %v4053 = vld [vmem:[%s4044 + $0x40] sm:$0xff]
    %v4054 = vld [vmem:[%s4044 + $0x48] sm:$0xff]
    %v4055 = vld [vmem:[%s4044 + $0x50] sm:$0xff]
    %v4056 = vld [vmem:[%s4044 + $0x58] sm:$0xff]
    %v4057 = vld [vmem:[%s4044 + $0x60] sm:$0xff]
    %v4058 = vld [vmem:[%s4044 + $0x68] sm:$0xff]
    %v4059 = vld [vmem:[%s4044 + $0x70] sm:$0xff]
    %v4060 = vld [vmem:[%s4044 + $0x78] sm:$0xff]
    %v4061 = vld [vmem:[%s4044 + $0x80] sm:$0xff]
    %v4062 = vld [vmem:[%s4044 + $0x88] sm:$0xff]
    %v4063 = vld [vmem:[%s4044 + $0x90] sm:$0xff]
    %v4064 = vld [vmem:[%s4044 + $0x98] sm:$0xff]
    %v4065 = vrot.slane %v3515, 4
    %v4066 = vrot.slane %v3517, 3
    %v4067 = vsel %vm3589, %v4066, %v4065
    %v4068 = vrot.slane %v3519, 2
    %v4069 = vsel %vm3592, %v4068, %v4067
    %v4070 = vrot.slane %v3521, 1
    %v4071 = vsel %vm3595, %v4070, %v4069
    %v4072 = vsel %vm3598, %v3523, %v4071
    %v4073 = vrot.slane %v3525, 7
    %v4074 = vsel %vm3601, %v4073, %v4072
    %v4075 = vrot.slane %v3527, 6
    %v4076 = vsel %vm3604, %v4075, %v4074
    %v4077 = vrot.slane %v3529, 5
    %v4078 = vsel %vm3607, %v4077, %v4076
    %v4079 = vrot.slane %v3516, 4
    %v4080 = vrot.slane %v3518, 3
    %v4081 = vsel %vm3589, %v4080, %v4079
    %v4082 = vrot.slane %v3520, 2
    %v4083 = vsel %vm3592, %v4082, %v4081
    %v4084 = vrot.slane %v3522, 1
    %v4085 = vsel %vm3595, %v4084, %v4083
    %v4086 = vsel %vm3598, %v3524, %v4085
    %v4087 = vrot.slane %v3526, 7
    %v4088 = vsel %vm3601, %v4087, %v4086
    %v4089 = vrot.slane %v3528, 6
    %v4090 = vsel %vm3604, %v4089, %v4088
    %v4091 = vrot.slane %v3530, 5
    %v4092 = vsel %vm3607, %v4091, %v4090
    %v4094 = vsel %vm3624, %v4092, 0
    %4096 = vmatprep.subr.mxu0 0.0
    %4097 = vmatpush1.msra.mxu0 %v4045
    %4098 = vmatprep.subr.mxu0 0.0
    %4099 = vmatpush1.msra.mxu0 %v4046
    %4100 = vmatprep.subr.mxu0 0.0
    %4101 = vmatpush1.msra.mxu0 %v4047
    %4102 = vmatprep.subr.mxu0 0.0
    %4103 = vmatpush1.msra.mxu0 %v4048
    %4104 = vmatprep.subr.mxu0 0.0
    %4105 = vmatpush1.msra.mxu0 %v4049
    %4106 = vmatprep.subr.mxu0 0.0
    %4107 = vmatpush1.msra.mxu0 %v4050
    %4108 = vmatprep.subr.mxu0 0.0
    %4109 = vmatpush1.msra.mxu0 %v4051
    %4110 = vmatprep.subr.mxu0 0.0
    %4111 = vmatpush1.msra.mxu0 %v4052
    %4112 = vmatprep.subr.mxu0 0.0
    %4113 = vmatpush1.msra.mxu0 %v4053
    %4114 = vmatprep.subr.mxu0 0.0
    %4115 = vmatpush1.msra.mxu0 %v4054
    %4116 = vmatprep.subr.mxu0 0.0
    %4117 = vmatpush1.msra.mxu0 %v4055
    %4118 = vmatprep.subr.mxu0 0.0
    %4119 = vmatpush1.msra.mxu0 %v4056
    %4120 = vmatprep.subr.mxu0 0.0
    %4121 = vmatpush1.msra.mxu0 %v4057
    %4122 = vmatprep.subr.mxu0 0.0
    %4123 = vmatpush1.msra.mxu0 %v4058
    %4124 = vmatprep.subr.mxu0 0.0
    %4125 = vmatpush1.msra.mxu0 %v4059
    %4126 = vmatprep.subr.mxu0 0.0
    %4127 = vmatpush1.msra.mxu0 %v4060
    %4128 = vmatprep.subr.mxu0 0.0
    %4129 = vmatpush1.msra.mxu0 %v4061
    %4130 = vmatprep.subr.mxu0 0.0
    %4131 = vmatpush1.msra.mxu0 %v4062
    %4132 = vmatprep.subr.mxu0 0.0
    %4133 = vmatpush1.msra.mxu0 %v4063
    %4134 = vmatprep.subr.mxu0 0.0
    %4135 = vmatpush1.msra.mxu0 %v4064
    %4136 = vmatprep.subr.mxu0 0.0
    %4137 = vmatpush1.msra.mxu0 0.0
    %4138 = vmatprep.subr.mxu0 0.0
    %4139 = vmatpush1.msra.mxu0 0.0
    %4140 = vmatprep.subr.mxu0 0.0
    %4141 = vmatpush1.msra.mxu0 0.0
    %4142 = vmatprep.subr.mxu0 0.0
    %4143 = vmatpush1.msra.mxu0 0.0
    %4144 = vmatprep.subr.mxu0 0.0
    %4145 = vmatpush1.msra.mxu0 0.0
    %4146 = vmatprep.subr.mxu0 0.0
    %4147 = vmatpush1.msra.mxu0 0.0
    %4148 = vmatprep.subr.mxu0 0.0
    %4149 = vmatpush1.msra.mxu0 0.0
    %4150 = vmatprep.subr.mxu0 0.0
    %4151 = vmatpush1.msra.mxu0 0.0
    %4152 = vmatprep.subr.mxu0 0.0
    %4153 = vmatpush1.msra.mxu0 0.0
    %4154 = vmatprep.subr.mxu0 0.0
    %4155 = vmatpush1.msra.mxu0 0.0
    %4156 = vmatprep.subr.mxu0 0.0
    %4157 = vmatpush1.msra.mxu0 0.0
    %4158 = vmatprep.subr.mxu0 0.0
    %4159 = vmatpush1.msra.mxu0 0.0
    %4160 = vmatprep.mubr.f32.mxu0 %v4094
    %4161 = vmatmul.mubr.f32.gmra.mrb[0].mxu0 %v4078
    %v4162 = vpop.f32.mrb[0].mxu0
    %v4163 = vadd.f32 0.0, %v4162
    %v4164 = vpop.f32.mrb[0].mxu0
    %4165 = vdwg.mxu0
    %v4166 = vadd.f32 %v4043, %v4163
    %s4167 = scalar_lea.vmem [#allocation2], 800
    %v4168 = vld [vmem:[%s4167] sm:$0xff]
    %v4169 = vld [vmem:[%s4167 + $0x8] sm:$0xff]
    %v4170 = vld [vmem:[%s4167 + $0x10] sm:$0xff]
    %v4171 = vld [vmem:[%s4167 + $0x18] sm:$0xff]
    %v4172 = vld [vmem:[%s4167 + $0x20] sm:$0xff]
    %v4173 = vld [vmem:[%s4167 + $0x28] sm:$0xff]
    %v4174 = vld [vmem:[%s4167 + $0x30] sm:$0xff]
    %v4175 = vld [vmem:[%s4167 + $0x38] sm:$0xff]
    %v4176 = vld [vmem:[%s4167 + $0x40] sm:$0xff]
    %v4177 = vld [vmem:[%s4167 + $0x48] sm:$0xff]
    %v4178 = vld [vmem:[%s4167 + $0x50] sm:$0xff]
    %v4179 = vld [vmem:[%s4167 + $0x58] sm:$0xff]
    %v4180 = vld [vmem:[%s4167 + $0x60] sm:$0xff]
    %v4181 = vld [vmem:[%s4167 + $0x68] sm:$0xff]
    %v4182 = vld [vmem:[%s4167 + $0x70] sm:$0xff]
    %v4183 = vld [vmem:[%s4167 + $0x78] sm:$0xff]
    %v4184 = vld [vmem:[%s4167 + $0x80] sm:$0xff]
    %v4185 = vld [vmem:[%s4167 + $0x88] sm:$0xff]
    %v4186 = vld [vmem:[%s4167 + $0x90] sm:$0xff]
    %v4187 = vld [vmem:[%s4167 + $0x98] sm:$0xff]
    %v4188 = vrot.slane %v3515, 5
    %v4189 = vrot.slane %v3517, 4
    %v4190 = vsel %vm3589, %v4189, %v4188
    %v4191 = vrot.slane %v3519, 3
    %v4192 = vsel %vm3592, %v4191, %v4190
    %v4193 = vrot.slane %v3521, 2
    %v4194 = vsel %vm3595, %v4193, %v4192
    %v4195 = vrot.slane %v3523, 1
    %v4196 = vsel %vm3598, %v4195, %v4194
    %v4197 = vsel %vm3601, %v3525, %v4196
    %v4198 = vrot.slane %v3527, 7
    %v4199 = vsel %vm3604, %v4198, %v4197
    %v4200 = vrot.slane %v3529, 6
    %v4201 = vsel %vm3607, %v4200, %v4199
    %v4202 = vrot.slane %v3516, 5
    %v4203 = vrot.slane %v3518, 4
    %v4204 = vsel %vm3589, %v4203, %v4202
    %v4205 = vrot.slane %v3520, 3
    %v4206 = vsel %vm3592, %v4205, %v4204
    %v4207 = vrot.slane %v3522, 2
    %v4208 = vsel %vm3595, %v4207, %v4206
    %v4209 = vrot.slane %v3524, 1
    %v4210 = vsel %vm3598, %v4209, %v4208
    %v4211 = vsel %vm3601, %v3526, %v4210
    %v4212 = vrot.slane %v3528, 7
    %v4213 = vsel %vm3604, %v4212, %v4211
    %v4214 = vrot.slane %v3530, 6
    %v4215 = vsel %vm3607, %v4214, %v4213
    %v4217 = vsel %vm3624, %v4215, 0
    %4219 = vmatprep.subr.mxu0 0.0
    %4220 = vmatpush1.msra.mxu0 %v4168
    %4221 = vmatprep.subr.mxu0 0.0
    %4222 = vmatpush1.msra.mxu0 %v4169
    %4223 = vmatprep.subr.mxu0 0.0
    %4224 = vmatpush1.msra.mxu0 %v4170
    %4225 = vmatprep.subr.mxu0 0.0
    %4226 = vmatpush1.msra.mxu0 %v4171
    %4227 = vmatprep.subr.mxu0 0.0
    %4228 = vmatpush1.msra.mxu0 %v4172
    %4229 = vmatprep.subr.mxu0 0.0
    %4230 = vmatpush1.msra.mxu0 %v4173
    %4231 = vmatprep.subr.mxu0 0.0
    %4232 = vmatpush1.msra.mxu0 %v4174
    %4233 = vmatprep.subr.mxu0 0.0
    %4234 = vmatpush1.msra.mxu0 %v4175
    %4235 = vmatprep.subr.mxu0 0.0
    %4236 = vmatpush1.msra.mxu0 %v4176
    %4237 = vmatprep.subr.mxu0 0.0
    %4238 = vmatpush1.msra.mxu0 %v4177
    %4239 = vmatprep.subr.mxu0 0.0
    %4240 = vmatpush1.msra.mxu0 %v4178
    %4241 = vmatprep.subr.mxu0 0.0
    %4242 = vmatpush1.msra.mxu0 %v4179
    %4243 = vmatprep.subr.mxu0 0.0
    %4244 = vmatpush1.msra.mxu0 %v4180
    %4245 = vmatprep.subr.mxu0 0.0
    %4246 = vmatpush1.msra.mxu0 %v4181
    %4247 = vmatprep.subr.mxu0 0.0
    %4248 = vmatpush1.msra.mxu0 %v4182
    %4249 = vmatprep.subr.mxu0 0.0
    %4250 = vmatpush1.msra.mxu0 %v4183
    %4251 = vmatprep.subr.mxu0 0.0
    %4252 = vmatpush1.msra.mxu0 %v4184
    %4253 = vmatprep.subr.mxu0 0.0
    %4254 = vmatpush1.msra.mxu0 %v4185
    %4255 = vmatprep.subr.mxu0 0.0
    %4256 = vmatpush1.msra.mxu0 %v4186
    %4257 = vmatprep.subr.mxu0 0.0
    %4258 = vmatpush1.msra.mxu0 %v4187
    %4259 = vmatprep.subr.mxu0 0.0
    %4260 = vmatpush1.msra.mxu0 0.0
    %4261 = vmatprep.subr.mxu0 0.0
    %4262 = vmatpush1.msra.mxu0 0.0
    %4263 = vmatprep.subr.mxu0 0.0
    %4264 = vmatpush1.msra.mxu0 0.0
    %4265 = vmatprep.subr.mxu0 0.0
    %4266 = vmatpush1.msra.mxu0 0.0
    %4267 = vmatprep.subr.mxu0 0.0
    %4268 = vmatpush1.msra.mxu0 0.0
    %4269 = vmatprep.subr.mxu0 0.0
    %4270 = vmatpush1.msra.mxu0 0.0
    %4271 = vmatprep.subr.mxu0 0.0
    %4272 = vmatpush1.msra.mxu0 0.0
    %4273 = vmatprep.subr.mxu0 0.0
    %4274 = vmatpush1.msra.mxu0 0.0
    %4275 = vmatprep.subr.mxu0 0.0
    %4276 = vmatpush1.msra.mxu0 0.0
    %4277 = vmatprep.subr.mxu0 0.0
    %4278 = vmatpush1.msra.mxu0 0.0
    %4279 = vmatprep.subr.mxu0 0.0
    %4280 = vmatpush1.msra.mxu0 0.0
    %4281 = vmatprep.subr.mxu0 0.0
    %4282 = vmatpush1.msra.mxu0 0.0
    %4283 = vmatprep.mubr.f32.mxu0 %v4217
    %4284 = vmatmul.mubr.f32.gmra.mrb[0].mxu0 %v4201
    %v4285 = vpop.f32.mrb[0].mxu0
    %v4286 = vadd.f32 0.0, %v4285
    %v4287 = vpop.f32.mrb[0].mxu0
    %4288 = vdwg.mxu0
    %v4289 = vadd.f32 %v4166, %v4286
    %s4290 = scalar_lea.vmem [#allocation2], 960
    %v4291 = vld [vmem:[%s4290] sm:$0xff]
    %v4292 = vld [vmem:[%s4290 + $0x8] sm:$0xff]
    %v4293 = vld [vmem:[%s4290 + $0x10] sm:$0xff]
    %v4294 = vld [vmem:[%s4290 + $0x18] sm:$0xff]
    %v4295 = vld [vmem:[%s4290 + $0x20] sm:$0xff]
    %v4296 = vld [vmem:[%s4290 + $0x28] sm:$0xff]
    %v4297 = vld [vmem:[%s4290 + $0x30] sm:$0xff]
    %v4298 = vld [vmem:[%s4290 + $0x38] sm:$0xff]
    %v4299 = vld [vmem:[%s4290 + $0x40] sm:$0xff]
    %v4300 = vld [vmem:[%s4290 + $0x48] sm:$0xff]
    %v4301 = vld [vmem:[%s4290 + $0x50] sm:$0xff]
    %v4302 = vld [vmem:[%s4290 + $0x58] sm:$0xff]
    %v4303 = vld [vmem:[%s4290 + $0x60] sm:$0xff]
    %v4304 = vld [vmem:[%s4290 + $0x68] sm:$0xff]
    %v4305 = vld [vmem:[%s4290 + $0x70] sm:$0xff]
    %v4306 = vld [vmem:[%s4290 + $0x78] sm:$0xff]
    %v4307 = vld [vmem:[%s4290 + $0x80] sm:$0xff]
    %v4308 = vld [vmem:[%s4290 + $0x88] sm:$0xff]
    %v4309 = vld [vmem:[%s4290 + $0x90] sm:$0xff]
    %v4310 = vld [vmem:[%s4290 + $0x98] sm:$0xff]
    %v4311 = vrot.slane %v3515, 6
    %v4312 = vrot.slane %v3517, 5
    %v4313 = vsel %vm3589, %v4312, %v4311
    %v4314 = vrot.slane %v3519, 4
    %v4315 = vsel %vm3592, %v4314, %v4313
    %v4316 = vrot.slane %v3521, 3
    %v4317 = vsel %vm3595, %v4316, %v4315
    %v4318 = vrot.slane %v3523, 2
    %v4319 = vsel %vm3598, %v4318, %v4317
    %v4320 = vrot.slane %v3525, 1
    %v4321 = vsel %vm3601, %v4320, %v4319
    %v4322 = vsel %vm3604, %v3527, %v4321
    %v4323 = vrot.slane %v3529, 7
    %v4324 = vsel %vm3607, %v4323, %v4322
    %v4325 = vrot.slane %v3516, 6
    %v4326 = vrot.slane %v3518, 5
    %v4327 = vsel %vm3589, %v4326, %v4325
    %v4328 = vrot.slane %v3520, 4
    %v4329 = vsel %vm3592, %v4328, %v4327
    %v4330 = vrot.slane %v3522, 3
    %v4331 = vsel %vm3595, %v4330, %v4329
    %v4332 = vrot.slane %v3524, 2
    %v4333 = vsel %vm3598, %v4332, %v4331
    %v4334 = vrot.slane %v3526, 1
    %v4335 = vsel %vm3601, %v4334, %v4333
    %v4336 = vsel %vm3604, %v3528, %v4335
    %v4337 = vrot.slane %v3530, 7
    %v4338 = vsel %vm3607, %v4337, %v4336
    %v4340 = vsel %vm3624, %v4338, 0
    %4342 = vmatprep.subr.mxu0 0.0
    %4343 = vmatpush1.msra.mxu0 %v4291
    %4344 = vmatprep.subr.mxu0 0.0
    %4345 = vmatpush1.msra.mxu0 %v4292
    %4346 = vmatprep.subr.mxu0 0.0
    %4347 = vmatpush1.msra.mxu0 %v4293
    %4348 = vmatprep.subr.mxu0 0.0
    %4349 = vmatpush1.msra.mxu0 %v4294
    %4350 = vmatprep.subr.mxu0 0.0
    %4351 = vmatpush1.msra.mxu0 %v4295
    %4352 = vmatprep.subr.mxu0 0.0
    %4353 = vmatpush1.msra.mxu0 %v4296
    %4354 = vmatprep.subr.mxu0 0.0
    %4355 = vmatpush1.msra.mxu0 %v4297
    %4356 = vmatprep.subr.mxu0 0.0
    %4357 = vmatpush1.msra.mxu0 %v4298
    %4358 = vmatprep.subr.mxu0 0.0
    %4359 = vmatpush1.msra.mxu0 %v4299
    %4360 = vmatprep.subr.mxu0 0.0
    %4361 = vmatpush1.msra.mxu0 %v4300
    %4362 = vmatprep.subr.mxu0 0.0
    %4363 = vmatpush1.msra.mxu0 %v4301
    %4364 = vmatprep.subr.mxu0 0.0
    %4365 = vmatpush1.msra.mxu0 %v4302
    %4366 = vmatprep.subr.mxu0 0.0
    %4367 = vmatpush1.msra.mxu0 %v4303
    %4368 = vmatprep.subr.mxu0 0.0
    %4369 = vmatpush1.msra.mxu0 %v4304
    %4370 = vmatprep.subr.mxu0 0.0
    %4371 = vmatpush1.msra.mxu0 %v4305
    %4372 = vmatprep.subr.mxu0 0.0
    %4373 = vmatpush1.msra.mxu0 %v4306
    %4374 = vmatprep.subr.mxu0 0.0
    %4375 = vmatpush1.msra.mxu0 %v4307
    %4376 = vmatprep.subr.mxu0 0.0
    %4377 = vmatpush1.msra.mxu0 %v4308
    %4378 = vmatprep.subr.mxu0 0.0
    %4379 = vmatpush1.msra.mxu0 %v4309
    %4380 = vmatprep.subr.mxu0 0.0
    %4381 = vmatpush1.msra.mxu0 %v4310
    %4382 = vmatprep.subr.mxu0 0.0
    %4383 = vmatpush1.msra.mxu0 0.0
    %4384 = vmatprep.subr.mxu0 0.0
    %4385 = vmatpush1.msra.mxu0 0.0
    %4386 = vmatprep.subr.mxu0 0.0
    %4387 = vmatpush1.msra.mxu0 0.0
    %4388 = vmatprep.subr.mxu0 0.0
    %4389 = vmatpush1.msra.mxu0 0.0
    %4390 = vmatprep.subr.mxu0 0.0
    %4391 = vmatpush1.msra.mxu0 0.0
    %4392 = vmatprep.subr.mxu0 0.0
    %4393 = vmatpush1.msra.mxu0 0.0
    %4394 = vmatprep.subr.mxu0 0.0
    %4395 = vmatpush1.msra.mxu0 0.0
    %4396 = vmatprep.subr.mxu0 0.0
    %4397 = vmatpush1.msra.mxu0 0.0
    %4398 = vmatprep.subr.mxu0 0.0
    %4399 = vmatpush1.msra.mxu0 0.0
    %4400 = vmatprep.subr.mxu0 0.0
    %4401 = vmatpush1.msra.mxu0 0.0
    %4402 = vmatprep.subr.mxu0 0.0
    %4403 = vmatpush1.msra.mxu0 0.0
    %4404 = vmatprep.subr.mxu0 0.0
    %4405 = vmatpush1.msra.mxu0 0.0
    %4406 = vmatprep.mubr.f32.mxu0 %v4340
    %4407 = vmatmul.mubr.f32.gmra.mrb[0].mxu0 %v4324
    %v4408 = vpop.f32.mrb[0].mxu0
    %v4409 = vadd.f32 0.0, %v4408
    %v4410 = vpop.f32.mrb[0].mxu0
    %4411 = vdwg.mxu0
    %v4412 = vadd.f32 %v4289, %v4409
    %s4413 = scalar_lea.vmem [#allocation2], 1120
    %v4414 = vld [vmem:[%s4413] sm:$0xff]
    %v4415 = vld [vmem:[%s4413 + $0x8] sm:$0xff]
    %v4416 = vld [vmem:[%s4413 + $0x10] sm:$0xff]
    %v4417 = vld [vmem:[%s4413 + $0x18] sm:$0xff]
    %v4418 = vld [vmem:[%s4413 + $0x20] sm:$0xff]
    %v4419 = vld [vmem:[%s4413 + $0x28] sm:$0xff]
    %v4420 = vld [vmem:[%s4413 + $0x30] sm:$0xff]
    %v4421 = vld [vmem:[%s4413 + $0x38] sm:$0xff]
    %v4422 = vld [vmem:[%s4413 + $0x40] sm:$0xff]
    %v4423 = vld [vmem:[%s4413 + $0x48] sm:$0xff]
    %v4424 = vld [vmem:[%s4413 + $0x50] sm:$0xff]
    %v4425 = vld [vmem:[%s4413 + $0x58] sm:$0xff]
    %v4426 = vld [vmem:[%s4413 + $0x60] sm:$0xff]
    %v4427 = vld [vmem:[%s4413 + $0x68] sm:$0xff]
    %v4428 = vld [vmem:[%s4413 + $0x70] sm:$0xff]
    %v4429 = vld [vmem:[%s4413 + $0x78] sm:$0xff]
    %v4430 = vld [vmem:[%s4413 + $0x80] sm:$0xff]
    %v4431 = vld [vmem:[%s4413 + $0x88] sm:$0xff]
    %v4432 = vld [vmem:[%s4413 + $0x90] sm:$0xff]
    %v4433 = vld [vmem:[%s4413 + $0x98] sm:$0xff]
    %v4434 = vrot.slane %v3515, 7
    %v4435 = vrot.slane %v3517, 6
    %v4436 = vsel %vm3589, %v4435, %v4434
    %v4437 = vrot.slane %v3519, 5
    %v4438 = vsel %vm3592, %v4437, %v4436
    %v4439 = vrot.slane %v3521, 4
    %v4440 = vsel %vm3595, %v4439, %v4438
    %v4441 = vrot.slane %v3523, 3
    %v4442 = vsel %vm3598, %v4441, %v4440
    %v4443 = vrot.slane %v3525, 2
    %v4444 = vsel %vm3601, %v4443, %v4442
    %v4445 = vrot.slane %v3527, 1
    %v4446 = vsel %vm3604, %v4445, %v4444
    %v4447 = vsel %vm3607, %v3529, %v4446
    %v4448 = vrot.slane %v3516, 7
    %v4449 = vrot.slane %v3518, 6
    %v4450 = vsel %vm3589, %v4449, %v4448
    %v4451 = vrot.slane %v3520, 5
    %v4452 = vsel %vm3592, %v4451, %v4450
    %v4453 = vrot.slane %v3522, 4
    %v4454 = vsel %vm3595, %v4453, %v4452
    %v4455 = vrot.slane %v3524, 3
    %v4456 = vsel %vm3598, %v4455, %v4454
    %v4457 = vrot.slane %v3526, 2
    %v4458 = vsel %vm3601, %v4457, %v4456
    %v4459 = vrot.slane %v3528, 1
    %v4460 = vsel %vm3604, %v4459, %v4458
    %v4461 = vsel %vm3607, %v3530, %v4460
    %v4463 = vsel %vm3624, %v4461, 0
    %4465 = vmatprep.subr.mxu0 0.0
    %4466 = vmatpush1.msra.mxu0 %v4414
    %4467 = vmatprep.subr.mxu0 0.0
    %4468 = vmatpush1.msra.mxu0 %v4415
    %4469 = vmatprep.subr.mxu0 0.0
    %4470 = vmatpush1.msra.mxu0 %v4416
    %4471 = vmatprep.subr.mxu0 0.0
    %4472 = vmatpush1.msra.mxu0 %v4417
    %4473 = vmatprep.subr.mxu0 0.0
    %4474 = vmatpush1.msra.mxu0 %v4418
    %4475 = vmatprep.subr.mxu0 0.0
    %4476 = vmatpush1.msra.mxu0 %v4419
    %4477 = vmatprep.subr.mxu0 0.0
    %4478 = vmatpush1.msra.mxu0 %v4420
    %4479 = vmatprep.subr.mxu0 0.0
    %4480 = vmatpush1.msra.mxu0 %v4421
    %4481 = vmatprep.subr.mxu0 0.0
    %4482 = vmatpush1.msra.mxu0 %v4422
    %4483 = vmatprep.subr.mxu0 0.0
    %4484 = vmatpush1.msra.mxu0 %v4423
    %4485 = vmatprep.subr.mxu0 0.0
    %4486 = vmatpush1.msra.mxu0 %v4424
    %4487 = vmatprep.subr.mxu0 0.0
    %4488 = vmatpush1.msra.mxu0 %v4425
    %4489 = vmatprep.subr.mxu0 0.0
    %4490 = vmatpush1.msra.mxu0 %v4426
    %4491 = vmatprep.subr.mxu0 0.0
    %4492 = vmatpush1.msra.mxu0 %v4427
    %4493 = vmatprep.subr.mxu0 0.0
    %4494 = vmatpush1.msra.mxu0 %v4428
    %4495 = vmatprep.subr.mxu0 0.0
    %4496 = vmatpush1.msra.mxu0 %v4429
    %4497 = vmatprep.subr.mxu0 0.0
    %4498 = vmatpush1.msra.mxu0 %v4430
    %4499 = vmatprep.subr.mxu0 0.0
    %4500 = vmatpush1.msra.mxu0 %v4431
    %4501 = vmatprep.subr.mxu0 0.0
    %4502 = vmatpush1.msra.mxu0 %v4432
    %4503 = vmatprep.subr.mxu0 0.0
    %4504 = vmatpush1.msra.mxu0 %v4433
    %4505 = vmatprep.subr.mxu0 0.0
    %4506 = vmatpush1.msra.mxu0 0.0
    %4507 = vmatprep.subr.mxu0 0.0
    %4508 = vmatpush1.msra.mxu0 0.0
    %4509 = vmatprep.subr.mxu0 0.0
    %4510 = vmatpush1.msra.mxu0 0.0
    %4511 = vmatprep.subr.mxu0 0.0
    %4512 = vmatpush1.msra.mxu0 0.0
    %4513 = vmatprep.subr.mxu0 0.0
    %4514 = vmatpush1.msra.mxu0 0.0
    %4515 = vmatprep.subr.mxu0 0.0
    %4516 = vmatpush1.msra.mxu0 0.0
    %4517 = vmatprep.subr.mxu0 0.0
    %4518 = vmatpush1.msra.mxu0 0.0
    %4519 = vmatprep.subr.mxu0 0.0
    %4520 = vmatpush1.msra.mxu0 0.0
    %4521 = vmatprep.subr.mxu0 0.0
    %4522 = vmatpush1.msra.mxu0 0.0
    %4523 = vmatprep.subr.mxu0 0.0
    %4524 = vmatpush1.msra.mxu0 0.0
    %4525 = vmatprep.subr.mxu0 0.0
    %4526 = vmatpush1.msra.mxu0 0.0
    %4527 = vmatprep.subr.mxu0 0.0
    %4528 = vmatpush1.msra.mxu0 0.0
    %4529 = vmatprep.mubr.f32.mxu0 %v4463
    %4530 = vmatmul.mubr.f32.gmra.mrb[0].mxu0 %v4447
    %v4531 = vpop.f32.mrb[0].mxu0
    %v4532 = vadd.f32 0.0, %v4531
    %v4533 = vpop.f32.mrb[0].mxu0
    %4534 = vdwg.mxu0
    %v4535 = vadd.f32 %v4412, %v4532
    %v4536 = vmax.f32 %v4535, 0.0
    %vm4537 = vcmask 80896
    %v4538 = vsel %vm4537, %v4536, -inf
    %4539 = vmax.xlane.f32.xlu0 %v4538
    %v4540 = vpop.xlane.xlu0 %4539
    %v4541 = vsub.f32 %v4536, %v4540
    %v4542 = vmul.f32 %v4541, 1.442695
    %v4543 = vpow.pop %v4542
    %v4544 = vsel %vm4537, %v4543, 0.0
    %4545 = vadd.xlane.f32.xlu0 %v4544
    %v4546 = vpop.xlane.xlu0 %4545
    %v4547 = vrcp.pop %v4546
    %v4548 = vmul.f32 %v4543, %v4547
    %4549 = vst.msk [vmem:[%s4] sm:$0xff] %vm4537, %v4548
    %vm4550 = vcmask 97360
    %v4551 = vsel %vm4550, %v4536, -inf
    %4552 = vmax.xlane.f32.xlu0 %v4551
    %v4553 = vpop.xlane.xlu0 %4552
    %v4554 = vsub.f32 %v4536, %v4553
    %v4555 = vmul.f32 %v4554, 1.442695
    %v4556 = vpow.pop %v4555
    %4558 = vrot.lane.b32.xlu0 %v4556, 118
    %v4559 = vpop.permute.xlu0 %4558
    %vm4561 = vcmask 15360
    %v4562 = vsel %vm4561, %v4559, 0.0
    %4563 = vadd.xlane.f32.xlu0 %v4562
    %v4564 = vpop.xlane.xlu0 %4563
    %v4565 = vrcp.pop %v4564
    %v4566 = vmul.f32 %v4556, %v4565
    %4568 = vrot.lane.b32.xlu0 %v4566, 118
    %v4569 = vpop.permute.xlu0 %4568
    %4571 = vst.msk [vmem:[%s5] sm:$0xff] %vm4561, %v4569
    // Predicated region
    $region22: #{convnet_forward.1} parent=1 // pred_check
      _
    $region23: #{convnet_forward.1} parent=1 // pred_check_branch
      %4573 = sbr.rel (0) target = $region25
    $region24: #{convnet_forward.1} parent=1 // pred_region
      _
    $region25: #{convnet_forward.1} parent=1 // pred_fallthru
      _
    // Predicated region
    $region26: #{convnet_forward.1} parent=1 // pred_check
      _
    $region27: #{convnet_forward.1} parent=1 // pred_check_branch
      %4575 = sbr.rel (0) target = $region29
    $region28: #{convnet_forward.1} parent=1 // pred_region
      _
    $region29: #{convnet_forward.1} parent=1 // pred_fallthru
      _
    // Predicated region
    $region30: #{convnet_forward.1} parent=1 // pred_check
      _
    $region31: #{convnet_forward.1} parent=1 // pred_check_branch
      %4577 = sbr.rel (0) target = $region33
    $region32: #{convnet_forward.1} parent=1 // pred_region
      _
    $region33: #{convnet_forward.1} parent=1 // pred_fallthru
      _
    // Predicated region
    $region34: #{convnet_forward.1} parent=1 // pred_check
      _
    $region35: #{convnet_forward.1} parent=1 // pred_check_branch
      %4579 = sbr.rel (0) target = $region37
    $region36: #{convnet_forward.1} parent=1 // pred_region
      _
    $region37: #{convnet_forward.1} parent=1 // pred_fallthru
      _
    %4580 = vsyncpa [#allocation3], 1

</llo_original>
